<compile_context>
chip_gen: v6e
topology: v6e:2x2x1
jax: 0.10.0
libtpu: 0.0.40
codegen_flags: <defaults>
</compile_context>

<pallas_src>
import functools

import numpy as np
import jax
import jax.numpy as jnp
from jax.experimental import pallas as pl
from jax.experimental.pallas import tpu as pltpu


# --------------------------------- fused kernel ---------------------------------

def _resblock_kernel(x_ref, w1_ref, b1_ref, w2_ref, b2_ref, *rest,
                     learnable_sc, downsample, H, W, TR):
    # x_ref : (1, H, W, Cin)     f32 full image for batch n (block constant over t)
    # w1_ref: (9*Cin, Cout)      conv1 weight, im2col (kh, kw, cin) layout [compute dtype]
    # w2_ref: (9*Cout, Cout)     conv2 weight, im2col layout
    # b*_ref: (1, Cout)          f32 biases
    # [wsc_ref: (Cin, Cout), bsc_ref: (1, Cout)]   only if learnable_sc
    # o_ref : (1, TRo, Wo*Cout)  output row tile (lane-dense last dim)
    if learnable_sc:
        wsc_ref, bsc_ref, o_ref = rest
    else:
        (o_ref,) = rest

    Cin = x_ref.shape[3]
    Cout = w1_ref.shape[1]
    cdt = w1_ref.dtype                        # MXU compute dtype
    t = pl.program_id(1)
    r0 = pl.multiple_of(t * TR, TR)           # first output row of this tile

    # ---- TR+4-row ReLU(x) halo slab, read directly from the resident x block ----
    # Branchless boundary handling: clamp dynamic-slice starts into the image and
    # zero rows outside [0, H) with an iota mask.  No scratch, no cross-step state.
    center = x_ref[0, pl.ds(r0, TR), :, :]                          # (TR, W, Cin) f32
    top = x_ref[0, pl.ds(jnp.maximum(r0 - 2, 0), 2), :, :]          # (2, W, Cin)
    bot = x_ref[0, pl.ds(jnp.minimum(r0 + TR, H - 2), 2), :, :]     # (2, W, Cin)
    row2 = jax.lax.broadcasted_iota(jnp.int32, (2, 1, 1), 0)
    top = jnp.where(r0 - 2 + row2 >= 0, top, 0.0)
    bot = jnp.where(r0 + TR + row2 < H, bot, 0.0)
    slab = jnp.maximum(jnp.concatenate([top, center, bot], axis=0), 0.0)   # relu, f32
    slab = slab.astype(cdt)                                         # (TR+4, W, Cin)

    # ---- conv1 (im2col, single MXU matmul, K = 9*Cin) over TR rows + 1-row halo ----
    zc_in = jnp.zeros((TR + 4, 1, Cin), cdt)
    xt = jnp.concatenate([zc_in, slab, zc_in], axis=1)              # (TR+4, W+2, Cin)
    p1 = jnp.concatenate(
        [xt[kh:kh + TR + 2, kw:kw + W, :] for kh in range(3) for kw in range(3)],
        axis=-1).reshape((TR + 2) * W, 9 * Cin)
    h1 = jnp.dot(p1, w1_ref[...], preferred_element_type=jnp.float32)
    h1 = h1.reshape(TR + 2, W, Cout) + b1_ref[...]

    # conv2's zero padding applies to relu(h1): zero halo rows outside the image
    # (only matters on the first / last row tile).
    g = r0 - 1 + jax.lax.broadcasted_iota(jnp.int32, (TR + 2, 1, 1), 0)
    a2 = jnp.where((g >= 0) & (g < H), jnp.maximum(h1, 0.0), 0.0).astype(cdt)

    # ---- conv2 (im2col, single MXU matmul, K = 9*Cout) over the TR tile rows ----
    zc_mid = jnp.zeros((TR + 2, 1, Cout), cdt)
    a2p = jnp.concatenate([zc_mid, a2, zc_mid], axis=1)             # (TR+2, W+2, Cout)
    p2 = jnp.concatenate(
        [a2p[kh:kh + TR, kw:kw + W, :] for kh in range(3) for kw in range(3)],
        axis=-1).reshape(TR * W, 9 * Cout)
    h2 = jnp.dot(p2, w2_ref[...], preferred_element_type=jnp.float32)
    h2 = h2.reshape(TR, W, Cout) + b2_ref[...]

    # ---- shortcut (reads the already-resident x block; identity path stays f32) ----
    if learnable_sc:
        sc = jnp.dot(center.reshape(TR * W, Cin).astype(cdt), wsc_ref[...],
                     preferred_element_type=jnp.float32)
        sc = sc.reshape(TR, W, Cout) + bsc_ref[...]
    else:
        sc = center                                                 # exact f32 skip (Cin == Cout)

    s = h2 + sc                                                     # (TR, W, Cout) f32

    # ---- fused 2x2 average pool: pool(residual)+pool(shortcut) == pool(sum) ----
    if downsample:
        s = s.reshape(TR // 2, 2, W, Cout).sum(axis=1)              # pool row pairs
        s = s.reshape(TR // 2, W // 2, 2, Cout).sum(axis=2) * 0.25  # pool col pairs

    TRo, Wo = (TR // 2, W // 2) if downsample else (TR, W)
    # Lane-dense store: last output dim is Wo*Cout; the wrapper un-flattens it.
    o_ref[0] = s.reshape(TRo, Wo * Cout).astype(o_ref.dtype)


# ----------------------------------- wrappers ------------------------------------

def _pick_row_tile(H, W, downsample, row_tile=None):
    """Row-tile size: divides H, even if downsampling, and keeps the output block's
    second-to-last dim (TRo) either a multiple of 8 or the full extent."""
    def ok(tr):
        if tr < 1 or H % tr:
            return False
        if downsample and tr % 2:
            return False
        tro = tr // 2 if downsample else tr
        return tr == H or tro % 8 == 0

    if row_tile is not None:
        if not ok(row_tile):
            raise ValueError(f"row_tile={row_tile} invalid for H={H}, downsample={downsample}")
        return row_tile
    cands = [tr for tr in range(1, H + 1) if ok(tr)]
    # Feed the MXU: biggest tile with conv1 im2col M = (tr+2)*W still <= ~1024.
    good = [tr for tr in cands if (tr + 2) * W <= 1024]
    return max(good) if good else min(cands)


def res_block_forward_nhwc(x_nhwc, params, *, downsample,
                           compute_dtype=jnp.bfloat16, out_dtype=jnp.float32,
                           row_tile=None, vmem_limit_bytes=None):
    """ResBlock.forward on NHWC input; returns NHWC in out_dtype."""
    learnable_sc = 'wsc' in params
    N, H, W, Cin = x_nhwc.shape
    Cout = params['w1'].shape[3]
    if downsample:
        assert H % 2 == 0 and W % 2 == 0, "avg_pool2d(2) path requires even H, W"

    TR = _pick_row_tile(H, W, downsample, row_tile)
    T = H // TR
    Ho, Wo = (H // 2, W // 2) if downsample else (H, W)
    TRo = TR // 2 if downsample else TR

    x = x_nhwc.astype(jnp.float32)                                    # keep skip/relu math f32
    w1 = params['w1'].reshape(9 * Cin, Cout).astype(compute_dtype)    # HWIO -> (9Cin, Cout)
    w2 = params['w2'].reshape(9 * Cout, Cout).astype(compute_dtype)
    b1 = params['b1'].reshape(1, Cout).astype(jnp.float32)
    b2 = params['b2'].reshape(1, Cout).astype(jnp.float32)

    inputs = [x, w1, b1, w2, b2]
    in_specs = [
        pl.BlockSpec((1, H, W, Cin), lambda n, t: (n, 0, 0, 0)),      # same block over t
        pl.BlockSpec((9 * Cin, Cout), lambda n, t: (0, 0)),
        pl.BlockSpec((1, Cout), lambda n, t: (0, 0)),
        pl.BlockSpec((9 * Cout, Cout), lambda n, t: (0, 0)),
        pl.BlockSpec((1, Cout), lambda n, t: (0, 0)),
    ]
    if learnable_sc:
        wsc = params['wsc'].reshape(Cin, Cout).astype(compute_dtype)
        bsc = params['bsc'].reshape(1, Cout).astype(jnp.float32)
        inputs += [wsc, bsc]
        in_specs += [pl.BlockSpec((Cin, Cout), lambda n, t: (0, 0)),
                     pl.BlockSpec((1, Cout), lambda n, t: (0, 0))]

    kernel = functools.partial(_resblock_kernel, learnable_sc=learnable_sc,
                               downsample=downsample, H=H, W=W, TR=TR)

    out_flat = pl.pallas_call(
        kernel,
        out_shape=jax.ShapeDtypeStruct((N, Ho, Wo * Cout), out_dtype),
        grid=(N, T),
        in_specs=in_specs,
        out_specs=pl.BlockSpec((1, TRo, Wo * Cout), lambda n, t: (n, t, 0)),
        compiler_params=pltpu.CompilerParams(
            # No cross-step state anywhere -> both axes parallel (v7x 2-TC sharding).
            dimension_semantics=("parallel", "parallel"),
            vmem_limit_bytes=vmem_limit_bytes),
    )(*inputs)
    return out_flat.reshape(N, Ho, Wo, Cout)


def res_block_forward(x_nchw, params, *, downsample, **kwargs):
    """PyTorch-convention NCHW wrapper around the NHWC kernel."""
    x = jnp.transpose(x_nchw, (0, 2, 3, 1))
    y = res_block_forward_nhwc(x, params, downsample=downsample, **kwargs)
    return jnp.transpose(y, (0, 3, 1, 2))


# --------------------------- parameters / glue (plain JAX) -----------------------

def spectral_normalize(w_oihw, u0, eps=1e-4, n_iter=1):
    # Mirrors torch.nn.utils.spectral_norm weight normalization (eps=1e-4 per spec).
    out_ch = w_oihw.shape[0]
    w_mat = w_oihw.reshape(out_ch, -1)
    u = u0 / jnp.maximum(jnp.linalg.norm(u0), eps)
    v = None
    for _ in range(n_iter):
        v = w_mat.T @ u
        v = v / jnp.maximum(jnp.linalg.norm(v), eps)
        u = w_mat @ v
        u = u / jnp.maximum(jnp.linalg.norm(u), eps)
    sigma = jnp.dot(u, w_mat @ v)
    return w_oihw / sigma


def init_resblock_params(key, in_ch, out_ch, ksize=3, downsample=False):
    learnable_sc = (in_ch != out_ch) or downsample
    ks = jax.random.split(key, 9)

    def make_conv(kw_, ku_, kb_, o, i, k):
        fan_in = i * k * k
        w = jax.random.normal(kw_, (o, i, k, k), jnp.float32) / jnp.sqrt(fan_in)  # OIHW
        w = spectral_normalize(w, jax.random.normal(ku_, (o,), jnp.float32))
        b = jax.random.uniform(kb_, (o,), jnp.float32, -0.1, 0.1)
        return jnp.transpose(w, (2, 3, 1, 0)), b                                  # HWIO

    params = {}
    params['w1'], params['b1'] = make_conv(ks[0], ks[1], ks[2], out_ch, in_ch, ksize)
    params['w2'], params['b2'] = make_conv(ks[3], ks[4], ks[5], out_ch, out_ch, ksize)
    if learnable_sc:
        params['wsc'], params['bsc'] = make_conv(ks[6], ks[7], ks[8], out_ch, in_ch, 1)
    return params


# ------------------------------- pure-JAX reference ------------------------------

def ref_forward(x, params, *, downsample):
    def to_oihw(w_hwio):
        return jnp.transpose(w_hwio, (3, 2, 0, 1))

    def conv(x, w_hwio, b, pad):
        y = jax.lax.conv_general_dilated(
            x, to_oihw(w_hwio), (1, 1), [(pad, pad), (pad, pad)],
            dimension_numbers=('NCHW', 'OIHW', 'NCHW'))
        return y + b[None, :, None, None]

    def pool(x):
        N, C, H, W = x.shape
        return x.reshape(N, C, H // 2, 2, W // 2, 2).mean(axis=(3, 5))

    r = conv(jax.nn.relu(x), params['w1'], params['b1'], 1)
    r = conv(jax.nn.relu(r), params['w2'], params['b2'], 1)
    if downsample:
        r = pool(r)
    if 'wsc' in params:
        s = conv(x, params['wsc'], params['bsc'], 0)
        if downsample:
            s = pool(s)
    else:
        s = x
    return r + s


# -------------------------------------- main -------------------------------------

if __name__ == "__main__":
    key = jax.random.PRNGKey(0)
    kx, kp1, kp2, kx3, kp3 = jax.random.split(key, 5)

    # Case 1: in_ch != out_ch, downsample=True -> learnable 1x1 shortcut + avg-pool.
    N, in_ch, out_ch, H, W = 2, 4, 8, 16, 16
    x = jax.random.normal(kx, (N, in_ch, H, W), jnp.float32)
    params = init_resblock_params(kp1, in_ch, out_ch, downsample=True)
    ref = ref_forward(x, params, downsample=True)

    out_f32 = jax.block_until_ready(
        res_block_forward(x, params, downsample=True, compute_dtype=jnp.float32))
    assert out_f32.shape == (N, out_ch, H // 2, W // 2)
    np.testing.assert_allclose(np.asarray(out_f32), np.asarray(ref), rtol=1e-4, atol=1e-4)

    out_bf16 = jax.block_until_ready(
        res_block_forward(x, params, downsample=True))          # bf16 MXU path (default)
    np.testing.assert_allclose(np.asarray(out_bf16), np.asarray(ref), rtol=5e-2, atol=5e-2)

    # Case 2: in_ch == out_ch, downsample=False -> exact f32 identity shortcut.
    params2 = init_resblock_params(kp2, out_ch, out_ch, downsample=False)
    x2 = jax.random.normal(kx, (N, out_ch, H, W), jnp.float32)
    ref2 = ref_forward(x2, params2, downsample=False)

    out2_f32 = jax.block_until_ready(                           # row_tile=8 -> 2 row tiles
        res_block_forward(x2, params2, downsample=False,
                          compute_dtype=jnp.float32, row_tile=8))
    assert out2_f32.shape == (N, out_ch, H, W)
    np.testing.assert_allclose(np.asarray(out2_f32), np.asarray(ref2), rtol=1e-4, atol=1e-4)

    out2_bf16 = jax.block_until_ready(
        res_block_forward(x2, params2, downsample=False))
    np.testing.assert_allclose(np.asarray(out2_bf16), np.asarray(ref2), rtol=5e-2, atol=5e-2)

    # Case 3: multi-row-tile + downsample + learnable shortcut (auto tiler -> 2 tiles).
    x3 = jax.random.normal(kx3, (1, 4, 32, 32), jnp.float32)
    params3 = init_resblock_params(kp3, 4, 8, downsample=True)
    ref3 = ref_forward(x3, params3, downsample=True)
    out3_f32 = jax.block_until_ready(
        res_block_forward(x3, params3, downsample=True, compute_dtype=jnp.float32))
    np.testing.assert_allclose(np.asarray(out3_f32), np.asarray(ref3), rtol=1e-4, atol=1e-4)

    print("KERNEL_OK")
</pallas_src>

<mosaic_0001>
module attributes {stable_mosaic.version = 11 : i64} {
  func.func @_resblock_kernel(%arg0: i32, %arg1: i32, %arg2: memref<1x16x16x4xf32, #tpu.memory_space<vmem>>, %arg3: memref<36x8xf32, #tpu.memory_space<vmem>>, %arg4: memref<1x8xf32, #tpu.memory_space<vmem>>, %arg5: memref<72x8xf32, #tpu.memory_space<vmem>>, %arg6: memref<1x8xf32, #tpu.memory_space<vmem>>, %arg7: memref<4x8xf32, #tpu.memory_space<vmem>>, %arg8: memref<1x8xf32, #tpu.memory_space<vmem>>, %arg9: memref<1x8x64xf32, #tpu.memory_space<vmem>>) attributes {dimension_semantics = [#tpu.dimension_semantics<parallel>, #tpu.dimension_semantics<parallel>], iteration_bounds = array<i64: 2, 1>, scalar_prefetch = 0 : i64, scratch_operands = 0 : i64, tpu.core_type = #tpu.core_type<tc>, window_params = [{transform_indices = @transform_0, window_bounds = array<i64: 1, 16, 16, 4>}, {pipeline_mode = #tpu.pipeline_mode<synchronous>, transform_indices = @transform_1, window_bounds = array<i64: 36, 8>}, {pipeline_mode = #tpu.pipeline_mode<synchronous>, transform_indices = @transform_2, window_bounds = array<i64: 1, 8>}, {pipeline_mode = #tpu.pipeline_mode<synchronous>, transform_indices = @transform_3, window_bounds = array<i64: 72, 8>}, {pipeline_mode = #tpu.pipeline_mode<synchronous>, transform_indices = @transform_4, window_bounds = array<i64: 1, 8>}, {pipeline_mode = #tpu.pipeline_mode<synchronous>, transform_indices = @transform_5, window_bounds = array<i64: 4, 8>}, {pipeline_mode = #tpu.pipeline_mode<synchronous>, transform_indices = @transform_6, window_bounds = array<i64: 1, 8>}, {transform_indices = @transform_7, window_bounds = array<i64: 1, 8, 64>}]} {
    %c16_i32 = arith.constant 16 : i32
    %0 = arith.muli %arg1, %c16_i32 : i32
    %1 = tpu.assume_multiple %0, 16 : i32
    %c0 = arith.constant 0 : index
    %2 = arith.index_cast %1 : i32 to index
    %c0_0 = arith.constant 0 : index
    %c0_1 = arith.constant 0 : index
    %3 = vector.load %arg2[%c0, %2, %c0_0, %c0_1] : memref<1x16x16x4xf32, #tpu.memory_space<vmem>>, vector<1x16x16x4xf32>
    %4 = vector.shape_cast %3 : vector<1x16x16x4xf32> to vector<16x16x4xf32>
    %c2_i32 = arith.constant 2 : i32
    %5 = arith.subi %1, %c2_i32 : i32
    %c0_i32 = arith.constant 0 : i32
    %6 = arith.maxsi %5, %c0_i32 : i32
    %c0_2 = arith.constant 0 : index
    %7 = arith.index_cast %6 : i32 to index
    %c0_3 = arith.constant 0 : index
    %c0_4 = arith.constant 0 : index
    %8 = vector.load %arg2[%c0_2, %7, %c0_3, %c0_4] : memref<1x16x16x4xf32, #tpu.memory_space<vmem>>, vector<1x2x16x4xf32>
    %9 = vector.shape_cast %8 : vector<1x2x16x4xf32> to vector<2x16x4xf32>
    %c16_i32_5 = arith.constant 16 : i32
    %10 = arith.addi %1, %c16_i32_5 : i32
    %c14_i32 = arith.constant 14 : i32
    %11 = arith.minsi %10, %c14_i32 : i32
    %c0_6 = arith.constant 0 : index
    %12 = arith.index_cast %11 : i32 to index
    %c0_7 = arith.constant 0 : index
    %c0_8 = arith.constant 0 : index
    %13 = vector.load %arg2[%c0_6, %12, %c0_7, %c0_8] : memref<1x16x16x4xf32, #tpu.memory_space<vmem>>, vector<1x2x16x4xf32>
    %14 = vector.shape_cast %13 : vector<1x2x16x4xf32> to vector<2x16x4xf32>
    %15 = tpu.iota {dimensions = array<i32: 0>} : vector<2x1x1xi32>
    %c2_i32_9 = arith.constant 2 : i32
    %16 = arith.subi %1, %c2_i32_9 : i32
    %17 = vector.broadcast %16 : i32 to vector<2x1x1xi32>
    %18 = arith.addi %17, %15 : vector<2x1x1xi32>
    %c0_i32_10 = arith.constant 0 : i32
    %19 = vector.broadcast %c0_i32_10 : i32 to vector<2x1x1xi32>
    %20 = arith.cmpi sge, %18, %19 : vector<2x1x1xi32>
    %cst = arith.constant 0.000000e+00 : f32
    %21 = vector.shape_cast %20 : vector<2x1x1xi1> to vector<2x1x1xi1>
    %22 = vector.broadcast %21 : vector<2x1x1xi1> to vector<2x16x4xi1>
    %23 = vector.broadcast %cst : f32 to vector<2x16x4xf32>
    %24 = arith.select %22, %9, %23 : vector<2x16x4xi1>, vector<2x16x4xf32>
    %c16_i32_11 = arith.constant 16 : i32
    %25 = arith.addi %1, %c16_i32_11 : i32
    %26 = vector.broadcast %25 : i32 to vector<2x1x1xi32>
    %27 = arith.addi %26, %15 : vector<2x1x1xi32>
    %c16_i32_12 = arith.constant 16 : i32
    %28 = vector.broadcast %c16_i32_12 : i32 to vector<2x1x1xi32>
    %29 = arith.cmpi slt, %27, %28 : vector<2x1x1xi32>
    %cst_13 = arith.constant 0.000000e+00 : f32
    %30 = vector.shape_cast %29 : vector<2x1x1xi1> to vector<2x1x1xi1>
    %31 = vector.broadcast %30 : vector<2x1x1xi1> to vector<2x16x4xi1>
    %32 = vector.broadcast %cst_13 : f32 to vector<2x16x4xf32>
    %33 = arith.select %31, %14, %32 : vector<2x16x4xi1>, vector<2x16x4xf32>
    %34 = tpu.concatenate %24, %4, %33 in 0 : vector<2x16x4xf32>, vector<16x16x4xf32>, vector<2x16x4xf32> -> vector<20x16x4xf32>
    %cst_14 = arith.constant 0.000000e+00 : f32
    %35 = vector.broadcast %cst_14 : f32 to vector<20x16x4xf32>
    %36 = arith.maximumf %34, %35 : vector<20x16x4xf32>
    %cst_15 = arith.constant 0.000000e+00 : f32
    %37 = vector.broadcast %cst_15 : f32 to vector<20x1x4xf32>
    %38 = tpu.concatenate %37, %36, %37 in 1 : vector<20x1x4xf32>, vector<20x16x4xf32>, vector<20x1x4xf32> -> vector<20x18x4xf32>
    %39 = vector.extract_strided_slice %38 {offsets = [0, 0, 0], sizes = [18, 16, 4], strides = [1, 1, 1]} : vector<20x18x4xf32> to vector<18x16x4xf32>
    %40 = vector.extract_strided_slice %38 {offsets = [0, 1, 0], sizes = [18, 16, 4], strides = [1, 1, 1]} : vector<20x18x4xf32> to vector<18x16x4xf32>
    %41 = vector.extract_strided_slice %38 {offsets = [0, 2, 0], sizes = [18, 16, 4], strides = [1, 1, 1]} : vector<20x18x4xf32> to vector<18x16x4xf32>
    %42 = vector.extract_strided_slice %38 {offsets = [1, 0, 0], sizes = [18, 16, 4], strides = [1, 1, 1]} : vector<20x18x4xf32> to vector<18x16x4xf32>
    %43 = vector.extract_strided_slice %38 {offsets = [1, 1, 0], sizes = [18, 16, 4], strides = [1, 1, 1]} : vector<20x18x4xf32> to vector<18x16x4xf32>
    %44 = vector.extract_strided_slice %38 {offsets = [1, 2, 0], sizes = [18, 16, 4], strides = [1, 1, 1]} : vector<20x18x4xf32> to vector<18x16x4xf32>
    %45 = vector.extract_strided_slice %38 {offsets = [2, 0, 0], sizes = [18, 16, 4], strides = [1, 1, 1]} : vector<20x18x4xf32> to vector<18x16x4xf32>
    %46 = vector.extract_strided_slice %38 {offsets = [2, 1, 0], sizes = [18, 16, 4], strides = [1, 1, 1]} : vector<20x18x4xf32> to vector<18x16x4xf32>
    %47 = vector.extract_strided_slice %38 {offsets = [2, 2, 0], sizes = [18, 16, 4], strides = [1, 1, 1]} : vector<20x18x4xf32> to vector<18x16x4xf32>
    %48 = tpu.concatenate %39, %40, %41, %42, %43, %44, %45, %46, %47 in 2 : vector<18x16x4xf32>, vector<18x16x4xf32>, vector<18x16x4xf32>, vector<18x16x4xf32>, vector<18x16x4xf32>, vector<18x16x4xf32>, vector<18x16x4xf32>, vector<18x16x4xf32>, vector<18x16x4xf32> -> vector<18x16x36xf32>
    %49 = vector.shape_cast %48 : vector<18x16x36xf32> to vector<288x36xf32>
    %c0_16 = arith.constant 0 : index
    %c0_17 = arith.constant 0 : index
    %50 = vector.load %arg3[%c0_16, %c0_17] : memref<36x8xf32, #tpu.memory_space<vmem>>, vector<36x8xf32>
    %cst_18 = arith.constant dense<0.000000e+00> : vector<288x8xf32>
    %51 = tpu.matmul %49, %50, %cst_18 {dimension_numbers = #tpu.dot_dimension_numbers<[1], [0], [0], [1], [0, 0, 1, 1], [], []>} : vector<288x36xf32>, vector<36x8xf32>, vector<288x8xf32> -> vector<288x8xf32>
    %52 = vector.shape_cast %51 : vector<288x8xf32> to vector<18x16x8xf32>
    %c0_19 = arith.constant 0 : index
    %c0_20 = arith.constant 0 : index
    %53 = vector.load %arg4[%c0_19, %c0_20] : memref<1x8xf32, #tpu.memory_space<vmem>>, vector<1x8xf32>
    %54 = vector.shape_cast %53 : vector<1x8xf32> to vector<1x1x8xf32>
    %55 = vector.broadcast %54 : vector<1x1x8xf32> to vector<18x16x8xf32>
    %56 = arith.addf %52, %55 : vector<18x16x8xf32>
    %c1_i32 = arith.constant 1 : i32
    %57 = arith.subi %1, %c1_i32 : i32
    %58 = tpu.iota {dimensions = array<i32: 0>} : vector<18x1x1xi32>
    %59 = vector.broadcast %57 : i32 to vector<18x1x1xi32>
    %60 = arith.addi %59, %58 : vector<18x1x1xi32>
    %c0_i32_21 = arith.constant 0 : i32
    %61 = vector.broadcast %c0_i32_21 : i32 to vector<18x1x1xi32>
    %62 = arith.cmpi sge, %60, %61 : vector<18x1x1xi32>
    %c16_i32_22 = arith.constant 16 : i32
    %63 = vector.broadcast %c16_i32_22 : i32 to vector<18x1x1xi32>
    %64 = arith.cmpi slt, %60, %63 : vector<18x1x1xi32>
    %65 = arith.andi %62, %64 : vector<18x1x1xi1>
    %cst_23 = arith.constant 0.000000e+00 : f32
    %66 = vector.broadcast %cst_23 : f32 to vector<18x16x8xf32>
    %67 = arith.maximumf %56, %66 : vector<18x16x8xf32>
    %cst_24 = arith.constant 0.000000e+00 : f32
    %68 = vector.shape_cast %65 : vector<18x1x1xi1> to vector<18x1x1xi1>
    %69 = vector.broadcast %68 : vector<18x1x1xi1> to vector<18x16x8xi1>
    %70 = vector.broadcast %cst_24 : f32 to vector<18x16x8xf32>
    %71 = arith.select %69, %67, %70 : vector<18x16x8xi1>, vector<18x16x8xf32>
    %cst_25 = arith.constant 0.000000e+00 : f32
    %72 = vector.broadcast %cst_25 : f32 to vector<18x1x8xf32>
    %73 = tpu.concatenate %72, %71, %72 in 1 : vector<18x1x8xf32>, vector<18x16x8xf32>, vector<18x1x8xf32> -> vector<18x18x8xf32>
    %74 = vector.extract_strided_slice %73 {offsets = [0, 0, 0], sizes = [16, 16, 8], strides = [1, 1, 1]} : vector<18x18x8xf32> to vector<16x16x8xf32>
    %75 = vector.extract_strided_slice %73 {offsets = [0, 1, 0], sizes = [16, 16, 8], strides = [1, 1, 1]} : vector<18x18x8xf32> to vector<16x16x8xf32>
    %76 = vector.extract_strided_slice %73 {offsets = [0, 2, 0], sizes = [16, 16, 8], strides = [1, 1, 1]} : vector<18x18x8xf32> to vector<16x16x8xf32>
    %77 = vector.extract_strided_slice %73 {offsets = [1, 0, 0], sizes = [16, 16, 8], strides = [1, 1, 1]} : vector<18x18x8xf32> to vector<16x16x8xf32>
    %78 = vector.extract_strided_slice %73 {offsets = [1, 1, 0], sizes = [16, 16, 8], strides = [1, 1, 1]} : vector<18x18x8xf32> to vector<16x16x8xf32>
    %79 = vector.extract_strided_slice %73 {offsets = [1, 2, 0], sizes = [16, 16, 8], strides = [1, 1, 1]} : vector<18x18x8xf32> to vector<16x16x8xf32>
    %80 = vector.extract_strided_slice %73 {offsets = [2, 0, 0], sizes = [16, 16, 8], strides = [1, 1, 1]} : vector<18x18x8xf32> to vector<16x16x8xf32>
    %81 = vector.extract_strided_slice %73 {offsets = [2, 1, 0], sizes = [16, 16, 8], strides = [1, 1, 1]} : vector<18x18x8xf32> to vector<16x16x8xf32>
    %82 = vector.extract_strided_slice %73 {offsets = [2, 2, 0], sizes = [16, 16, 8], strides = [1, 1, 1]} : vector<18x18x8xf32> to vector<16x16x8xf32>
    %83 = tpu.concatenate %74, %75, %76, %77, %78, %79, %80, %81, %82 in 2 : vector<16x16x8xf32>, vector<16x16x8xf32>, vector<16x16x8xf32>, vector<16x16x8xf32>, vector<16x16x8xf32>, vector<16x16x8xf32>, vector<16x16x8xf32>, vector<16x16x8xf32>, vector<16x16x8xf32> -> vector<16x16x72xf32>
    %84 = vector.shape_cast %83 : vector<16x16x72xf32> to vector<256x72xf32>
    %c0_26 = arith.constant 0 : index
    %c0_27 = arith.constant 0 : index
    %85 = vector.load %arg5[%c0_26, %c0_27] : memref<72x8xf32, #tpu.memory_space<vmem>>, vector<72x8xf32>
    %cst_28 = arith.constant dense<0.000000e+00> : vector<256x8xf32>
    %86 = tpu.matmul %84, %85, %cst_28 {dimension_numbers = #tpu.dot_dimension_numbers<[1], [0], [0], [1], [0, 0, 1, 1], [], []>} : vector<256x72xf32>, vector<72x8xf32>, vector<256x8xf32> -> vector<256x8xf32>
    %87 = vector.shape_cast %86 : vector<256x8xf32> to vector<16x16x8xf32>
    %c0_29 = arith.constant 0 : index
    %c0_30 = arith.constant 0 : index
    %88 = vector.load %arg6[%c0_29, %c0_30] : memref<1x8xf32, #tpu.memory_space<vmem>>, vector<1x8xf32>
    %89 = vector.shape_cast %88 : vector<1x8xf32> to vector<1x1x8xf32>
    %90 = vector.broadcast %89 : vector<1x1x8xf32> to vector<16x16x8xf32>
    %91 = arith.addf %87, %90 : vector<16x16x8xf32>
    %92 = vector.shape_cast %4 : vector<16x16x4xf32> to vector<256x4xf32>
    %c0_31 = arith.constant 0 : index
    %c0_32 = arith.constant 0 : index
    %93 = vector.load %arg7[%c0_31, %c0_32] : memref<4x8xf32, #tpu.memory_space<vmem>>, vector<4x8xf32>
    %cst_33 = arith.constant dense<0.000000e+00> : vector<256x8xf32>
    %94 = tpu.matmul %92, %93, %cst_33 {dimension_numbers = #tpu.dot_dimension_numbers<[1], [0], [0], [1], [0, 0, 1, 1], [], []>} : vector<256x4xf32>, vector<4x8xf32>, vector<256x8xf32> -> vector<256x8xf32>
    %95 = vector.shape_cast %94 : vector<256x8xf32> to vector<16x16x8xf32>
    %c0_34 = arith.constant 0 : index
    %c0_35 = arith.constant 0 : index
    %96 = vector.load %arg8[%c0_34, %c0_35] : memref<1x8xf32, #tpu.memory_space<vmem>>, vector<1x8xf32>
    %97 = vector.shape_cast %96 : vector<1x8xf32> to vector<1x1x8xf32>
    %98 = vector.broadcast %97 : vector<1x1x8xf32> to vector<16x16x8xf32>
    %99 = arith.addf %95, %98 : vector<16x16x8xf32>
    %100 = arith.addf %91, %99 : vector<16x16x8xf32>
    %101 = vector.shape_cast %100 : vector<16x16x8xf32> to vector<8x2x16x8xf32>
    %cst_36 = arith.constant dense<0.000000e+00> : vector<8x16x8xf32>
    %102 = vector.multi_reduction <add>, %101, %cst_36 [1] : vector<8x2x16x8xf32> to vector<8x16x8xf32>
    %103 = vector.shape_cast %102 : vector<8x16x8xf32> to vector<8x8x2x8xf32>
    %cst_37 = arith.constant dense<0.000000e+00> : vector<8x8x8xf32>
    %104 = vector.multi_reduction <add>, %103, %cst_37 [2] : vector<8x8x2x8xf32> to vector<8x8x8xf32>
    %cst_38 = arith.constant 2.500000e-01 : f32
    %105 = vector.broadcast %cst_38 : f32 to vector<8x8x8xf32>
    %106 = arith.mulf %104, %105 : vector<8x8x8xf32>
    %107 = vector.shape_cast %106 : vector<8x8x8xf32> to vector<8x64xf32>
    %c0_39 = arith.constant 0 : index
    %c0_40 = arith.constant 0 : index
    %c0_41 = arith.constant 0 : index
    %108 = vector.load %arg9[%c0_39, %c0_40, %c0_41] : memref<1x8x64xf32, #tpu.memory_space<vmem>>, vector<1x8x64xf32>
    %109 = vector.shape_cast %108 : vector<1x8x64xf32> to vector<8x64xf32>
    %110 = vector.shape_cast %107 : vector<8x64xf32> to vector<1x8x64xf32>
    tpu.vector_store %arg9[%c0_39, %c0_40, %c0_41], %110 {strides = array<i32>} : memref<1x8x64xf32, #tpu.memory_space<vmem>>, vector<1x8x64xf32>,
    return
  }
  func.func @transform_0(%arg0: i32, %arg1: i32) -> (i32, i32, i32, i32) {
    %c0_i32 = arith.constant 0 : i32
    %c0_i32_0 = arith.constant 0 : i32
    %c0_i32_1 = arith.constant 0 : i32
    %c0_i32_2 = arith.constant 0 : i32
    return %arg0, %c0_i32, %c0_i32_0, %c0_i32_1 : i32, i32, i32, i32
  }
  func.func @transform_1(%arg0: i32, %arg1: i32) -> (i32, i32) {
    %c0_i32 = arith.constant 0 : i32
    %c0_i32_0 = arith.constant 0 : i32
    %c0_i32_1 = arith.constant 0 : i32
    return %c0_i32, %c0_i32_0 : i32, i32
  }
  func.func @transform_2(%arg0: i32, %arg1: i32) -> (i32, i32) {
    %c0_i32 = arith.constant 0 : i32
    %c0_i32_0 = arith.constant 0 : i32
    %c0_i32_1 = arith.constant 0 : i32
    return %c0_i32, %c0_i32_0 : i32, i32
  }
  func.func @transform_3(%arg0: i32, %arg1: i32) -> (i32, i32) {
    %c0_i32 = arith.constant 0 : i32
    %c0_i32_0 = arith.constant 0 : i32
    %c0_i32_1 = arith.constant 0 : i32
    return %c0_i32, %c0_i32_0 : i32, i32
  }
  func.func @transform_4(%arg0: i32, %arg1: i32) -> (i32, i32) {
    %c0_i32 = arith.constant 0 : i32
    %c0_i32_0 = arith.constant 0 : i32
    %c0_i32_1 = arith.constant 0 : i32
    return %c0_i32, %c0_i32_0 : i32, i32
  }
  func.func @transform_5(%arg0: i32, %arg1: i32) -> (i32, i32) {
    %c0_i32 = arith.constant 0 : i32
    %c0_i32_0 = arith.constant 0 : i32
    %c0_i32_1 = arith.constant 0 : i32
    return %c0_i32, %c0_i32_0 : i32, i32
  }
  func.func @transform_6(%arg0: i32, %arg1: i32) -> (i32, i32) {
    %c0_i32 = arith.constant 0 : i32
    %c0_i32_0 = arith.constant 0 : i32
    %c0_i32_1 = arith.constant 0 : i32
    return %c0_i32, %c0_i32_0 : i32, i32
  }
  func.func @transform_7(%arg0: i32, %arg1: i32) -> (i32, i32, i32) {
    %c0_i32 = arith.constant 0 : i32
    %c0_i32_0 = arith.constant 0 : i32
    return %arg0, %arg1, %c0_i32 : i32, i32, i32
  }
}

</mosaic_0001>

<llo_original>
// kernel: tpu_custom_call.1
$region0: #{tpu_custom_call.1}
  #allocation0 [shape = 'u32[]', space=smem, size = 0x4, offset = 0x4, fixed_abs, tag = 'smem constant byte address 0x4 - core index']
  #allocation1 [shape = 'u32[144,128]{1,0:T(1,128)}', space=vmem, size = 0x12000, scoped, tag = 'internal scratch']
  %s0 = inlined_call_operand.vmem [shape: f32[2,16,16,4], index: 0, kind: input, shape index: {}]
  %s1 = inlined_call_operand.vmem [shape: f32[36,8], index: 1, kind: input, shape index: {}]
  %s2 = inlined_call_operand.vmem [shape: f32[1,8], index: 2, kind: input, shape index: {}]
  %s3 = inlined_call_operand.vmem [shape: f32[72,8], index: 3, kind: input, shape index: {}]
  %s4 = inlined_call_operand.vmem [shape: f32[1,8], index: 4, kind: input, shape index: {}]
  %s5 = inlined_call_operand.vmem [shape: f32[4,8], index: 5, kind: input, shape index: {}]
  %s6 = inlined_call_operand.vmem [shape: f32[1,8], index: 6, kind: input, shape index: {}]
  %s7 = inlined_call_operand.hbm [shape: f32[2,8,64], index: 7, kind: output, shape index: {}]
  %s8 = sld [smem:[#allocation0]]
  $region61: #{tpu_custom_call.1} parent=0
    _
  %s10 = ssub.s32 1, %s8
  %s11 = scalar_select 0, %s10, %s8
  $region1: #{tpu_custom_call.1} parent=0
    #allocation2 [shape = 'u8[8192]{0}', space=vmem, size = 0x2000, scoped, tag = 'output window, operand 0']
    #allocation3 [shape = 's32[2]{0}', space=sflag, size = 0x8, scoped, tag = 'scoped memory for tpu_custom_call.1']
    %12 = vsyncpa [#allocation3], 0
    %s13 = scalar_lea.sflag [#allocation3], 1
    %14 = vsyncpa %s13, 0
    loop: start=0, step=1, limit=4
    $region2: #{tpu_custom_call.1} parent=1 // loop_pre_header
      _
    $region3: #{tpu_custom_call.1} parent=1 // loop_header
      %s16 = sphi 0, %s20
      %p17 = scmp.ge.s32.totalorder %s16, 4
      %s23 = sphi 0, %s35
      %s24 = sphi 0, %s31
      %s25 = sphi 0, %s23
      %s26 = sphi 0, %s24
      %s27 = sphi 0, %s25
      %s28 = sphi 0, %s26
      %s38 = sphi 0, %s40
      %s41 = sphi 0, %s38
      %s42 = sphi 0, %s41
      %s58 = sphi 0, %s42
      %s62 = sphi 0, %s62
      %s64 = sphi 0, %s62
      %s65 = sphi 0, %s64
      %s79 = sphi 0, %s65
      %s83 = sphi 0, %s83
      %s85 = sphi 0, %s83
      %s86 = sphi 0, %s85
      %s100 = sphi 0, %s86
      %s104 = sphi 0, %s104
      %s106 = sphi 0, %s104
      %s107 = sphi 0, %s106
      %s121 = sphi 0, %s107
      %s125 = sphi 0, %s125
      %s127 = sphi 0, %s125
      %s128 = sphi 0, %s127
      %s142 = sphi 0, %s128
      %s146 = sphi 0, %s146
      %s148 = sphi 0, %s146
      %s149 = sphi 0, %s148
      %s163 = sphi 0, %s149
      %s167 = sphi 0, %s167
      %s169 = sphi 0, %s167
      %s170 = sphi 0, %s169
      %s184 = sphi 0, %s170
      %s192 = sphi 0, %s194
      %s195 = sphi 0, %s192
      %s196 = sphi 0, %s195
      %s212 = sphi 0, %s196
    $region4: #{tpu_custom_call.1} parent=1 // loop_header_branch
      %19 = sbr.rel (%p17) target = $region8
    $region5: #{tpu_custom_call.1} parent=1 // loop_body
      %s21 = ssub.s32 %s16, 1
      %s22 = ssub.s32 %s16, 2
      %s29 = sadd.s32 1, %s24
      %p30 = scmp.ge.s32.totalorder %s29, 1
      %s31 = scalar_select %p30, 0, %s29
      %s32 = sadd.s32 1, %s23
      %s33 = scalar_select %p30, %s32, %s23
      %p34 = scmp.ge.s32.totalorder %s33, 2
      %s35 = scalar_select %p34, 0, %s33
      %s36 = ssub.s32 %s23, %s35
      %p37 = scmp.eq.s32.totalorder %s36, 0
      %s39 = sadd.s32 %s38, 1
      %s40 = scalar_select %p37, %s38, %s39
      %p43 = pneg %p37
      %p44 = scmp.eq.s32.totalorder %s16, 1
      %p45 = por %p43, %p44
      %p46 = scmp.ne.s32.totalorder %s38, %s41
      %p47 = scmp.eq.s32.totalorder %s16, 0
      %p48 = por %p46, %p47
      %p49 = scmp.ne.s32.totalorder %s38, %s41
      %p50 = scmp.eq.s32.totalorder %s21, 1
      %p51 = por %p49, %p50
      %p52 = scmp.ne.s32.totalorder %s41, %s42
      %p53 = scmp.eq.s32.totalorder %s21, 0
      %p54 = por %p52, %p53
      %p55 = scmp.ne.s32.totalorder %s41, %s42
      %p56 = scmp.eq.s32.totalorder %s22, 1
      %p57 = por %p55, %p56
      %p59 = scmp.ne.s32.totalorder %s42, %s58
      %p60 = scmp.eq.s32.totalorder %s22, 0
      %p61 = por %p59, %p60
      %s63 = sadd.s32 %s62, 1
      %p66 = scmp.eq.s32.totalorder %s16, 1
      %p67 = scmp.ne.s32.totalorder %s62, %s64
      %p68 = scmp.eq.s32.totalorder %s16, 0
      %p69 = por %p67, %p68
      %p70 = scmp.ne.s32.totalorder %s62, %s64
      %p71 = scmp.eq.s32.totalorder %s21, 1
      %p72 = por %p70, %p71
      %p73 = scmp.ne.s32.totalorder %s64, %s65
      %p74 = scmp.eq.s32.totalorder %s21, 0
      %p75 = por %p73, %p74
      %p76 = scmp.ne.s32.totalorder %s64, %s65
      %p77 = scmp.eq.s32.totalorder %s22, 1
      %p78 = por %p76, %p77
      %p80 = scmp.ne.s32.totalorder %s65, %s79
      %p81 = scmp.eq.s32.totalorder %s22, 0
      %p82 = por %p80, %p81
      %s84 = sadd.s32 %s83, 1
      %p87 = scmp.eq.s32.totalorder %s16, 1
      %p88 = scmp.ne.s32.totalorder %s83, %s85
      %p89 = scmp.eq.s32.totalorder %s16, 0
      %p90 = por %p88, %p89
      %p91 = scmp.ne.s32.totalorder %s83, %s85
      %p92 = scmp.eq.s32.totalorder %s21, 1
      %p93 = por %p91, %p92
      %p94 = scmp.ne.s32.totalorder %s85, %s86
      %p95 = scmp.eq.s32.totalorder %s21, 0
      %p96 = por %p94, %p95
      %p97 = scmp.ne.s32.totalorder %s85, %s86
      %p98 = scmp.eq.s32.totalorder %s22, 1
      %p99 = por %p97, %p98
      %p101 = scmp.ne.s32.totalorder %s86, %s100
      %p102 = scmp.eq.s32.totalorder %s22, 0
      %p103 = por %p101, %p102
      %s105 = sadd.s32 %s104, 1
      %p108 = scmp.eq.s32.totalorder %s16, 1
      %p109 = scmp.ne.s32.totalorder %s104, %s106
      %p110 = scmp.eq.s32.totalorder %s16, 0
      %p111 = por %p109, %p110
      %p112 = scmp.ne.s32.totalorder %s104, %s106
      %p113 = scmp.eq.s32.totalorder %s21, 1
      %p114 = por %p112, %p113
      %p115 = scmp.ne.s32.totalorder %s106, %s107
      %p116 = scmp.eq.s32.totalorder %s21, 0
      %p117 = por %p115, %p116
      %p118 = scmp.ne.s32.totalorder %s106, %s107
      %p119 = scmp.eq.s32.totalorder %s22, 1
      %p120 = por %p118, %p119
      %p122 = scmp.ne.s32.totalorder %s107, %s121
      %p123 = scmp.eq.s32.totalorder %s22, 0
      %p124 = por %p122, %p123
      %s126 = sadd.s32 %s125, 1
      %p129 = scmp.eq.s32.totalorder %s16, 1
      %p130 = scmp.ne.s32.totalorder %s125, %s127
      %p131 = scmp.eq.s32.totalorder %s16, 0
      %p132 = por %p130, %p131
      %p133 = scmp.ne.s32.totalorder %s125, %s127
      %p134 = scmp.eq.s32.totalorder %s21, 1
      %p135 = por %p133, %p134
      %p136 = scmp.ne.s32.totalorder %s127, %s128
      %p137 = scmp.eq.s32.totalorder %s21, 0
      %p138 = por %p136, %p137
      %p139 = scmp.ne.s32.totalorder %s127, %s128
      %p140 = scmp.eq.s32.totalorder %s22, 1
      %p141 = por %p139, %p140
      %p143 = scmp.ne.s32.totalorder %s128, %s142
      %p144 = scmp.eq.s32.totalorder %s22, 0
      %p145 = por %p143, %p144
      %s147 = sadd.s32 %s146, 1
      %p150 = scmp.eq.s32.totalorder %s16, 1
      %p151 = scmp.ne.s32.totalorder %s146, %s148
      %p152 = scmp.eq.s32.totalorder %s16, 0
      %p153 = por %p151, %p152
      %p154 = scmp.ne.s32.totalorder %s146, %s148
      %p155 = scmp.eq.s32.totalorder %s21, 1
      %p156 = por %p154, %p155
      %p157 = scmp.ne.s32.totalorder %s148, %s149
      %p158 = scmp.eq.s32.totalorder %s21, 0
      %p159 = por %p157, %p158
      %p160 = scmp.ne.s32.totalorder %s148, %s149
      %p161 = scmp.eq.s32.totalorder %s22, 1
      %p162 = por %p160, %p161
      %p164 = scmp.ne.s32.totalorder %s149, %s163
      %p165 = scmp.eq.s32.totalorder %s22, 0
      %p166 = por %p164, %p165
      %s168 = sadd.s32 %s167, 1
      %p171 = scmp.eq.s32.totalorder %s16, 1
      %p172 = scmp.ne.s32.totalorder %s167, %s169
      %p173 = scmp.eq.s32.totalorder %s16, 0
      %p174 = por %p172, %p173
      %p175 = scmp.ne.s32.totalorder %s167, %s169
      %p176 = scmp.eq.s32.totalorder %s21, 1
      %p177 = por %p175, %p176
      %p178 = scmp.ne.s32.totalorder %s169, %s170
      %p179 = scmp.eq.s32.totalorder %s21, 0
      %p180 = por %p178, %p179
      %p181 = scmp.ne.s32.totalorder %s169, %s170
      %p182 = scmp.eq.s32.totalorder %s22, 1
      %p183 = por %p181, %p182
      %p185 = scmp.ne.s32.totalorder %s170, %s184
      %p186 = scmp.eq.s32.totalorder %s22, 0
      %p187 = por %p185, %p186
      %s188 = ssub.s32 %s23, %s35
      %s189 = ssub.s32 %s24, %s31
      %s190 = sor.u32 %s188, %s189
      %p191 = scmp.eq.s32.totalorder %s190, 0
      %s193 = sadd.s32 %s192, 1
      %s194 = scalar_select %p191, %s192, %s193
      %p197 = pneg %p191
      %p198 = scmp.eq.s32.totalorder %s16, 1
      %p199 = por %p197, %p198
      %p200 = scmp.ne.s32.totalorder %s192, %s195
      %p201 = scmp.eq.s32.totalorder %s16, 0
      %p202 = por %p200, %p201
      %p203 = scmp.ne.s32.totalorder %s192, %s195
      %p204 = scmp.eq.s32.totalorder %s21, 1
      %p205 = por %p203, %p204
      %p206 = scmp.ne.s32.totalorder %s195, %s196
      %p207 = scmp.eq.s32.totalorder %s21, 0
      %p208 = por %p206, %p207
      %p209 = scmp.ne.s32.totalorder %s195, %s196
      %p210 = scmp.eq.s32.totalorder %s22, 1
      %p211 = por %p209, %p210
      %p213 = scmp.ne.s32.totalorder %s196, %s212
      %p214 = scmp.eq.s32.totalorder %s22, 0
      %p215 = por %p213, %p214
      %p216 = scmp.le.s32.totalorder 1, %s16
      %p217 = scmp.lt.s32.totalorder %s16, 3
      %p218 = pnand %p216, %p217
      %p219 = pneg %p218
      // Predicated region
      $region9: #{tpu_custom_call.1} parent=5 // pred_check
        _
      $region10: #{tpu_custom_call.1} parent=5 // pred_check_branch
        %221 = sbr.rel (%p218) target = $region12
      $region11: #{tpu_custom_call.1} parent=5 // pred_region
        %s222 = ssub.s32 %s16, 1
        // Predicated region
        $region13: #{tpu_custom_call.1} parent=11 // pred_check
          %p223 = pneg %p75
        $region14: #{tpu_custom_call.1} parent=11 // pred_check_branch
          %225 = sbr.rel (%p223) target = $region16
        $region15: #{tpu_custom_call.1} parent=11 // pred_region
          _
        $region16: #{tpu_custom_call.1} parent=11 // pred_fallthru
          _
        // Predicated region
        $region17: #{tpu_custom_call.1} parent=11 // pred_check
          %p226 = pneg %p96
        $region18: #{tpu_custom_call.1} parent=11 // pred_check_branch
          %228 = sbr.rel (%p226) target = $region20
        $region19: #{tpu_custom_call.1} parent=11 // pred_region
          _
        $region20: #{tpu_custom_call.1} parent=11 // pred_fallthru
          _
        // Predicated region
        $region21: #{tpu_custom_call.1} parent=11 // pred_check
          %p229 = pneg %p117
        $region22: #{tpu_custom_call.1} parent=11 // pred_check_branch
          %231 = sbr.rel (%p229) target = $region24
        $region23: #{tpu_custom_call.1} parent=11 // pred_region
          _
        $region24: #{tpu_custom_call.1} parent=11 // pred_fallthru
          _
        // Predicated region
        $region25: #{tpu_custom_call.1} parent=11 // pred_check
          %p232 = pneg %p138
        $region26: #{tpu_custom_call.1} parent=11 // pred_check_branch
          %234 = sbr.rel (%p232) target = $region28
        $region27: #{tpu_custom_call.1} parent=11 // pred_region
          _
        $region28: #{tpu_custom_call.1} parent=11 // pred_fallthru
          _
        // Predicated region
        $region29: #{tpu_custom_call.1} parent=11 // pred_check
          %p235 = pneg %p159
        $region30: #{tpu_custom_call.1} parent=11 // pred_check_branch
          %237 = sbr.rel (%p235) target = $region32
        $region31: #{tpu_custom_call.1} parent=11 // pred_region
          _
        $region32: #{tpu_custom_call.1} parent=11 // pred_fallthru
          _
        // Predicated region
        $region33: #{tpu_custom_call.1} parent=11 // pred_check
          %p238 = pneg %p180
        $region34: #{tpu_custom_call.1} parent=11 // pred_check_branch
          %240 = sbr.rel (%p238) target = $region36
        $region35: #{tpu_custom_call.1} parent=11 // pred_region
          _
        $region36: #{tpu_custom_call.1} parent=11 // pred_fallthru
          _
      $region12: #{tpu_custom_call.1} parent=5 // pred_fallthru
        _
      %p241 = scmp.lt.s32.totalorder %s16, 2
      // Predicated region
      $region37: #{tpu_custom_call.1} parent=5 // pred_check
        %p242 = pneg %p241
      $region38: #{tpu_custom_call.1} parent=5 // pred_check_branch
        %244 = sbr.rel (%p242) target = $region40
      $region39: #{tpu_custom_call.1} parent=5 // pred_region
        // Predicated region
        $region41: #{tpu_custom_call.1} parent=39 // pred_check
          %p245 = pneg %p48
        $region42: #{tpu_custom_call.1} parent=39 // pred_check_branch
          %247 = sbr.rel (%p245) target = $region44
        $region43: #{tpu_custom_call.1} parent=39 // pred_region
          %p248 = scmp.lt.s32.totalorder %s23, 1
          %s249 = scalar_select %p248, %s23, 1
          %s250 = smul.addr %s249, 32
          %s251 = smul.addr %s250, 8
          %s252 = scalar_lea.vmem %s0, %s251
        $region44: #{tpu_custom_call.1} parent=39 // pred_fallthru
          _
      $region40: #{tpu_custom_call.1} parent=5 // pred_fallthru
        _
      %p253 = scmp.le.s32.totalorder 1, %s16
      %p254 = scmp.lt.s32.totalorder %s16, 3
      %p255 = pnand %p253, %p254
      %p256 = pneg %p255
      // Predicated region
      $region45: #{tpu_custom_call.1} parent=5 // pred_check
        _
      $region46: #{tpu_custom_call.1} parent=5 // pred_check_branch
        %258 = sbr.rel (%p255) target = $region48
      $region47: #{tpu_custom_call.1} parent=5 // pred_region
        %s259 = ssub.s32 %s16, 1
        %p260 = scmp.lt.s32.totalorder %s25, 1
        %s261 = scalar_select %p260, %s25, 1
        %s262 = smul.addr %s261, 32
        %s263 = smul.addr %s262, 8
        %s264 = scalar_lea.vmem %s0, %s263
        %p265 = pneg %p54
        %p266 = pneg %p51
        %p267 = pneg %p75
        %p268 = pneg %p72
        %p269 = pneg %p96
        %p270 = pneg %p93
        %p271 = pneg %p117
        %p272 = pneg %p114
        %p273 = pneg %p138
        %p274 = pneg %p135
        %p275 = pneg %p159
        %p276 = pneg %p156
        %p277 = pneg %p180
        %p278 = pneg %p177
        %p279 = pneg %p208
        %p280 = pneg %p205
        %s281 = sand.u32 %s195, 1
        %s282 = scalar_lea.sflag [#allocation3], %s281
        %s283 = sand.u32 %s195, 1
        %s284 = smul.addr %s283, 8
        %s285 = scalar_lea.vmem [#allocation2], %s284
        %p286 = scmp.lt.s32.totalorder %s25, 1
        %s287 = scalar_select %p286, %s25, 1
        %s288 = smul.addr %s287, 32
        %s289 = smul.addr %s288, 8
        %s290 = scalar_lea.vmem %s0, %s289
        %s291 = smul.u32 %s26, 16
        %s292 = smul.u32 %s291, 16
        %s293 = scalar_lea.vmem %s290, %s292
        %v294 = vld [vmem:[%s293] sm:$0xff]
        %v295 = vld [vmem:[%s293 + $0x8] sm:$0xff]
        %v296 = vld [vmem:[%s293 + $0x10] sm:$0xff]
        %v297 = vld [vmem:[%s293 + $0x18] sm:$0xff]
        %v298 = vld [vmem:[%s293 + $0x20] sm:$0xff]
        %v299 = vld [vmem:[%s293 + $0x28] sm:$0xff]
        %v300 = vld [vmem:[%s293 + $0x30] sm:$0xff]
        %v301 = vld [vmem:[%s293 + $0x38] sm:$0xff]
        %v302 = vld [vmem:[%s293 + $0x40] sm:$0xff]
        %v303 = vld [vmem:[%s293 + $0x48] sm:$0xff]
        %v304 = vld [vmem:[%s293 + $0x50] sm:$0xff]
        %v305 = vld [vmem:[%s293 + $0x58] sm:$0xff]
        %v306 = vld [vmem:[%s293 + $0x60] sm:$0xff]
        %v307 = vld [vmem:[%s293 + $0x68] sm:$0xff]
        %v308 = vld [vmem:[%s293 + $0x70] sm:$0xff]
        %v309 = vld [vmem:[%s293 + $0x78] sm:$0xff]
        %v310 = vld [vmem:[%s293 + $0x80] sm:$0xff]
        %v311 = vld [vmem:[%s293 + $0x88] sm:$0xff]
        %v312 = vld [vmem:[%s293 + $0x90] sm:$0xff]
        %v313 = vld [vmem:[%s293 + $0x98] sm:$0xff]
        %v314 = vld [vmem:[%s293 + $0xa0] sm:$0xff]
        %v315 = vld [vmem:[%s293 + $0xa8] sm:$0xff]
        %v316 = vld [vmem:[%s293 + $0xb0] sm:$0xff]
        %v317 = vld [vmem:[%s293 + $0xb8] sm:$0xff]
        %v318 = vld [vmem:[%s293 + $0xc0] sm:$0xff]
        %v319 = vld [vmem:[%s293 + $0xc8] sm:$0xff]
        %v320 = vld [vmem:[%s293 + $0xd0] sm:$0xff]
        %v321 = vld [vmem:[%s293 + $0xd8] sm:$0xff]
        %v322 = vld [vmem:[%s293 + $0xe0] sm:$0xff]
        %v323 = vld [vmem:[%s293 + $0xe8] sm:$0xff]
        %v324 = vld [vmem:[%s293 + $0xf0] sm:$0xff]
        %v325 = vld [vmem:[%s293 + $0xf8] sm:$0xff]
        %s326 = ssub.s32 %s291, 2
        %p327 = scmp.gt.s32.totalorder %s326, 0
        %s328 = scalar_select %p327, %s326, 0
        %s329 = smul.u32 %s328, 16
        %s330 = scalar_lea.vmem %s290, %s329
        %v331 = vld [vmem:[%s330] sm:$0xff]
        %v332 = vld [vmem:[%s330 + $0x8] sm:$0xff]
        %v333 = vld [vmem:[%s330 + $0x10] sm:$0xff]
        %v334 = vld [vmem:[%s330 + $0x18] sm:$0xff]
        %s335 = sadd.s32 %s291, 16
        %p336 = scmp.lt.s32.totalorder %s335, 14
        %s337 = scalar_select %p336, %s335, 14
        %s338 = smul.u32 %s337, 16
        %s339 = scalar_lea.vmem %s290, %s338
        %v340 = vld [vmem:[%s339] sm:$0xff]
        %v341 = vld [vmem:[%s339 + $0x8] sm:$0xff]
        %v342 = vld [vmem:[%s339 + $0x10] sm:$0xff]
        %v343 = vld [vmem:[%s339 + $0x18] sm:$0xff]
        %v344 = vstv %s326
        %v345 = vadd.s32 %v344, 1
        %vm346 = vcmp.ge.s32.totalorder %v344, 0
        %vm347 = vcmp.ge.s32.totalorder %v345, 0
        %v348 = vsel %vm346, 1, 0
        %v349 = vsel %vm347, 1, 0
        %vm350 = vcmp.eq.s32.totalorder %v348, 1
        %vm351 = vcmp.eq.s32.totalorder %v349, 1
        %v352 = vsel %vm350, %v331, 0.0
        %v353 = vsel %vm350, %v332, 0.0
        %v354 = vsel %vm351, %v333, 0.0
        %v355 = vsel %vm351, %v334, 0.0
        %v356 = vstv %s335
        %v357 = vadd.s32 %v356, 1
        %vm358 = vcmp.lt.s32.totalorder %v356, 16
        %vm359 = vcmp.lt.s32.totalorder %v357, 16
        %v360 = vsel %vm358, 1, 0
        %v361 = vsel %vm359, 1, 0
        %vm362 = vcmp.eq.s32.totalorder %v360, 1
        %vm363 = vcmp.eq.s32.totalorder %v361, 1
        %v364 = vsel %vm362, %v340, 0.0
        %v365 = vsel %vm362, %v341, 0.0
        %v366 = vsel %vm363, %v342, 0.0
        %v367 = vsel %vm363, %v343, 0.0
        %v368 = vmax.f32 %v352, 0.0
        %v369 = vmax.f32 %v353, 0.0
        %v370 = vmax.f32 %v354, 0.0
        %v371 = vmax.f32 %v355, 0.0
        %v372 = vmax.f32 %v294, 0.0
        %v373 = vmax.f32 %v295, 0.0
        %v374 = vmax.f32 %v296, 0.0
        %v375 = vmax.f32 %v297, 0.0
        %v376 = vmax.f32 %v298, 0.0
        %v377 = vmax.f32 %v299, 0.0
        %v378 = vmax.f32 %v300, 0.0
        %v379 = vmax.f32 %v301, 0.0
        %v380 = vmax.f32 %v302, 0.0
        %v381 = vmax.f32 %v303, 0.0
        %v382 = vmax.f32 %v304, 0.0
        %v383 = vmax.f32 %v305, 0.0
        %v384 = vmax.f32 %v306, 0.0
        %v385 = vmax.f32 %v307, 0.0
        %v386 = vmax.f32 %v308, 0.0
        %v387 = vmax.f32 %v309, 0.0
        %v388 = vmax.f32 %v310, 0.0
        %v389 = vmax.f32 %v311, 0.0
        %v390 = vmax.f32 %v312, 0.0
        %v391 = vmax.f32 %v313, 0.0
        %v392 = vmax.f32 %v314, 0.0
        %v393 = vmax.f32 %v315, 0.0
        %v394 = vmax.f32 %v316, 0.0
        %v395 = vmax.f32 %v317, 0.0
        %v396 = vmax.f32 %v318, 0.0
        %v397 = vmax.f32 %v319, 0.0
        %v398 = vmax.f32 %v320, 0.0
        %v399 = vmax.f32 %v321, 0.0
        %v400 = vmax.f32 %v322, 0.0
        %v401 = vmax.f32 %v323, 0.0
        %v402 = vmax.f32 %v324, 0.0
        %v403 = vmax.f32 %v325, 0.0
        %v404 = vmax.f32 %v364, 0.0
        %v405 = vmax.f32 %v365, 0.0
        %v406 = vmax.f32 %v366, 0.0
        %v407 = vmax.f32 %v367, 0.0
        %vm448 = vcmask 1040384
        %v449 = vrot.slane %v368, 7
        %v450 = vrot.slane %v369, 7
        %v451 = vsel %vm448, %v449, %v450
        %v452 = vrot.slane %v370, 7
        %v453 = vrot.slane %v371, 7
        %v454 = vsel %vm448, %v452, %v453
        %v455 = vrot.slane %v372, 7
        %v456 = vrot.slane %v373, 7
        %v457 = vsel %vm448, %v455, %v456
        %v458 = vrot.slane %v374, 7
        %v459 = vrot.slane %v375, 7
        %v460 = vsel %vm448, %v458, %v459
        %v461 = vrot.slane %v376, 7
        %v462 = vrot.slane %v377, 7
        %v463 = vsel %vm448, %v461, %v462
        %v464 = vrot.slane %v378, 7
        %v465 = vrot.slane %v379, 7
        %v466 = vsel %vm448, %v464, %v465
        %v467 = vrot.slane %v380, 7
        %v468 = vrot.slane %v381, 7
        %v469 = vsel %vm448, %v467, %v468
        %v470 = vrot.slane %v382, 7
        %v471 = vrot.slane %v383, 7
        %v472 = vsel %vm448, %v470, %v471
        %v473 = vrot.slane %v384, 7
        %v474 = vrot.slane %v385, 7
        %v475 = vsel %vm448, %v473, %v474
        %v476 = vrot.slane %v386, 7
        %v477 = vrot.slane %v387, 7
        %v478 = vsel %vm448, %v476, %v477
        %v479 = vrot.slane %v388, 7
        %v480 = vrot.slane %v389, 7
        %v481 = vsel %vm448, %v479, %v480
        %v482 = vrot.slane %v390, 7
        %v483 = vrot.slane %v391, 7
        %v484 = vsel %vm448, %v482, %v483
        %v485 = vrot.slane %v392, 7
        %v486 = vrot.slane %v393, 7
        %v487 = vsel %vm448, %v485, %v486
        %v488 = vrot.slane %v394, 7
        %v489 = vrot.slane %v395, 7
        %v490 = vsel %vm448, %v488, %v489
        %v491 = vrot.slane %v396, 7
        %v492 = vrot.slane %v397, 7
        %v493 = vsel %vm448, %v491, %v492
        %v494 = vrot.slane %v398, 7
        %v495 = vrot.slane %v399, 7
        %v496 = vsel %vm448, %v494, %v495
        %v497 = vrot.slane %v400, 7
        %v498 = vrot.slane %v401, 7
        %v499 = vsel %vm448, %v497, %v498
        %v500 = vrot.slane %v402, 7
        %v501 = vrot.slane %v403, 7
        %v502 = vsel %vm448, %v500, %v501
        %v503 = vrot.slane %v404, 7
        %v504 = vrot.slane %v405, 7
        %v505 = vsel %vm448, %v503, %v504
        %v506 = vrot.slane %v406, 7
        %v507 = vrot.slane %v407, 7
        %v508 = vsel %vm448, %v506, %v507
        %v567 = vsel %vm448, 0.0, %v449
        %v568 = vsel %vm448, 0.0, %v452
        %v569 = vsel %vm448, 0.0, %v455
        %v570 = vsel %vm448, 0.0, %v458
        %v571 = vsel %vm448, 0.0, %v461
        %v572 = vsel %vm448, 0.0, %v464
        %v573 = vsel %vm448, 0.0, %v467
        %v574 = vsel %vm448, 0.0, %v470
        %v575 = vsel %vm448, 0.0, %v473
        %v576 = vsel %vm448, 0.0, %v476
        %v577 = vsel %vm448, 0.0, %v479
        %v578 = vsel %vm448, 0.0, %v482
        %v579 = vsel %vm448, 0.0, %v485
        %v580 = vsel %vm448, 0.0, %v488
        %v581 = vsel %vm448, 0.0, %v491
        %v582 = vsel %vm448, 0.0, %v494
        %v583 = vsel %vm448, 0.0, %v497
        %v584 = vsel %vm448, 0.0, %v500
        %v585 = vsel %vm448, 0.0, %v503
        %v586 = vsel %vm448, 0.0, %v506
        %v587 = vsel %vm448, %v450, 0.0
        %v588 = vsel %vm448, %v453, 0.0
        %v589 = vsel %vm448, %v456, 0.0
        %v590 = vsel %vm448, %v459, 0.0
        %v591 = vsel %vm448, %v462, 0.0
        %v592 = vsel %vm448, %v465, 0.0
        %v593 = vsel %vm448, %v468, 0.0
        %v594 = vsel %vm448, %v471, 0.0
        %v595 = vsel %vm448, %v474, 0.0
        %v596 = vsel %vm448, %v477, 0.0
        %v597 = vsel %vm448, %v480, 0.0
        %v598 = vsel %vm448, %v483, 0.0
        %v599 = vsel %vm448, %v486, 0.0
        %v600 = vsel %vm448, %v489, 0.0
        %v601 = vsel %vm448, %v492, 0.0
        %v602 = vsel %vm448, %v495, 0.0
        %v603 = vsel %vm448, %v498, 0.0
        %v604 = vsel %vm448, %v501, 0.0
        %v605 = vsel %vm448, %v504, 0.0
        %v606 = vsel %vm448, %v507, 0.0
        %vm643 = vcmask 1046528
        %v644 = vrot.slane %v567, 1
        %v645 = vrot.slane %v451, 1
        %v646 = vsel %vm643, %v644, %v645
        %v647 = vrot.slane %v587, 1
        %v648 = vsel %vm643, %v645, %v647
        %v649 = vrot.slane %v568, 1
        %v650 = vrot.slane %v454, 1
        %v651 = vsel %vm643, %v649, %v650
        %v652 = vrot.slane %v588, 1
        %v653 = vsel %vm643, %v650, %v652
        %v654 = vrot.slane %v569, 1
        %v655 = vrot.slane %v457, 1
        %v656 = vsel %vm643, %v654, %v655
        %v657 = vrot.slane %v589, 1
        %v658 = vsel %vm643, %v655, %v657
        %v659 = vrot.slane %v570, 1
        %v660 = vrot.slane %v460, 1
        %v661 = vsel %vm643, %v659, %v660
        %v662 = vrot.slane %v590, 1
        %v663 = vsel %vm643, %v660, %v662
        %v664 = vrot.slane %v571, 1
        %v665 = vrot.slane %v463, 1
        %v666 = vsel %vm643, %v664, %v665
        %v667 = vrot.slane %v591, 1
        %v668 = vsel %vm643, %v665, %v667
        %v669 = vrot.slane %v572, 1
        %v670 = vrot.slane %v466, 1
        %v671 = vsel %vm643, %v669, %v670
        %v672 = vrot.slane %v592, 1
        %v673 = vsel %vm643, %v670, %v672
        %v674 = vrot.slane %v573, 1
        %v675 = vrot.slane %v469, 1
        %v676 = vsel %vm643, %v674, %v675
        %v677 = vrot.slane %v593, 1
        %v678 = vsel %vm643, %v675, %v677
        %v679 = vrot.slane %v574, 1
        %v680 = vrot.slane %v472, 1
        %v681 = vsel %vm643, %v679, %v680
        %v682 = vrot.slane %v594, 1
        %v683 = vsel %vm643, %v680, %v682
        %v684 = vrot.slane %v575, 1
        %v685 = vrot.slane %v475, 1
        %v686 = vsel %vm643, %v684, %v685
        %v687 = vrot.slane %v595, 1
        %v688 = vsel %vm643, %v685, %v687
        %v689 = vrot.slane %v576, 1
        %v690 = vrot.slane %v478, 1
        %v691 = vsel %vm643, %v689, %v690
        %v692 = vrot.slane %v596, 1
        %v693 = vsel %vm643, %v690, %v692
        %v694 = vrot.slane %v577, 1
        %v695 = vrot.slane %v481, 1
        %v696 = vsel %vm643, %v694, %v695
        %v697 = vrot.slane %v597, 1
        %v698 = vsel %vm643, %v695, %v697
        %v699 = vrot.slane %v578, 1
        %v700 = vrot.slane %v484, 1
        %v701 = vsel %vm643, %v699, %v700
        %v702 = vrot.slane %v598, 1
        %v703 = vsel %vm643, %v700, %v702
        %v704 = vrot.slane %v579, 1
        %v705 = vrot.slane %v487, 1
        %v706 = vsel %vm643, %v704, %v705
        %v707 = vrot.slane %v599, 1
        %v708 = vsel %vm643, %v705, %v707
        %v709 = vrot.slane %v580, 1
        %v710 = vrot.slane %v490, 1
        %v711 = vsel %vm643, %v709, %v710
        %v712 = vrot.slane %v600, 1
        %v713 = vsel %vm643, %v710, %v712
        %v714 = vrot.slane %v581, 1
        %v715 = vrot.slane %v493, 1
        %v716 = vsel %vm643, %v714, %v715
        %v717 = vrot.slane %v601, 1
        %v718 = vsel %vm643, %v715, %v717
        %v719 = vrot.slane %v582, 1
        %v720 = vrot.slane %v496, 1
        %v721 = vsel %vm643, %v719, %v720
        %v722 = vrot.slane %v602, 1
        %v723 = vsel %vm643, %v720, %v722
        %v724 = vrot.slane %v583, 1
        %v725 = vrot.slane %v499, 1
        %v726 = vsel %vm643, %v724, %v725
        %v727 = vrot.slane %v603, 1
        %v728 = vsel %vm643, %v725, %v727
        %v729 = vrot.slane %v584, 1
        %v730 = vrot.slane %v502, 1
        %v731 = vsel %vm643, %v729, %v730
        %v732 = vrot.slane %v604, 1
        %v733 = vsel %vm643, %v730, %v732
        %734 = vrot.lane.b32.xlu0 %v646, 4
        %v735 = vpop.permute.xlu0 %734
        %736 = vrot.lane.b32.xlu0 %v648, 4
        %v737 = vpop.permute.xlu0 %736
        %738 = vrot.lane.b32.xlu0 %v651, 4
        %v739 = vpop.permute.xlu0 %738
        %740 = vrot.lane.b32.xlu0 %v653, 4
        %v741 = vpop.permute.xlu0 %740
        %742 = vrot.lane.b32.xlu0 %v656, 4
        %v743 = vpop.permute.xlu0 %742
        %744 = vrot.lane.b32.xlu0 %v658, 4
        %v745 = vpop.permute.xlu0 %744
        %746 = vrot.lane.b32.xlu0 %v661, 4
        %v747 = vpop.permute.xlu0 %746
        %748 = vrot.lane.b32.xlu0 %v663, 4
        %v749 = vpop.permute.xlu0 %748
        %750 = vrot.lane.b32.xlu0 %v666, 4
        %v751 = vpop.permute.xlu0 %750
        %752 = vrot.lane.b32.xlu0 %v668, 4
        %v753 = vpop.permute.xlu0 %752
        %754 = vrot.lane.b32.xlu0 %v671, 4
        %v755 = vpop.permute.xlu0 %754
        %756 = vrot.lane.b32.xlu0 %v673, 4
        %v757 = vpop.permute.xlu0 %756
        %758 = vrot.lane.b32.xlu0 %v676, 4
        %v759 = vpop.permute.xlu0 %758
        %760 = vrot.lane.b32.xlu0 %v678, 4
        %v761 = vpop.permute.xlu0 %760
        %762 = vrot.lane.b32.xlu0 %v681, 4
        %v763 = vpop.permute.xlu0 %762
        %764 = vrot.lane.b32.xlu0 %v683, 4
        %v765 = vpop.permute.xlu0 %764
        %766 = vrot.lane.b32.xlu0 %v686, 4
        %v767 = vpop.permute.xlu0 %766
        %768 = vrot.lane.b32.xlu0 %v688, 4
        %v769 = vpop.permute.xlu0 %768
        %770 = vrot.lane.b32.xlu0 %v691, 4
        %v771 = vpop.permute.xlu0 %770
        %772 = vrot.lane.b32.xlu0 %v693, 4
        %v773 = vpop.permute.xlu0 %772
        %774 = vrot.lane.b32.xlu0 %v696, 4
        %v775 = vpop.permute.xlu0 %774
        %776 = vrot.lane.b32.xlu0 %v698, 4
        %v777 = vpop.permute.xlu0 %776
        %778 = vrot.lane.b32.xlu0 %v701, 4
        %v779 = vpop.permute.xlu0 %778
        %780 = vrot.lane.b32.xlu0 %v703, 4
        %v781 = vpop.permute.xlu0 %780
        %782 = vrot.lane.b32.xlu0 %v706, 4
        %v783 = vpop.permute.xlu0 %782
        %784 = vrot.lane.b32.xlu0 %v708, 4
        %v785 = vpop.permute.xlu0 %784
        %786 = vrot.lane.b32.xlu0 %v711, 4
        %v787 = vpop.permute.xlu0 %786
        %788 = vrot.lane.b32.xlu0 %v713, 4
        %v789 = vpop.permute.xlu0 %788
        %790 = vrot.lane.b32.xlu0 %v716, 4
        %v791 = vpop.permute.xlu0 %790
        %792 = vrot.lane.b32.xlu0 %v718, 4
        %v793 = vpop.permute.xlu0 %792
        %794 = vrot.lane.b32.xlu0 %v721, 4
        %v795 = vpop.permute.xlu0 %794
        %796 = vrot.lane.b32.xlu0 %v723, 4
        %v797 = vpop.permute.xlu0 %796
        %798 = vrot.lane.b32.xlu0 %v726, 4
        %v799 = vpop.permute.xlu0 %798
        %800 = vrot.lane.b32.xlu0 %v728, 4
        %v801 = vpop.permute.xlu0 %800
        %802 = vrot.lane.b32.xlu0 %v731, 4
        %v803 = vpop.permute.xlu0 %802
        %804 = vrot.lane.b32.xlu0 %v733, 4
        %v805 = vpop.permute.xlu0 %804
        %vm842 = vcmask 1045504
        %v843 = vrot.slane %v567, 2
        %v844 = vrot.slane %v451, 2
        %v845 = vsel %vm842, %v843, %v844
        %v846 = vrot.slane %v587, 2
        %v847 = vsel %vm842, %v844, %v846
        %v848 = vrot.slane %v568, 2
        %v849 = vrot.slane %v454, 2
        %v850 = vsel %vm842, %v848, %v849
        %v851 = vrot.slane %v588, 2
        %v852 = vsel %vm842, %v849, %v851
        %v853 = vrot.slane %v569, 2
        %v854 = vrot.slane %v457, 2
        %v855 = vsel %vm842, %v853, %v854
        %v856 = vrot.slane %v589, 2
        %v857 = vsel %vm842, %v854, %v856
        %v858 = vrot.slane %v570, 2
        %v859 = vrot.slane %v460, 2
        %v860 = vsel %vm842, %v858, %v859
        %v861 = vrot.slane %v590, 2
        %v862 = vsel %vm842, %v859, %v861
        %v863 = vrot.slane %v571, 2
        %v864 = vrot.slane %v463, 2
        %v865 = vsel %vm842, %v863, %v864
        %v866 = vrot.slane %v591, 2
        %v867 = vsel %vm842, %v864, %v866
        %v868 = vrot.slane %v572, 2
        %v869 = vrot.slane %v466, 2
        %v870 = vsel %vm842, %v868, %v869
        %v871 = vrot.slane %v592, 2
        %v872 = vsel %vm842, %v869, %v871
        %v873 = vrot.slane %v573, 2
        %v874 = vrot.slane %v469, 2
        %v875 = vsel %vm842, %v873, %v874
        %v876 = vrot.slane %v593, 2
        %v877 = vsel %vm842, %v874, %v876
        %v878 = vrot.slane %v574, 2
        %v879 = vrot.slane %v472, 2
        %v880 = vsel %vm842, %v878, %v879
        %v881 = vrot.slane %v594, 2
        %v882 = vsel %vm842, %v879, %v881
        %v883 = vrot.slane %v575, 2
        %v884 = vrot.slane %v475, 2
        %v885 = vsel %vm842, %v883, %v884
        %v886 = vrot.slane %v595, 2
        %v887 = vsel %vm842, %v884, %v886
        %v888 = vrot.slane %v576, 2
        %v889 = vrot.slane %v478, 2
        %v890 = vsel %vm842, %v888, %v889
        %v891 = vrot.slane %v596, 2
        %v892 = vsel %vm842, %v889, %v891
        %v893 = vrot.slane %v577, 2
        %v894 = vrot.slane %v481, 2
        %v895 = vsel %vm842, %v893, %v894
        %v896 = vrot.slane %v597, 2
        %v897 = vsel %vm842, %v894, %v896
        %v898 = vrot.slane %v578, 2
        %v899 = vrot.slane %v484, 2
        %v900 = vsel %vm842, %v898, %v899
        %v901 = vrot.slane %v598, 2
        %v902 = vsel %vm842, %v899, %v901
        %v903 = vrot.slane %v579, 2
        %v904 = vrot.slane %v487, 2
        %v905 = vsel %vm842, %v903, %v904
        %v906 = vrot.slane %v599, 2
        %v907 = vsel %vm842, %v904, %v906
        %v908 = vrot.slane %v580, 2
        %v909 = vrot.slane %v490, 2
        %v910 = vsel %vm842, %v908, %v909
        %v911 = vrot.slane %v600, 2
        %v912 = vsel %vm842, %v909, %v911
        %v913 = vrot.slane %v581, 2
        %v914 = vrot.slane %v493, 2
        %v915 = vsel %vm842, %v913, %v914
        %v916 = vrot.slane %v601, 2
        %v917 = vsel %vm842, %v914, %v916
        %v918 = vrot.slane %v582, 2
        %v919 = vrot.slane %v496, 2
        %v920 = vsel %vm842, %v918, %v919
        %v921 = vrot.slane %v602, 2
        %v922 = vsel %vm842, %v919, %v921
        %v923 = vrot.slane %v583, 2
        %v924 = vrot.slane %v499, 2
        %v925 = vsel %vm842, %v923, %v924
        %v926 = vrot.slane %v603, 2
        %v927 = vsel %vm842, %v924, %v926
        %v928 = vrot.slane %v584, 2
        %v929 = vrot.slane %v502, 2
        %v930 = vsel %vm842, %v928, %v929
        %v931 = vrot.slane %v604, 2
        %v932 = vsel %vm842, %v929, %v931
        %933 = vrot.lane.b32.xlu0 %v845, 8
        %v934 = vpop.permute.xlu0 %933
        %935 = vrot.lane.b32.xlu0 %v847, 8
        %v936 = vpop.permute.xlu0 %935
        %937 = vrot.lane.b32.xlu0 %v850, 8
        %v938 = vpop.permute.xlu0 %937
        %939 = vrot.lane.b32.xlu0 %v852, 8
        %v940 = vpop.permute.xlu0 %939
        %941 = vrot.lane.b32.xlu0 %v855, 8
        %v942 = vpop.permute.xlu0 %941
        %943 = vrot.lane.b32.xlu0 %v857, 8
        %v944 = vpop.permute.xlu0 %943
        %945 = vrot.lane.b32.xlu0 %v860, 8
        %v946 = vpop.permute.xlu0 %945
        %947 = vrot.lane.b32.xlu0 %v862, 8
        %v948 = vpop.permute.xlu0 %947
        %949 = vrot.lane.b32.xlu0 %v865, 8
        %v950 = vpop.permute.xlu0 %949
        %951 = vrot.lane.b32.xlu0 %v867, 8
        %v952 = vpop.permute.xlu0 %951
        %953 = vrot.lane.b32.xlu0 %v870, 8
        %v954 = vpop.permute.xlu0 %953
        %955 = vrot.lane.b32.xlu0 %v872, 8
        %v956 = vpop.permute.xlu0 %955
        %957 = vrot.lane.b32.xlu0 %v875, 8
        %v958 = vpop.permute.xlu0 %957
        %959 = vrot.lane.b32.xlu0 %v877, 8
        %v960 = vpop.permute.xlu0 %959
        %961 = vrot.lane.b32.xlu0 %v880, 8
        %v962 = vpop.permute.xlu0 %961
        %963 = vrot.lane.b32.xlu0 %v882, 8
        %v964 = vpop.permute.xlu0 %963
        %965 = vrot.lane.b32.xlu0 %v885, 8
        %v966 = vpop.permute.xlu0 %965
        %967 = vrot.lane.b32.xlu0 %v887, 8
        %v968 = vpop.permute.xlu0 %967
        %969 = vrot.lane.b32.xlu0 %v890, 8
        %v970 = vpop.permute.xlu0 %969
        %971 = vrot.lane.b32.xlu0 %v892, 8
        %v972 = vpop.permute.xlu0 %971
        %973 = vrot.lane.b32.xlu0 %v895, 8
        %v974 = vpop.permute.xlu0 %973
        %975 = vrot.lane.b32.xlu0 %v897, 8
        %v976 = vpop.permute.xlu0 %975
        %977 = vrot.lane.b32.xlu0 %v900, 8
        %v978 = vpop.permute.xlu0 %977
        %979 = vrot.lane.b32.xlu0 %v902, 8
        %v980 = vpop.permute.xlu0 %979
        %981 = vrot.lane.b32.xlu0 %v905, 8
        %v982 = vpop.permute.xlu0 %981
        %983 = vrot.lane.b32.xlu0 %v907, 8
        %v984 = vpop.permute.xlu0 %983
        %985 = vrot.lane.b32.xlu0 %v910, 8
        %v986 = vpop.permute.xlu0 %985
        %987 = vrot.lane.b32.xlu0 %v912, 8
        %v988 = vpop.permute.xlu0 %987
        %989 = vrot.lane.b32.xlu0 %v915, 8
        %v990 = vpop.permute.xlu0 %989
        %991 = vrot.lane.b32.xlu0 %v917, 8
        %v992 = vpop.permute.xlu0 %991
        %993 = vrot.lane.b32.xlu0 %v920, 8
        %v994 = vpop.permute.xlu0 %993
        %995 = vrot.lane.b32.xlu0 %v922, 8
        %v996 = vpop.permute.xlu0 %995
        %997 = vrot.lane.b32.xlu0 %v925, 8
        %v998 = vpop.permute.xlu0 %997
        %999 = vrot.lane.b32.xlu0 %v927, 8
        %v1000 = vpop.permute.xlu0 %999
        %1001 = vrot.lane.b32.xlu0 %v930, 8
        %v1002 = vpop.permute.xlu0 %1001
        %1003 = vrot.lane.b32.xlu0 %v932, 8
        %v1004 = vpop.permute.xlu0 %1003
        %1042 = vrot.lane.b32.xlu0 %v568, 12
        %v1043 = vpop.permute.xlu0 %1042
        %1044 = vrot.lane.b32.xlu0 %v454, 12
        %v1045 = vpop.permute.xlu0 %1044
        %1046 = vrot.lane.b32.xlu0 %v569, 12
        %v1047 = vpop.permute.xlu0 %1046
        %1048 = vrot.lane.b32.xlu0 %v457, 12
        %v1049 = vpop.permute.xlu0 %1048
        %1050 = vrot.lane.b32.xlu0 %v570, 12
        %v1051 = vpop.permute.xlu0 %1050
        %1052 = vrot.lane.b32.xlu0 %v460, 12
        %v1053 = vpop.permute.xlu0 %1052
        %1054 = vrot.lane.b32.xlu0 %v571, 12
        %v1055 = vpop.permute.xlu0 %1054
        %1056 = vrot.lane.b32.xlu0 %v463, 12
        %v1057 = vpop.permute.xlu0 %1056
        %1058 = vrot.lane.b32.xlu0 %v572, 12
        %v1059 = vpop.permute.xlu0 %1058
        %1060 = vrot.lane.b32.xlu0 %v466, 12
        %v1061 = vpop.permute.xlu0 %1060
        %1062 = vrot.lane.b32.xlu0 %v573, 12
        %v1063 = vpop.permute.xlu0 %1062
        %1064 = vrot.lane.b32.xlu0 %v469, 12
        %v1065 = vpop.permute.xlu0 %1064
        %1066 = vrot.lane.b32.xlu0 %v574, 12
        %v1067 = vpop.permute.xlu0 %1066
        %1068 = vrot.lane.b32.xlu0 %v472, 12
        %v1069 = vpop.permute.xlu0 %1068
        %1070 = vrot.lane.b32.xlu0 %v575, 12
        %v1071 = vpop.permute.xlu0 %1070
        %1072 = vrot.lane.b32.xlu0 %v475, 12
        %v1073 = vpop.permute.xlu0 %1072
        %1074 = vrot.lane.b32.xlu0 %v576, 12
        %v1075 = vpop.permute.xlu0 %1074
        %1076 = vrot.lane.b32.xlu0 %v478, 12
        %v1077 = vpop.permute.xlu0 %1076
        %1078 = vrot.lane.b32.xlu0 %v577, 12
        %v1079 = vpop.permute.xlu0 %1078
        %1080 = vrot.lane.b32.xlu0 %v481, 12
        %v1081 = vpop.permute.xlu0 %1080
        %1082 = vrot.lane.b32.xlu0 %v578, 12
        %v1083 = vpop.permute.xlu0 %1082
        %1084 = vrot.lane.b32.xlu0 %v484, 12
        %v1085 = vpop.permute.xlu0 %1084
        %1086 = vrot.lane.b32.xlu0 %v579, 12
        %v1087 = vpop.permute.xlu0 %1086
        %1088 = vrot.lane.b32.xlu0 %v487, 12
        %v1089 = vpop.permute.xlu0 %1088
        %1090 = vrot.lane.b32.xlu0 %v580, 12
        %v1091 = vpop.permute.xlu0 %1090
        %1092 = vrot.lane.b32.xlu0 %v490, 12
        %v1093 = vpop.permute.xlu0 %1092
        %1094 = vrot.lane.b32.xlu0 %v581, 12
        %v1095 = vpop.permute.xlu0 %1094
        %1096 = vrot.lane.b32.xlu0 %v493, 12
        %v1097 = vpop.permute.xlu0 %1096
        %1098 = vrot.lane.b32.xlu0 %v582, 12
        %v1099 = vpop.permute.xlu0 %1098
        %1100 = vrot.lane.b32.xlu0 %v496, 12
        %v1101 = vpop.permute.xlu0 %1100
        %1102 = vrot.lane.b32.xlu0 %v583, 12
        %v1103 = vpop.permute.xlu0 %1102
        %1104 = vrot.lane.b32.xlu0 %v499, 12
        %v1105 = vpop.permute.xlu0 %1104
        %1106 = vrot.lane.b32.xlu0 %v584, 12
        %v1107 = vpop.permute.xlu0 %1106
        %1108 = vrot.lane.b32.xlu0 %v502, 12
        %v1109 = vpop.permute.xlu0 %1108
        %1110 = vrot.lane.b32.xlu0 %v585, 12
        %v1111 = vpop.permute.xlu0 %1110
        %1112 = vrot.lane.b32.xlu0 %v505, 12
        %v1113 = vpop.permute.xlu0 %1112
        %v1151 = vrot.slane %v585, 1
        %v1152 = vrot.slane %v505, 1
        %v1153 = vsel %vm643, %v1151, %v1152
        %v1154 = vrot.slane %v605, 1
        %v1155 = vsel %vm643, %v1152, %v1154
        %1156 = vrot.lane.b32.xlu0 %v651, 16
        %v1157 = vpop.permute.xlu0 %1156
        %1158 = vrot.lane.b32.xlu0 %v653, 16
        %v1159 = vpop.permute.xlu0 %1158
        %1160 = vrot.lane.b32.xlu0 %v656, 16
        %v1161 = vpop.permute.xlu0 %1160
        %1162 = vrot.lane.b32.xlu0 %v658, 16
        %v1163 = vpop.permute.xlu0 %1162
        %1164 = vrot.lane.b32.xlu0 %v661, 16
        %v1165 = vpop.permute.xlu0 %1164
        %1166 = vrot.lane.b32.xlu0 %v663, 16
        %v1167 = vpop.permute.xlu0 %1166
        %1168 = vrot.lane.b32.xlu0 %v666, 16
        %v1169 = vpop.permute.xlu0 %1168
        %1170 = vrot.lane.b32.xlu0 %v668, 16
        %v1171 = vpop.permute.xlu0 %1170
        %1172 = vrot.lane.b32.xlu0 %v671, 16
        %v1173 = vpop.permute.xlu0 %1172
        %1174 = vrot.lane.b32.xlu0 %v673, 16
        %v1175 = vpop.permute.xlu0 %1174
        %1176 = vrot.lane.b32.xlu0 %v676, 16
        %v1177 = vpop.permute.xlu0 %1176
        %1178 = vrot.lane.b32.xlu0 %v678, 16
        %v1179 = vpop.permute.xlu0 %1178
        %1180 = vrot.lane.b32.xlu0 %v681, 16
        %v1181 = vpop.permute.xlu0 %1180
        %1182 = vrot.lane.b32.xlu0 %v683, 16
        %v1183 = vpop.permute.xlu0 %1182
        %1184 = vrot.lane.b32.xlu0 %v686, 16
        %v1185 = vpop.permute.xlu0 %1184
        %1186 = vrot.lane.b32.xlu0 %v688, 16
        %v1187 = vpop.permute.xlu0 %1186
        %1188 = vrot.lane.b32.xlu0 %v691, 16
        %v1189 = vpop.permute.xlu0 %1188
        %1190 = vrot.lane.b32.xlu0 %v693, 16
        %v1191 = vpop.permute.xlu0 %1190
        %1192 = vrot.lane.b32.xlu0 %v696, 16
        %v1193 = vpop.permute.xlu0 %1192
        %1194 = vrot.lane.b32.xlu0 %v698, 16
        %v1195 = vpop.permute.xlu0 %1194
        %1196 = vrot.lane.b32.xlu0 %v701, 16
        %v1197 = vpop.permute.xlu0 %1196
        %1198 = vrot.lane.b32.xlu0 %v703, 16
        %v1199 = vpop.permute.xlu0 %1198
        %1200 = vrot.lane.b32.xlu0 %v706, 16
        %v1201 = vpop.permute.xlu0 %1200
        %1202 = vrot.lane.b32.xlu0 %v708, 16
        %v1203 = vpop.permute.xlu0 %1202
        %1204 = vrot.lane.b32.xlu0 %v711, 16
        %v1205 = vpop.permute.xlu0 %1204
        %1206 = vrot.lane.b32.xlu0 %v713, 16
        %v1207 = vpop.permute.xlu0 %1206
        %1208 = vrot.lane.b32.xlu0 %v716, 16
        %v1209 = vpop.permute.xlu0 %1208
        %1210 = vrot.lane.b32.xlu0 %v718, 16
        %v1211 = vpop.permute.xlu0 %1210
        %1212 = vrot.lane.b32.xlu0 %v721, 16
        %v1213 = vpop.permute.xlu0 %1212
        %1214 = vrot.lane.b32.xlu0 %v723, 16
        %v1215 = vpop.permute.xlu0 %1214
        %1216 = vrot.lane.b32.xlu0 %v726, 16
        %v1217 = vpop.permute.xlu0 %1216
        %1218 = vrot.lane.b32.xlu0 %v728, 16
        %v1219 = vpop.permute.xlu0 %1218
        %1220 = vrot.lane.b32.xlu0 %v731, 16
        %v1221 = vpop.permute.xlu0 %1220
        %1222 = vrot.lane.b32.xlu0 %v733, 16
        %v1223 = vpop.permute.xlu0 %1222
        %1224 = vrot.lane.b32.xlu0 %v1153, 16
        %v1225 = vpop.permute.xlu0 %1224
        %1226 = vrot.lane.b32.xlu0 %v1155, 16
        %v1227 = vpop.permute.xlu0 %1226
        %v1264 = vrot.slane %v585, 2
        %v1265 = vrot.slane %v505, 2
        %v1266 = vsel %vm842, %v1264, %v1265
        %v1267 = vrot.slane %v605, 2
        %v1268 = vsel %vm842, %v1265, %v1267
        %1269 = vrot.lane.b32.xlu0 %v850, 20
        %v1270 = vpop.permute.xlu0 %1269
        %1271 = vrot.lane.b32.xlu0 %v852, 20
        %v1272 = vpop.permute.xlu0 %1271
        %1273 = vrot.lane.b32.xlu0 %v855, 20
        %v1274 = vpop.permute.xlu0 %1273
        %1275 = vrot.lane.b32.xlu0 %v857, 20
        %v1276 = vpop.permute.xlu0 %1275
        %1277 = vrot.lane.b32.xlu0 %v860, 20
        %v1278 = vpop.permute.xlu0 %1277
        %1279 = vrot.lane.b32.xlu0 %v862, 20
        %v1280 = vpop.permute.xlu0 %1279
        %1281 = vrot.lane.b32.xlu0 %v865, 20
        %v1282 = vpop.permute.xlu0 %1281
        %1283 = vrot.lane.b32.xlu0 %v867, 20
        %v1284 = vpop.permute.xlu0 %1283
        %1285 = vrot.lane.b32.xlu0 %v870, 20
        %v1286 = vpop.permute.xlu0 %1285
        %1287 = vrot.lane.b32.xlu0 %v872, 20
        %v1288 = vpop.permute.xlu0 %1287
        %1289 = vrot.lane.b32.xlu0 %v875, 20
        %v1290 = vpop.permute.xlu0 %1289
        %1291 = vrot.lane.b32.xlu0 %v877, 20
        %v1292 = vpop.permute.xlu0 %1291
        %1293 = vrot.lane.b32.xlu0 %v880, 20
        %v1294 = vpop.permute.xlu0 %1293
        %1295 = vrot.lane.b32.xlu0 %v882, 20
        %v1296 = vpop.permute.xlu0 %1295
        %1297 = vrot.lane.b32.xlu0 %v885, 20
        %v1298 = vpop.permute.xlu0 %1297
        %1299 = vrot.lane.b32.xlu0 %v887, 20
        %v1300 = vpop.permute.xlu0 %1299
        %1301 = vrot.lane.b32.xlu0 %v890, 20
        %v1302 = vpop.permute.xlu0 %1301
        %1303 = vrot.lane.b32.xlu0 %v892, 20
        %v1304 = vpop.permute.xlu0 %1303
        %1305 = vrot.lane.b32.xlu0 %v895, 20
        %v1306 = vpop.permute.xlu0 %1305
        %1307 = vrot.lane.b32.xlu0 %v897, 20
        %v1308 = vpop.permute.xlu0 %1307
        %1309 = vrot.lane.b32.xlu0 %v900, 20
        %v1310 = vpop.permute.xlu0 %1309
        %1311 = vrot.lane.b32.xlu0 %v902, 20
        %v1312 = vpop.permute.xlu0 %1311
        %1313 = vrot.lane.b32.xlu0 %v905, 20
        %v1314 = vpop.permute.xlu0 %1313
        %1315 = vrot.lane.b32.xlu0 %v907, 20
        %v1316 = vpop.permute.xlu0 %1315
        %1317 = vrot.lane.b32.xlu0 %v910, 20
        %v1318 = vpop.permute.xlu0 %1317
        %1319 = vrot.lane.b32.xlu0 %v912, 20
        %v1320 = vpop.permute.xlu0 %1319
        %1321 = vrot.lane.b32.xlu0 %v915, 20
        %v1322 = vpop.permute.xlu0 %1321
        %1323 = vrot.lane.b32.xlu0 %v917, 20
        %v1324 = vpop.permute.xlu0 %1323
        %1325 = vrot.lane.b32.xlu0 %v920, 20
        %v1326 = vpop.permute.xlu0 %1325
        %1327 = vrot.lane.b32.xlu0 %v922, 20
        %v1328 = vpop.permute.xlu0 %1327
        %1329 = vrot.lane.b32.xlu0 %v925, 20
        %v1330 = vpop.permute.xlu0 %1329
        %1331 = vrot.lane.b32.xlu0 %v927, 20
        %v1332 = vpop.permute.xlu0 %1331
        %1333 = vrot.lane.b32.xlu0 %v930, 20
        %v1334 = vpop.permute.xlu0 %1333
        %1335 = vrot.lane.b32.xlu0 %v932, 20
        %v1336 = vpop.permute.xlu0 %1335
        %1337 = vrot.lane.b32.xlu0 %v1266, 20
        %v1338 = vpop.permute.xlu0 %1337
        %1339 = vrot.lane.b32.xlu0 %v1268, 20
        %v1340 = vpop.permute.xlu0 %1339
        %1378 = vrot.lane.b32.xlu0 %v569, 24
        %v1379 = vpop.permute.xlu0 %1378
        %1380 = vrot.lane.b32.xlu0 %v457, 24
        %v1381 = vpop.permute.xlu0 %1380
        %1382 = vrot.lane.b32.xlu0 %v570, 24
        %v1383 = vpop.permute.xlu0 %1382
        %1384 = vrot.lane.b32.xlu0 %v460, 24
        %v1385 = vpop.permute.xlu0 %1384
        %1386 = vrot.lane.b32.xlu0 %v571, 24
        %v1387 = vpop.permute.xlu0 %1386
        %1388 = vrot.lane.b32.xlu0 %v463, 24
        %v1389 = vpop.permute.xlu0 %1388
        %1390 = vrot.lane.b32.xlu0 %v572, 24
        %v1391 = vpop.permute.xlu0 %1390
        %1392 = vrot.lane.b32.xlu0 %v466, 24
        %v1393 = vpop.permute.xlu0 %1392
        %1394 = vrot.lane.b32.xlu0 %v573, 24
        %v1395 = vpop.permute.xlu0 %1394
        %1396 = vrot.lane.b32.xlu0 %v469, 24
        %v1397 = vpop.permute.xlu0 %1396
        %1398 = vrot.lane.b32.xlu0 %v574, 24
        %v1399 = vpop.permute.xlu0 %1398
        %1400 = vrot.lane.b32.xlu0 %v472, 24
        %v1401 = vpop.permute.xlu0 %1400
        %1402 = vrot.lane.b32.xlu0 %v575, 24
        %v1403 = vpop.permute.xlu0 %1402
        %1404 = vrot.lane.b32.xlu0 %v475, 24
        %v1405 = vpop.permute.xlu0 %1404
        %1406 = vrot.lane.b32.xlu0 %v576, 24
        %v1407 = vpop.permute.xlu0 %1406
        %1408 = vrot.lane.b32.xlu0 %v478, 24
        %v1409 = vpop.permute.xlu0 %1408
        %1410 = vrot.lane.b32.xlu0 %v577, 24
        %v1411 = vpop.permute.xlu0 %1410
        %1412 = vrot.lane.b32.xlu0 %v481, 24
        %v1413 = vpop.permute.xlu0 %1412
        %1414 = vrot.lane.b32.xlu0 %v578, 24
        %v1415 = vpop.permute.xlu0 %1414
        %1416 = vrot.lane.b32.xlu0 %v484, 24
        %v1417 = vpop.permute.xlu0 %1416
        %1418 = vrot.lane.b32.xlu0 %v579, 24
        %v1419 = vpop.permute.xlu0 %1418
        %1420 = vrot.lane.b32.xlu0 %v487, 24
        %v1421 = vpop.permute.xlu0 %1420
        %1422 = vrot.lane.b32.xlu0 %v580, 24
        %v1423 = vpop.permute.xlu0 %1422
        %1424 = vrot.lane.b32.xlu0 %v490, 24
        %v1425 = vpop.permute.xlu0 %1424
        %1426 = vrot.lane.b32.xlu0 %v581, 24
        %v1427 = vpop.permute.xlu0 %1426
        %1428 = vrot.lane.b32.xlu0 %v493, 24
        %v1429 = vpop.permute.xlu0 %1428
        %1430 = vrot.lane.b32.xlu0 %v582, 24
        %v1431 = vpop.permute.xlu0 %1430
        %1432 = vrot.lane.b32.xlu0 %v496, 24
        %v1433 = vpop.permute.xlu0 %1432
        %1434 = vrot.lane.b32.xlu0 %v583, 24
        %v1435 = vpop.permute.xlu0 %1434
        %1436 = vrot.lane.b32.xlu0 %v499, 24
        %v1437 = vpop.permute.xlu0 %1436
        %1438 = vrot.lane.b32.xlu0 %v584, 24
        %v1439 = vpop.permute.xlu0 %1438
        %1440 = vrot.lane.b32.xlu0 %v502, 24
        %v1441 = vpop.permute.xlu0 %1440
        %1442 = vrot.lane.b32.xlu0 %v585, 24
        %v1443 = vpop.permute.xlu0 %1442
        %1444 = vrot.lane.b32.xlu0 %v505, 24
        %v1445 = vpop.permute.xlu0 %1444
        %1446 = vrot.lane.b32.xlu0 %v586, 24
        %v1447 = vpop.permute.xlu0 %1446
        %1448 = vrot.lane.b32.xlu0 %v508, 24
        %v1449 = vpop.permute.xlu0 %1448
        %v1487 = vrot.slane %v586, 1
        %v1488 = vrot.slane %v508, 1
        %v1489 = vsel %vm643, %v1487, %v1488
        %v1490 = vrot.slane %v606, 1
        %v1491 = vsel %vm643, %v1488, %v1490
        %1492 = vrot.lane.b32.xlu0 %v656, 28
        %v1493 = vpop.permute.xlu0 %1492
        %1494 = vrot.lane.b32.xlu0 %v658, 28
        %v1495 = vpop.permute.xlu0 %1494
        %1496 = vrot.lane.b32.xlu0 %v661, 28
        %v1497 = vpop.permute.xlu0 %1496
        %1498 = vrot.lane.b32.xlu0 %v663, 28
        %v1499 = vpop.permute.xlu0 %1498
        %1500 = vrot.lane.b32.xlu0 %v666, 28
        %v1501 = vpop.permute.xlu0 %1500
        %1502 = vrot.lane.b32.xlu0 %v668, 28
        %v1503 = vpop.permute.xlu0 %1502
        %1504 = vrot.lane.b32.xlu0 %v671, 28
        %v1505 = vpop.permute.xlu0 %1504
        %1506 = vrot.lane.b32.xlu0 %v673, 28
        %v1507 = vpop.permute.xlu0 %1506
        %1508 = vrot.lane.b32.xlu0 %v676, 28
        %v1509 = vpop.permute.xlu0 %1508
        %1510 = vrot.lane.b32.xlu0 %v678, 28
        %v1511 = vpop.permute.xlu0 %1510
        %1512 = vrot.lane.b32.xlu0 %v681, 28
        %v1513 = vpop.permute.xlu0 %1512
        %1514 = vrot.lane.b32.xlu0 %v683, 28
        %v1515 = vpop.permute.xlu0 %1514
        %1516 = vrot.lane.b32.xlu0 %v686, 28
        %v1517 = vpop.permute.xlu0 %1516
        %1518 = vrot.lane.b32.xlu0 %v688, 28
        %v1519 = vpop.permute.xlu0 %1518
        %1520 = vrot.lane.b32.xlu0 %v691, 28
        %v1521 = vpop.permute.xlu0 %1520
        %1522 = vrot.lane.b32.xlu0 %v693, 28
        %v1523 = vpop.permute.xlu0 %1522
        %1524 = vrot.lane.b32.xlu0 %v696, 28
        %v1525 = vpop.permute.xlu0 %1524
        %1526 = vrot.lane.b32.xlu0 %v698, 28
        %v1527 = vpop.permute.xlu0 %1526
        %1528 = vrot.lane.b32.xlu0 %v701, 28
        %v1529 = vpop.permute.xlu0 %1528
        %1530 = vrot.lane.b32.xlu0 %v703, 28
        %v1531 = vpop.permute.xlu0 %1530
        %1532 = vrot.lane.b32.xlu0 %v706, 28
        %v1533 = vpop.permute.xlu0 %1532
        %1534 = vrot.lane.b32.xlu0 %v708, 28
        %v1535 = vpop.permute.xlu0 %1534
        %1536 = vrot.lane.b32.xlu0 %v711, 28
        %v1537 = vpop.permute.xlu0 %1536
        %1538 = vrot.lane.b32.xlu0 %v713, 28
        %v1539 = vpop.permute.xlu0 %1538
        %1540 = vrot.lane.b32.xlu0 %v716, 28
        %v1541 = vpop.permute.xlu0 %1540
        %1542 = vrot.lane.b32.xlu0 %v718, 28
        %v1543 = vpop.permute.xlu0 %1542
        %1544 = vrot.lane.b32.xlu0 %v721, 28
        %v1545 = vpop.permute.xlu0 %1544
        %1546 = vrot.lane.b32.xlu0 %v723, 28
        %v1547 = vpop.permute.xlu0 %1546
        %1548 = vrot.lane.b32.xlu0 %v726, 28
        %v1549 = vpop.permute.xlu0 %1548
        %1550 = vrot.lane.b32.xlu0 %v728, 28
        %v1551 = vpop.permute.xlu0 %1550
        %1552 = vrot.lane.b32.xlu0 %v731, 28
        %v1553 = vpop.permute.xlu0 %1552
        %1554 = vrot.lane.b32.xlu0 %v733, 28
        %v1555 = vpop.permute.xlu0 %1554
        %1556 = vrot.lane.b32.xlu0 %v1153, 28
        %v1557 = vpop.permute.xlu0 %1556
        %1558 = vrot.lane.b32.xlu0 %v1155, 28
        %v1559 = vpop.permute.xlu0 %1558
        %1560 = vrot.lane.b32.xlu0 %v1489, 28
        %v1561 = vpop.permute.xlu0 %1560
        %1562 = vrot.lane.b32.xlu0 %v1491, 28
        %v1563 = vpop.permute.xlu0 %1562
        %v1600 = vrot.slane %v586, 2
        %v1601 = vrot.slane %v508, 2
        %v1602 = vsel %vm842, %v1600, %v1601
        %v1603 = vrot.slane %v606, 2
        %v1604 = vsel %vm842, %v1601, %v1603
        %1605 = vrot.lane.b32.xlu0 %v855, 32
        %v1606 = vpop.permute.xlu0 %1605
        %1607 = vrot.lane.b32.xlu0 %v857, 32
        %v1608 = vpop.permute.xlu0 %1607
        %1609 = vrot.lane.b32.xlu0 %v860, 32
        %v1610 = vpop.permute.xlu0 %1609
        %1611 = vrot.lane.b32.xlu0 %v862, 32
        %v1612 = vpop.permute.xlu0 %1611
        %1613 = vrot.lane.b32.xlu0 %v865, 32
        %v1614 = vpop.permute.xlu0 %1613
        %1615 = vrot.lane.b32.xlu0 %v867, 32
        %v1616 = vpop.permute.xlu0 %1615
        %1617 = vrot.lane.b32.xlu0 %v870, 32
        %v1618 = vpop.permute.xlu0 %1617
        %1619 = vrot.lane.b32.xlu0 %v872, 32
        %v1620 = vpop.permute.xlu0 %1619
        %1621 = vrot.lane.b32.xlu0 %v875, 32
        %v1622 = vpop.permute.xlu0 %1621
        %1623 = vrot.lane.b32.xlu0 %v877, 32
        %v1624 = vpop.permute.xlu0 %1623
        %1625 = vrot.lane.b32.xlu0 %v880, 32
        %v1626 = vpop.permute.xlu0 %1625
        %1627 = vrot.lane.b32.xlu0 %v882, 32
        %v1628 = vpop.permute.xlu0 %1627
        %1629 = vrot.lane.b32.xlu0 %v885, 32
        %v1630 = vpop.permute.xlu0 %1629
        %1631 = vrot.lane.b32.xlu0 %v887, 32
        %v1632 = vpop.permute.xlu0 %1631
        %1633 = vrot.lane.b32.xlu0 %v890, 32
        %v1634 = vpop.permute.xlu0 %1633
        %1635 = vrot.lane.b32.xlu0 %v892, 32
        %v1636 = vpop.permute.xlu0 %1635
        %1637 = vrot.lane.b32.xlu0 %v895, 32
        %v1638 = vpop.permute.xlu0 %1637
        %1639 = vrot.lane.b32.xlu0 %v897, 32
        %v1640 = vpop.permute.xlu0 %1639
        %1641 = vrot.lane.b32.xlu0 %v900, 32
        %v1642 = vpop.permute.xlu0 %1641
        %1643 = vrot.lane.b32.xlu0 %v902, 32
        %v1644 = vpop.permute.xlu0 %1643
        %1645 = vrot.lane.b32.xlu0 %v905, 32
        %v1646 = vpop.permute.xlu0 %1645
        %1647 = vrot.lane.b32.xlu0 %v907, 32
        %v1648 = vpop.permute.xlu0 %1647
        %1649 = vrot.lane.b32.xlu0 %v910, 32
        %v1650 = vpop.permute.xlu0 %1649
        %1651 = vrot.lane.b32.xlu0 %v912, 32
        %v1652 = vpop.permute.xlu0 %1651
        %1653 = vrot.lane.b32.xlu0 %v915, 32
        %v1654 = vpop.permute.xlu0 %1653
        %1655 = vrot.lane.b32.xlu0 %v917, 32
        %v1656 = vpop.permute.xlu0 %1655
        %1657 = vrot.lane.b32.xlu0 %v920, 32
        %v1658 = vpop.permute.xlu0 %1657
        %1659 = vrot.lane.b32.xlu0 %v922, 32
        %v1660 = vpop.permute.xlu0 %1659
        %1661 = vrot.lane.b32.xlu0 %v925, 32
        %v1662 = vpop.permute.xlu0 %1661
        %1663 = vrot.lane.b32.xlu0 %v927, 32
        %v1664 = vpop.permute.xlu0 %1663
        %1665 = vrot.lane.b32.xlu0 %v930, 32
        %v1666 = vpop.permute.xlu0 %1665
        %1667 = vrot.lane.b32.xlu0 %v932, 32
        %v1668 = vpop.permute.xlu0 %1667
        %1669 = vrot.lane.b32.xlu0 %v1266, 32
        %v1670 = vpop.permute.xlu0 %1669
        %1671 = vrot.lane.b32.xlu0 %v1268, 32
        %v1672 = vpop.permute.xlu0 %1671
        %1673 = vrot.lane.b32.xlu0 %v1602, 32
        %v1674 = vpop.permute.xlu0 %1673
        %1675 = vrot.lane.b32.xlu0 %v1604, 32
        %v1676 = vpop.permute.xlu0 %1675
        %vm1713 = vcmask 31744
        %v1714 = vsel %vm1713, %v567, %v735
        %v1715 = vsel %vm1713, %v451, %v737
        %v1716 = vsel %vm1713, %v568, %v739
        %v1717 = vsel %vm1713, %v454, %v741
        %v1718 = vsel %vm1713, %v569, %v743
        %v1719 = vsel %vm1713, %v457, %v745
        %v1720 = vsel %vm1713, %v570, %v747
        %v1721 = vsel %vm1713, %v460, %v749
        %v1722 = vsel %vm1713, %v571, %v751
        %v1723 = vsel %vm1713, %v463, %v753
        %v1724 = vsel %vm1713, %v572, %v755
        %v1725 = vsel %vm1713, %v466, %v757
        %v1726 = vsel %vm1713, %v573, %v759
        %v1727 = vsel %vm1713, %v469, %v761
        %v1728 = vsel %vm1713, %v574, %v763
        %v1729 = vsel %vm1713, %v472, %v765
        %v1730 = vsel %vm1713, %v575, %v767
        %v1731 = vsel %vm1713, %v475, %v769
        %v1732 = vsel %vm1713, %v576, %v771
        %v1733 = vsel %vm1713, %v478, %v773
        %v1734 = vsel %vm1713, %v577, %v775
        %v1735 = vsel %vm1713, %v481, %v777
        %v1736 = vsel %vm1713, %v578, %v779
        %v1737 = vsel %vm1713, %v484, %v781
        %v1738 = vsel %vm1713, %v579, %v783
        %v1739 = vsel %vm1713, %v487, %v785
        %v1740 = vsel %vm1713, %v580, %v787
        %v1741 = vsel %vm1713, %v490, %v789
        %v1742 = vsel %vm1713, %v581, %v791
        %v1743 = vsel %vm1713, %v493, %v793
        %v1744 = vsel %vm1713, %v582, %v795
        %v1745 = vsel %vm1713, %v496, %v797
        %v1746 = vsel %vm1713, %v583, %v799
        %v1747 = vsel %vm1713, %v499, %v801
        %v1748 = vsel %vm1713, %v584, %v803
        %v1749 = vsel %vm1713, %v502, %v805
        %vm1750 = vcmask 64512
        %v1751 = vsel %vm1750, %v1714, %v934
        %v1752 = vsel %vm1750, %v1715, %v936
        %v1753 = vsel %vm1750, %v1716, %v938
        %v1754 = vsel %vm1750, %v1717, %v940
        %v1755 = vsel %vm1750, %v1718, %v942
        %v1756 = vsel %vm1750, %v1719, %v944
        %v1757 = vsel %vm1750, %v1720, %v946
        %v1758 = vsel %vm1750, %v1721, %v948
        %v1759 = vsel %vm1750, %v1722, %v950
        %v1760 = vsel %vm1750, %v1723, %v952
        %v1761 = vsel %vm1750, %v1724, %v954
        %v1762 = vsel %vm1750, %v1725, %v956
        %v1763 = vsel %vm1750, %v1726, %v958
        %v1764 = vsel %vm1750, %v1727, %v960
        %v1765 = vsel %vm1750, %v1728, %v962
        %v1766 = vsel %vm1750, %v1729, %v964
        %v1767 = vsel %vm1750, %v1730, %v966
        %v1768 = vsel %vm1750, %v1731, %v968
        %v1769 = vsel %vm1750, %v1732, %v970
        %v1770 = vsel %vm1750, %v1733, %v972
        %v1771 = vsel %vm1750, %v1734, %v974
        %v1772 = vsel %vm1750, %v1735, %v976
        %v1773 = vsel %vm1750, %v1736, %v978
        %v1774 = vsel %vm1750, %v1737, %v980
        %v1775 = vsel %vm1750, %v1738, %v982
        %v1776 = vsel %vm1750, %v1739, %v984
        %v1777 = vsel %vm1750, %v1740, %v986
        %v1778 = vsel %vm1750, %v1741, %v988
        %v1779 = vsel %vm1750, %v1742, %v990
        %v1780 = vsel %vm1750, %v1743, %v992
        %v1781 = vsel %vm1750, %v1744, %v994
        %v1782 = vsel %vm1750, %v1745, %v996
        %v1783 = vsel %vm1750, %v1746, %v998
        %v1784 = vsel %vm1750, %v1747, %v1000
        %v1785 = vsel %vm1750, %v1748, %v1002
        %v1786 = vsel %vm1750, %v1749, %v1004
        %vm1787 = vcmask 97280
        %v1788 = vsel %vm1787, %v1751, %v1043
        %v1789 = vsel %vm1787, %v1752, %v1045
        %v1790 = vsel %vm1787, %v1753, %v1047
        %v1791 = vsel %vm1787, %v1754, %v1049
        %v1792 = vsel %vm1787, %v1755, %v1051
        %v1793 = vsel %vm1787, %v1756, %v1053
        %v1794 = vsel %vm1787, %v1757, %v1055
        %v1795 = vsel %vm1787, %v1758, %v1057
        %v1796 = vsel %vm1787, %v1759, %v1059
        %v1797 = vsel %vm1787, %v1760, %v1061
        %v1798 = vsel %vm1787, %v1761, %v1063
        %v1799 = vsel %vm1787, %v1762, %v1065
        %v1800 = vsel %vm1787, %v1763, %v1067
        %v1801 = vsel %vm1787, %v1764, %v1069
        %v1802 = vsel %vm1787, %v1765, %v1071
        %v1803 = vsel %vm1787, %v1766, %v1073
        %v1804 = vsel %vm1787, %v1767, %v1075
        %v1805 = vsel %vm1787, %v1768, %v1077
        %v1806 = vsel %vm1787, %v1769, %v1079
        %v1807 = vsel %vm1787, %v1770, %v1081
        %v1808 = vsel %vm1787, %v1771, %v1083
        %v1809 = vsel %vm1787, %v1772, %v1085
        %v1810 = vsel %vm1787, %v1773, %v1087
        %v1811 = vsel %vm1787, %v1774, %v1089
        %v1812 = vsel %vm1787, %v1775, %v1091
        %v1813 = vsel %vm1787, %v1776, %v1093
        %v1814 = vsel %vm1787, %v1777, %v1095
        %v1815 = vsel %vm1787, %v1778, %v1097
        %v1816 = vsel %vm1787, %v1779, %v1099
        %v1817 = vsel %vm1787, %v1780, %v1101
        %v1818 = vsel %vm1787, %v1781, %v1103
        %v1819 = vsel %vm1787, %v1782, %v1105
        %v1820 = vsel %vm1787, %v1783, %v1107
        %v1821 = vsel %vm1787, %v1784, %v1109
        %v1822 = vsel %vm1787, %v1785, %v1111
        %v1823 = vsel %vm1787, %v1786, %v1113
        %vm1824 = vcmask 130048
        %v1825 = vsel %vm1824, %v1788, %v1157
        %v1826 = vsel %vm1824, %v1789, %v1159
        %v1827 = vsel %vm1824, %v1790, %v1161
        %v1828 = vsel %vm1824, %v1791, %v1163
        %v1829 = vsel %vm1824, %v1792, %v1165
        %v1830 = vsel %vm1824, %v1793, %v1167
        %v1831 = vsel %vm1824, %v1794, %v1169
        %v1832 = vsel %vm1824, %v1795, %v1171
        %v1833 = vsel %vm1824, %v1796, %v1173
        %v1834 = vsel %vm1824, %v1797, %v1175
        %v1835 = vsel %vm1824, %v1798, %v1177
        %v1836 = vsel %vm1824, %v1799, %v1179
        %v1837 = vsel %vm1824, %v1800, %v1181
        %v1838 = vsel %vm1824, %v1801, %v1183
        %v1839 = vsel %vm1824, %v1802, %v1185
        %v1840 = vsel %vm1824, %v1803, %v1187
        %v1841 = vsel %vm1824, %v1804, %v1189
        %v1842 = vsel %vm1824, %v1805, %v1191
        %v1843 = vsel %vm1824, %v1806, %v1193
        %v1844 = vsel %vm1824, %v1807, %v1195
        %v1845 = vsel %vm1824, %v1808, %v1197
        %v1846 = vsel %vm1824, %v1809, %v1199
        %v1847 = vsel %vm1824, %v1810, %v1201
        %v1848 = vsel %vm1824, %v1811, %v1203
        %v1849 = vsel %vm1824, %v1812, %v1205
        %v1850 = vsel %vm1824, %v1813, %v1207
        %v1851 = vsel %vm1824, %v1814, %v1209
        %v1852 = vsel %vm1824, %v1815, %v1211
        %v1853 = vsel %vm1824, %v1816, %v1213
        %v1854 = vsel %vm1824, %v1817, %v1215
        %v1855 = vsel %vm1824, %v1818, %v1217
        %v1856 = vsel %vm1824, %v1819, %v1219
        %v1857 = vsel %vm1824, %v1820, %v1221
        %v1858 = vsel %vm1824, %v1821, %v1223
        %v1859 = vsel %vm1824, %v1822, %v1225
        %v1860 = vsel %vm1824, %v1823, %v1227
        %vm1861 = vcmask 162816
        %v1862 = vsel %vm1861, %v1825, %v1270
        %v1863 = vsel %vm1861, %v1826, %v1272
        %v1864 = vsel %vm1861, %v1827, %v1274
        %v1865 = vsel %vm1861, %v1828, %v1276
        %v1866 = vsel %vm1861, %v1829, %v1278
        %v1867 = vsel %vm1861, %v1830, %v1280
        %v1868 = vsel %vm1861, %v1831, %v1282
        %v1869 = vsel %vm1861, %v1832, %v1284
        %v1870 = vsel %vm1861, %v1833, %v1286
        %v1871 = vsel %vm1861, %v1834, %v1288
        %v1872 = vsel %vm1861, %v1835, %v1290
        %v1873 = vsel %vm1861, %v1836, %v1292
        %v1874 = vsel %vm1861, %v1837, %v1294
        %v1875 = vsel %vm1861, %v1838, %v1296
        %v1876 = vsel %vm1861, %v1839, %v1298
        %v1877 = vsel %vm1861, %v1840, %v1300
        %v1878 = vsel %vm1861, %v1841, %v1302
        %v1879 = vsel %vm1861, %v1842, %v1304
        %v1880 = vsel %vm1861, %v1843, %v1306
        %v1881 = vsel %vm1861, %v1844, %v1308
        %v1882 = vsel %vm1861, %v1845, %v1310
        %v1883 = vsel %vm1861, %v1846, %v1312
        %v1884 = vsel %vm1861, %v1847, %v1314
        %v1885 = vsel %vm1861, %v1848, %v1316
        %v1886 = vsel %vm1861, %v1849, %v1318
        %v1887 = vsel %vm1861, %v1850, %v1320
        %v1888 = vsel %vm1861, %v1851, %v1322
        %v1889 = vsel %vm1861, %v1852, %v1324
        %v1890 = vsel %vm1861, %v1853, %v1326
        %v1891 = vsel %vm1861, %v1854, %v1328
        %v1892 = vsel %vm1861, %v1855, %v1330
        %v1893 = vsel %vm1861, %v1856, %v1332
        %v1894 = vsel %vm1861, %v1857, %v1334
        %v1895 = vsel %vm1861, %v1858, %v1336
        %v1896 = vsel %vm1861, %v1859, %v1338
        %v1897 = vsel %vm1861, %v1860, %v1340
        %vm1898 = vcmask 195584
        %v1899 = vsel %vm1898, %v1862, %v1379
        %v1900 = vsel %vm1898, %v1863, %v1381
        %v1901 = vsel %vm1898, %v1864, %v1383
        %v1902 = vsel %vm1898, %v1865, %v1385
        %v1903 = vsel %vm1898, %v1866, %v1387
        %v1904 = vsel %vm1898, %v1867, %v1389
        %v1905 = vsel %vm1898, %v1868, %v1391
        %v1906 = vsel %vm1898, %v1869, %v1393
        %v1907 = vsel %vm1898, %v1870, %v1395
        %v1908 = vsel %vm1898, %v1871, %v1397
        %v1909 = vsel %vm1898, %v1872, %v1399
        %v1910 = vsel %vm1898, %v1873, %v1401
        %v1911 = vsel %vm1898, %v1874, %v1403
        %v1912 = vsel %vm1898, %v1875, %v1405
        %v1913 = vsel %vm1898, %v1876, %v1407
        %v1914 = vsel %vm1898, %v1877, %v1409
        %v1915 = vsel %vm1898, %v1878, %v1411
        %v1916 = vsel %vm1898, %v1879, %v1413
        %v1917 = vsel %vm1898, %v1880, %v1415
        %v1918 = vsel %vm1898, %v1881, %v1417
        %v1919 = vsel %vm1898, %v1882, %v1419
        %v1920 = vsel %vm1898, %v1883, %v1421
        %v1921 = vsel %vm1898, %v1884, %v1423
        %v1922 = vsel %vm1898, %v1885, %v1425
        %v1923 = vsel %vm1898, %v1886, %v1427
        %v1924 = vsel %vm1898, %v1887, %v1429
        %v1925 = vsel %vm1898, %v1888, %v1431
        %v1926 = vsel %vm1898, %v1889, %v1433
        %v1927 = vsel %vm1898, %v1890, %v1435
        %v1928 = vsel %vm1898, %v1891, %v1437
        %v1929 = vsel %vm1898, %v1892, %v1439
        %v1930 = vsel %vm1898, %v1893, %v1441
        %v1931 = vsel %vm1898, %v1894, %v1443
        %v1932 = vsel %vm1898, %v1895, %v1445
        %v1933 = vsel %vm1898, %v1896, %v1447
        %v1934 = vsel %vm1898, %v1897, %v1449
        %vm1935 = vcmask 228352
        %v1936 = vsel %vm1935, %v1899, %v1493
        %v1937 = vsel %vm1935, %v1900, %v1495
        %v1938 = vsel %vm1935, %v1901, %v1497
        %v1939 = vsel %vm1935, %v1902, %v1499
        %v1940 = vsel %vm1935, %v1903, %v1501
        %v1941 = vsel %vm1935, %v1904, %v1503
        %v1942 = vsel %vm1935, %v1905, %v1505
        %v1943 = vsel %vm1935, %v1906, %v1507
        %v1944 = vsel %vm1935, %v1907, %v1509
        %v1945 = vsel %vm1935, %v1908, %v1511
        %v1946 = vsel %vm1935, %v1909, %v1513
        %v1947 = vsel %vm1935, %v1910, %v1515
        %v1948 = vsel %vm1935, %v1911, %v1517
        %v1949 = vsel %vm1935, %v1912, %v1519
        %v1950 = vsel %vm1935, %v1913, %v1521
        %v1951 = vsel %vm1935, %v1914, %v1523
        %v1952 = vsel %vm1935, %v1915, %v1525
        %v1953 = vsel %vm1935, %v1916, %v1527
        %v1954 = vsel %vm1935, %v1917, %v1529
        %v1955 = vsel %vm1935, %v1918, %v1531
        %v1956 = vsel %vm1935, %v1919, %v1533
        %v1957 = vsel %vm1935, %v1920, %v1535
        %v1958 = vsel %vm1935, %v1921, %v1537
        %v1959 = vsel %vm1935, %v1922, %v1539
        %v1960 = vsel %vm1935, %v1923, %v1541
        %v1961 = vsel %vm1935, %v1924, %v1543
        %v1962 = vsel %vm1935, %v1925, %v1545
        %v1963 = vsel %vm1935, %v1926, %v1547
        %v1964 = vsel %vm1935, %v1927, %v1549
        %v1965 = vsel %vm1935, %v1928, %v1551
        %v1966 = vsel %vm1935, %v1929, %v1553
        %v1967 = vsel %vm1935, %v1930, %v1555
        %v1968 = vsel %vm1935, %v1931, %v1557
        %v1969 = vsel %vm1935, %v1932, %v1559
        %v1970 = vsel %vm1935, %v1933, %v1561
        %v1971 = vsel %vm1935, %v1934, %v1563
        %vm1972 = vcmask 261120
        %v1973 = vsel %vm1972, %v1936, %v1606
        %v1974 = vsel %vm1972, %v1937, %v1608
        %v1975 = vsel %vm1972, %v1938, %v1610
        %v1976 = vsel %vm1972, %v1939, %v1612
        %v1977 = vsel %vm1972, %v1940, %v1614
        %v1978 = vsel %vm1972, %v1941, %v1616
        %v1979 = vsel %vm1972, %v1942, %v1618
        %v1980 = vsel %vm1972, %v1943, %v1620
        %v1981 = vsel %vm1972, %v1944, %v1622
        %v1982 = vsel %vm1972, %v1945, %v1624
        %v1983 = vsel %vm1972, %v1946, %v1626
        %v1984 = vsel %vm1972, %v1947, %v1628
        %v1985 = vsel %vm1972, %v1948, %v1630
        %v1986 = vsel %vm1972, %v1949, %v1632
        %v1987 = vsel %vm1972, %v1950, %v1634
        %v1988 = vsel %vm1972, %v1951, %v1636
        %v1989 = vsel %vm1972, %v1952, %v1638
        %v1990 = vsel %vm1972, %v1953, %v1640
        %v1991 = vsel %vm1972, %v1954, %v1642
        %v1992 = vsel %vm1972, %v1955, %v1644
        %v1993 = vsel %vm1972, %v1956, %v1646
        %v1994 = vsel %vm1972, %v1957, %v1648
        %v1995 = vsel %vm1972, %v1958, %v1650
        %v1996 = vsel %vm1972, %v1959, %v1652
        %v1997 = vsel %vm1972, %v1960, %v1654
        %v1998 = vsel %vm1972, %v1961, %v1656
        %v1999 = vsel %vm1972, %v1962, %v1658
        %v2000 = vsel %vm1972, %v1963, %v1660
        %v2001 = vsel %vm1972, %v1964, %v1662
        %v2002 = vsel %vm1972, %v1965, %v1664
        %v2003 = vsel %vm1972, %v1966, %v1666
        %v2004 = vsel %vm1972, %v1967, %v1668
        %v2005 = vsel %vm1972, %v1968, %v1670
        %v2006 = vsel %vm1972, %v1969, %v1672
        %v2007 = vsel %vm1972, %v1970, %v1674
        %v2008 = vsel %vm1972, %v1971, %v1676
        %v2009 = vld [vmem:[%s1] sm:$0xff]
        %v2010 = vld [vmem:[%s1 + $0x8] sm:$0xff]
        %v2011 = vld [vmem:[%s1 + $0x10] sm:$0xff]
        %v2012 = vld [vmem:[%s1 + $0x18] sm:$0xff]
        %v2013 = vld [vmem:[%s1 + $0x20] sm:$0xf]
        %vm2014 = vcmask 293888
        %v2016 = vsel %vm2014, %v1973, 0
        %v2019 = vsel %vm2014, %v1974, 0
        %v2022 = vsel %vm2014, %v1975, 0
        %v2025 = vsel %vm2014, %v1976, 0
        %v2028 = vsel %vm2014, %v1977, 0
        %v2031 = vsel %vm2014, %v1978, 0
        %v2034 = vsel %vm2014, %v1979, 0
        %v2037 = vsel %vm2014, %v1980, 0
        %v2040 = vsel %vm2014, %v1981, 0
        %v2043 = vsel %vm2014, %v1982, 0
        %v2046 = vsel %vm2014, %v1983, 0
        %v2049 = vsel %vm2014, %v1984, 0
        %v2052 = vsel %vm2014, %v1985, 0
        %v2055 = vsel %vm2014, %v1986, 0
        %v2058 = vsel %vm2014, %v1987, 0
        %v2061 = vsel %vm2014, %v1988, 0
        %v2064 = vsel %vm2014, %v1989, 0
        %v2067 = vsel %vm2014, %v1990, 0
        %v2070 = vsel %vm2014, %v1991, 0
        %v2073 = vsel %vm2014, %v1992, 0
        %v2076 = vsel %vm2014, %v1993, 0
        %v2079 = vsel %vm2014, %v1994, 0
        %v2082 = vsel %vm2014, %v1995, 0
        %v2085 = vsel %vm2014, %v1996, 0
        %v2088 = vsel %vm2014, %v1997, 0
        %v2091 = vsel %vm2014, %v1998, 0
        %v2094 = vsel %vm2014, %v1999, 0
        %v2097 = vsel %vm2014, %v2000, 0
        %v2100 = vsel %vm2014, %v2001, 0
        %v2103 = vsel %vm2014, %v2002, 0
        %v2106 = vsel %vm2014, %v2003, 0
        %v2109 = vsel %vm2014, %v2004, 0
        %v2112 = vsel %vm2014, %v2005, 0
        %v2115 = vsel %vm2014, %v2006, 0
        %v2118 = vsel %vm2014, %v2007, 0
        %v2121 = vsel %vm2014, %v2008, 0
        %vm2123 = vcmask 1043456
        %v2125 = vsel %vm2123, %v2013, 0
        %2127 = vmatprep.subr.mxu0 0.0
        %2128 = vmatpush1.msra.mxu0 0.0
        %2129 = vmatprep.subr.mxu0 0.0
        %2130 = vmatpush1.msra.mxu0 0.0
        %2131 = vmatprep.subr.mxu0 0.0
        %2132 = vmatpush1.msra.mxu0 0.0
        %2133 = vmatprep.subr.mxu0 0.0
        %2134 = vmatpush1.msra.mxu0 0.0
        %2135 = vmatprep.subr.mxu0 0.0
        %2136 = vmatpush1.msra.mxu0 0.0
        %2137 = vmatprep.subr.mxu0 0.0
        %2138 = vmatpush1.msra.mxu0 0.0
        %2139 = vmatprep.subr.mxu0 0.0
        %2140 = vmatpush1.msra.mxu0 0.0
        %2141 = vmatprep.subr.mxu0 0.0
        %2142 = vmatpush1.msra.mxu0 0.0
        %2143 = vmatprep.subr.mxu0 0.0
        %2144 = vmatpush1.msra.mxu0 0.0
        %2145 = vmatprep.subr.mxu0 0.0
        %2146 = vmatpush1.msra.mxu0 0.0
        %2147 = vmatprep.subr.mxu0 0.0
        %2148 = vmatpush1.msra.mxu0 0.0
        %2149 = vmatprep.subr.mxu0 0.0
        %2150 = vmatpush1.msra.mxu0 %v2125
        %2151 = vmatprep.subr.mxu0 0.0
        %2152 = vmatpush1.msra.mxu0 %v2012
        %2153 = vmatprep.subr.mxu0 0.0
        %2154 = vmatpush1.msra.mxu0 %v2011
        %2155 = vmatprep.subr.mxu0 0.0
        %2156 = vmatpush1.msra.mxu0 %v2010
        %2157 = vmatprep.subr.mxu0 0.0
        %2158 = vmatpush1.msra.mxu0 %v2009
        %2159 = vmatprep.subr.mxu0 0.0
        %2160 = vmatpush2.msra.mxu0 0.0
        %2161 = vmatprep.subr.mxu0 0.0
        %2162 = vmatpush2.msra.mxu0 0.0
        %2163 = vmatprep.subr.mxu0 0.0
        %2164 = vmatpush2.msra.mxu0 0.0
        %2165 = vmatprep.subr.mxu0 0.0
        %2166 = vmatpush2.msra.mxu0 0.0
        %2167 = vmatprep.subr.mxu0 0.0
        %2168 = vmatpush2.msra.mxu0 0.0
        %2169 = vmatprep.subr.mxu0 0.0
        %2170 = vmatpush2.msra.mxu0 0.0
        %2171 = vmatprep.subr.mxu0 0.0
        %2172 = vmatpush2.msra.mxu0 0.0
        %2173 = vmatprep.subr.mxu0 0.0
        %2174 = vmatpush2.msra.mxu0 0.0
        %2175 = vmatprep.subr.mxu0 0.0
        %2176 = vmatpush2.msra.mxu0 0.0
        %2177 = vmatprep.subr.mxu0 0.0
        %2178 = vmatpush2.msra.mxu0 0.0
        %2179 = vmatprep.subr.mxu0 0.0
        %2180 = vmatpush2.msra.mxu0 0.0
        %2181 = vmatprep.subr.mxu0 0.0
        %2182 = vmatpush2.msra.mxu0 0.0
        %2183 = vmatprep.subr.mxu0 0.0
        %2184 = vmatpush2.msra.mxu0 0.0
        %2185 = vmatprep.subr.mxu0 0.0
        %2186 = vmatpush2.msra.mxu0 0.0
        %2187 = vmatprep.subr.mxu0 0.0
        %2188 = vmatpush2.msra.mxu0 0.0
        %2189 = vmatprep.subr.mxu0 0.0
        %2190 = vmatpush2.msra.mxu0 0.0
        %2191 = vmatprep.mubr.f32.mxu0 0.0
        %2192 = vmatmul.mubr.f32.gmra.mxu0 %v2016
        %v2193 = vpop.f32.mrf.mxu0
        %v2194 = vadd.f32 0.0, %v2193
        %v2195 = vpop.f32.mrf.mxu0
        %2196 = vmatprep.mubr.f32.mxu0 0.0
        %2197 = vmatmul.mubr.f32.gmra.mxu0 %v2019
        %v2198 = vpop.f32.mrf.mxu0
        %v2199 = vadd.f32 0.0, %v2198
        %v2200 = vpop.f32.mrf.mxu0
        %2201 = vmatprep.mubr.f32.mxu0 0.0
        %2202 = vmatmul.mubr.f32.gmra.mxu0 %v2022
        %v2203 = vpop.f32.mrf.mxu0
        %v2204 = vadd.f32 0.0, %v2203
        %v2205 = vpop.f32.mrf.mxu0
        %2206 = vmatprep.mubr.f32.mxu0 0.0
        %2207 = vmatmul.mubr.f32.gmra.mxu0 %v2025
        %v2208 = vpop.f32.mrf.mxu0
        %v2209 = vadd.f32 0.0, %v2208
        %v2210 = vpop.f32.mrf.mxu0
        %2211 = vmatprep.mubr.f32.mxu0 0.0
        %2212 = vmatmul.mubr.f32.gmra.mxu0 %v2028
        %v2213 = vpop.f32.mrf.mxu0
        %v2214 = vadd.f32 0.0, %v2213
        %v2215 = vpop.f32.mrf.mxu0
        %2216 = vmatprep.mubr.f32.mxu0 0.0
        %2217 = vmatmul.mubr.f32.gmra.mxu0 %v2031
        %v2218 = vpop.f32.mrf.mxu0
        %v2219 = vadd.f32 0.0, %v2218
        %v2220 = vpop.f32.mrf.mxu0
        %2221 = vmatprep.mubr.f32.mxu0 0.0
        %2222 = vmatmul.mubr.f32.gmra.mxu0 %v2034
        %v2223 = vpop.f32.mrf.mxu0
        %v2224 = vadd.f32 0.0, %v2223
        %v2225 = vpop.f32.mrf.mxu0
        %2226 = vmatprep.mubr.f32.mxu0 0.0
        %2227 = vmatmul.mubr.f32.gmra.mxu0 %v2037
        %v2228 = vpop.f32.mrf.mxu0
        %v2229 = vadd.f32 0.0, %v2228
        %v2230 = vpop.f32.mrf.mxu0
        %2231 = vmatprep.mubr.f32.mxu0 0.0
        %2232 = vmatmul.mubr.f32.gmra.mxu0 %v2040
        %v2233 = vpop.f32.mrf.mxu0
        %v2234 = vadd.f32 0.0, %v2233
        %v2235 = vpop.f32.mrf.mxu0
        %2236 = vmatprep.mubr.f32.mxu0 0.0
        %2237 = vmatmul.mubr.f32.gmra.mxu0 %v2043
        %v2238 = vpop.f32.mrf.mxu0
        %v2239 = vadd.f32 0.0, %v2238
        %v2240 = vpop.f32.mrf.mxu0
        %2241 = vmatprep.mubr.f32.mxu0 0.0
        %2242 = vmatmul.mubr.f32.gmra.mxu0 %v2046
        %v2243 = vpop.f32.mrf.mxu0
        %v2244 = vadd.f32 0.0, %v2243
        %v2245 = vpop.f32.mrf.mxu0
        %2246 = vmatprep.mubr.f32.mxu0 0.0
        %2247 = vmatmul.mubr.f32.gmra.mxu0 %v2049
        %v2248 = vpop.f32.mrf.mxu0
        %v2249 = vadd.f32 0.0, %v2248
        %v2250 = vpop.f32.mrf.mxu0
        %2251 = vmatprep.mubr.f32.mxu0 0.0
        %2252 = vmatmul.mubr.f32.gmra.mxu0 %v2052
        %v2253 = vpop.f32.mrf.mxu0
        %v2254 = vadd.f32 0.0, %v2253
        %v2255 = vpop.f32.mrf.mxu0
        %2256 = vmatprep.mubr.f32.mxu0 0.0
        %2257 = vmatmul.mubr.f32.gmra.mxu0 %v2055
        %v2258 = vpop.f32.mrf.mxu0
        %v2259 = vadd.f32 0.0, %v2258
        %v2260 = vpop.f32.mrf.mxu0
        %2261 = vmatprep.mubr.f32.mxu0 0.0
        %2262 = vmatmul.mubr.f32.gmra.mxu0 %v2058
        %v2263 = vpop.f32.mrf.mxu0
        %v2264 = vadd.f32 0.0, %v2263
        %v2265 = vpop.f32.mrf.mxu0
        %2266 = vmatprep.mubr.f32.mxu0 0.0
        %2267 = vmatmul.mubr.f32.gmra.mxu0 %v2061
        %v2268 = vpop.f32.mrf.mxu0
        %v2269 = vadd.f32 0.0, %v2268
        %v2270 = vpop.f32.mrf.mxu0
        %2271 = vmatprep.mubr.f32.mxu0 0.0
        %2272 = vmatmul.mubr.f32.gmra.mxu0 %v2064
        %v2273 = vpop.f32.mrf.mxu0
        %v2274 = vadd.f32 0.0, %v2273
        %v2275 = vpop.f32.mrf.mxu0
        %2276 = vmatprep.mubr.f32.mxu0 0.0
        %2277 = vmatmul.mubr.f32.gmra.mxu0 %v2067
        %v2278 = vpop.f32.mrf.mxu0
        %v2279 = vadd.f32 0.0, %v2278
        %v2280 = vpop.f32.mrf.mxu0
        %2281 = vmatprep.mubr.f32.mxu0 0.0
        %2282 = vmatmul.mubr.f32.gmra.mxu0 %v2070
        %v2283 = vpop.f32.mrf.mxu0
        %v2284 = vadd.f32 0.0, %v2283
        %v2285 = vpop.f32.mrf.mxu0
        %2286 = vmatprep.mubr.f32.mxu0 0.0
        %2287 = vmatmul.mubr.f32.gmra.mxu0 %v2073
        %v2288 = vpop.f32.mrf.mxu0
        %v2289 = vadd.f32 0.0, %v2288
        %v2290 = vpop.f32.mrf.mxu0
        %2291 = vmatprep.mubr.f32.mxu0 0.0
        %2292 = vmatmul.mubr.f32.gmra.mxu0 %v2076
        %v2293 = vpop.f32.mrf.mxu0
        %v2294 = vadd.f32 0.0, %v2293
        %v2295 = vpop.f32.mrf.mxu0
        %2296 = vmatprep.mubr.f32.mxu0 0.0
        %2297 = vmatmul.mubr.f32.gmra.mxu0 %v2079
        %v2298 = vpop.f32.mrf.mxu0
        %v2299 = vadd.f32 0.0, %v2298
        %v2300 = vpop.f32.mrf.mxu0
        %2301 = vmatprep.mubr.f32.mxu0 0.0
        %2302 = vmatmul.mubr.f32.gmra.mxu0 %v2082
        %v2303 = vpop.f32.mrf.mxu0
        %v2304 = vadd.f32 0.0, %v2303
        %v2305 = vpop.f32.mrf.mxu0
        %2306 = vmatprep.mubr.f32.mxu0 0.0
        %2307 = vmatmul.mubr.f32.gmra.mxu0 %v2085
        %v2308 = vpop.f32.mrf.mxu0
        %v2309 = vadd.f32 0.0, %v2308
        %v2310 = vpop.f32.mrf.mxu0
        %2311 = vmatprep.mubr.f32.mxu0 0.0
        %2312 = vmatmul.mubr.f32.gmra.mxu0 %v2088
        %v2313 = vpop.f32.mrf.mxu0
        %v2314 = vadd.f32 0.0, %v2313
        %v2315 = vpop.f32.mrf.mxu0
        %2316 = vmatprep.mubr.f32.mxu0 0.0
        %2317 = vmatmul.mubr.f32.gmra.mxu0 %v2091
        %v2318 = vpop.f32.mrf.mxu0
        %v2319 = vadd.f32 0.0, %v2318
        %v2320 = vpop.f32.mrf.mxu0
        %2321 = vmatprep.mubr.f32.mxu0 0.0
        %2322 = vmatmul.mubr.f32.gmra.mxu0 %v2094
        %v2323 = vpop.f32.mrf.mxu0
        %v2324 = vadd.f32 0.0, %v2323
        %v2325 = vpop.f32.mrf.mxu0
        %2326 = vmatprep.mubr.f32.mxu0 0.0
        %2327 = vmatmul.mubr.f32.gmra.mxu0 %v2097
        %v2328 = vpop.f32.mrf.mxu0
        %v2329 = vadd.f32 0.0, %v2328
        %v2330 = vpop.f32.mrf.mxu0
        %2331 = vmatprep.mubr.f32.mxu0 0.0
        %2332 = vmatmul.mubr.f32.gmra.mxu0 %v2100
        %v2333 = vpop.f32.mrf.mxu0
        %v2334 = vadd.f32 0.0, %v2333
        %v2335 = vpop.f32.mrf.mxu0
        %2336 = vmatprep.mubr.f32.mxu0 0.0
        %2337 = vmatmul.mubr.f32.gmra.mxu0 %v2103
        %v2338 = vpop.f32.mrf.mxu0
        %v2339 = vadd.f32 0.0, %v2338
        %v2340 = vpop.f32.mrf.mxu0
        %2341 = vmatprep.mubr.f32.mxu0 0.0
        %2342 = vmatmul.mubr.f32.gmra.mxu0 %v2106
        %v2343 = vpop.f32.mrf.mxu0
        %v2344 = vadd.f32 0.0, %v2343
        %v2345 = vpop.f32.mrf.mxu0
        %2346 = vmatprep.mubr.f32.mxu0 0.0
        %2347 = vmatmul.mubr.f32.gmra.mxu0 %v2109
        %v2348 = vpop.f32.mrf.mxu0
        %v2349 = vadd.f32 0.0, %v2348
        %v2350 = vpop.f32.mrf.mxu0
        %2351 = vmatprep.mubr.f32.mxu0 0.0
        %2352 = vmatmul.mubr.f32.gmra.mxu0 %v2112
        %v2353 = vpop.f32.mrf.mxu0
        %v2354 = vadd.f32 0.0, %v2353
        %v2355 = vpop.f32.mrf.mxu0
        %2356 = vmatprep.mubr.f32.mxu0 0.0
        %2357 = vmatmul.mubr.f32.gmra.mxu0 %v2115
        %v2358 = vpop.f32.mrf.mxu0
        %v2359 = vadd.f32 0.0, %v2358
        %v2360 = vpop.f32.mrf.mxu0
        %2361 = vmatprep.mubr.f32.mxu0 0.0
        %2362 = vmatmul.mubr.f32.gmra.mxu0 %v2118
        %v2363 = vpop.f32.mrf.mxu0
        %v2364 = vadd.f32 0.0, %v2363
        %v2365 = vpop.f32.mrf.mxu0
        %2366 = vmatprep.mubr.f32.mxu0 0.0
        %2367 = vmatmul.mubr.f32.gmra.mxu0 %v2121
        %v2368 = vpop.f32.mrf.mxu0
        %v2369 = vadd.f32 0.0, %v2368
        %v2370 = vpop.f32.mrf.mxu0
        %2371 = vdwg.mxu0
        %v2372 = vld [vmem:[%s2] sm:$0x1]
        %v2374 = vlaneseq
        %v2375 = vshrl.u32 %v2374, 7
        %v2376 = vsub.s32 0, %v2375
        %v2377 = vrot.slane %v2372, %v2376
        %v2379 = vadd.f32 %v2194, %v2377
        %v2380 = vadd.f32 %v2199, %v2377
        %v2381 = vadd.f32 %v2204, %v2377
        %v2382 = vadd.f32 %v2209, %v2377
        %v2383 = vadd.f32 %v2214, %v2377
        %v2384 = vadd.f32 %v2219, %v2377
        %v2385 = vadd.f32 %v2224, %v2377
        %v2386 = vadd.f32 %v2229, %v2377
        %v2387 = vadd.f32 %v2234, %v2377
        %v2388 = vadd.f32 %v2239, %v2377
        %v2389 = vadd.f32 %v2244, %v2377
        %v2390 = vadd.f32 %v2249, %v2377
        %v2391 = vadd.f32 %v2254, %v2377
        %v2392 = vadd.f32 %v2259, %v2377
        %v2393 = vadd.f32 %v2264, %v2377
        %v2394 = vadd.f32 %v2269, %v2377
        %v2395 = vadd.f32 %v2274, %v2377
        %v2396 = vadd.f32 %v2279, %v2377
        %v2397 = vadd.f32 %v2284, %v2377
        %v2398 = vadd.f32 %v2289, %v2377
        %v2399 = vadd.f32 %v2294, %v2377
        %v2400 = vadd.f32 %v2299, %v2377
        %v2401 = vadd.f32 %v2304, %v2377
        %v2402 = vadd.f32 %v2309, %v2377
        %v2403 = vadd.f32 %v2314, %v2377
        %v2404 = vadd.f32 %v2319, %v2377
        %v2405 = vadd.f32 %v2324, %v2377
        %v2406 = vadd.f32 %v2329, %v2377
        %v2407 = vadd.f32 %v2334, %v2377
        %v2408 = vadd.f32 %v2339, %v2377
        %v2409 = vadd.f32 %v2344, %v2377
        %v2410 = vadd.f32 %v2349, %v2377
        %v2411 = vadd.f32 %v2354, %v2377
        %v2412 = vadd.f32 %v2359, %v2377
        %v2413 = vadd.f32 %v2364, %v2377
        %v2414 = vadd.f32 %v2369, %v2377
        %s2415 = ssub.s32 %s291, 1
        %v2416 = vstv %s2415
        %v2417 = vadd.s32 %v2416, 1
        %v2418 = vadd.s32 %v2416, 2
        %v2419 = vadd.s32 %v2416, 3
        %v2420 = vadd.s32 %v2416, 4
        %v2421 = vadd.s32 %v2416, 5
        %v2422 = vadd.s32 %v2416, 6
        %v2423 = vadd.s32 %v2416, 7
        %v2424 = vadd.s32 %v2416, 8
        %v2425 = vadd.s32 %v2416, 9
        %v2426 = vadd.s32 %v2416, 10
        %v2427 = vadd.s32 %v2416, 11
        %v2428 = vadd.s32 %v2416, 12
        %v2429 = vadd.s32 %v2416, 13
        %v2430 = vadd.s32 %v2416, 14
        %v2431 = vadd.s32 %v2416, 15
        %v2432 = vadd.s32 %v2416, 16
        %v2433 = vadd.s32 %v2416, 17
        %vm2434 = vcmp.ge.s32.totalorder %v2416, 0
        %vm2435 = vcmp.ge.s32.totalorder %v2417, 0
        %vm2436 = vcmp.ge.s32.totalorder %v2418, 0
        %vm2437 = vcmp.ge.s32.totalorder %v2419, 0
        %vm2438 = vcmp.ge.s32.totalorder %v2420, 0
        %vm2439 = vcmp.ge.s32.totalorder %v2421, 0
        %vm2440 = vcmp.ge.s32.totalorder %v2422, 0
        %vm2441 = vcmp.ge.s32.totalorder %v2423, 0
        %vm2442 = vcmp.ge.s32.totalorder %v2424, 0
        %vm2443 = vcmp.ge.s32.totalorder %v2425, 0
        %vm2444 = vcmp.ge.s32.totalorder %v2426, 0
        %vm2445 = vcmp.ge.s32.totalorder %v2427, 0
        %vm2446 = vcmp.ge.s32.totalorder %v2428, 0
        %vm2447 = vcmp.ge.s32.totalorder %v2429, 0
        %vm2448 = vcmp.ge.s32.totalorder %v2430, 0
        %vm2449 = vcmp.ge.s32.totalorder %v2431, 0
        %vm2450 = vcmp.ge.s32.totalorder %v2432, 0
        %vm2451 = vcmp.ge.s32.totalorder %v2433, 0
        %vm2452 = vcmp.lt.s32.totalorder %v2416, 16
        %vm2453 = vcmp.lt.s32.totalorder %v2417, 16
        %vm2454 = vcmp.lt.s32.totalorder %v2418, 16
        %vm2455 = vcmp.lt.s32.totalorder %v2419, 16
        %vm2456 = vcmp.lt.s32.totalorder %v2420, 16
        %vm2457 = vcmp.lt.s32.totalorder %v2421, 16
        %vm2458 = vcmp.lt.s32.totalorder %v2422, 16
        %vm2459 = vcmp.lt.s32.totalorder %v2423, 16
        %vm2460 = vcmp.lt.s32.totalorder %v2424, 16
        %vm2461 = vcmp.lt.s32.totalorder %v2425, 16
        %vm2462 = vcmp.lt.s32.totalorder %v2426, 16
        %vm2463 = vcmp.lt.s32.totalorder %v2427, 16
        %vm2464 = vcmp.lt.s32.totalorder %v2428, 16
        %vm2465 = vcmp.lt.s32.totalorder %v2429, 16
        %vm2466 = vcmp.lt.s32.totalorder %v2430, 16
        %vm2467 = vcmp.lt.s32.totalorder %v2431, 16
        %vm2468 = vcmp.lt.s32.totalorder %v2432, 16
        %vm2469 = vcmp.lt.s32.totalorder %v2433, 16
        %vm2470 = vmand %vm2434, %vm2452
        %vm2471 = vmand %vm2435, %vm2453
        %vm2472 = vmand %vm2436, %vm2454
        %vm2473 = vmand %vm2437, %vm2455
        %vm2474 = vmand %vm2438, %vm2456
        %vm2475 = vmand %vm2439, %vm2457
        %vm2476 = vmand %vm2440, %vm2458
        %vm2477 = vmand %vm2441, %vm2459
        %vm2478 = vmand %vm2442, %vm2460
        %vm2479 = vmand %vm2443, %vm2461
        %vm2480 = vmand %vm2444, %vm2462
        %vm2481 = vmand %vm2445, %vm2463
        %vm2482 = vmand %vm2446, %vm2464
        %vm2483 = vmand %vm2447, %vm2465
        %vm2484 = vmand %vm2448, %vm2466
        %vm2485 = vmand %vm2449, %vm2467
        %vm2486 = vmand %vm2450, %vm2468
        %vm2487 = vmand %vm2451, %vm2469
        %v2488 = vmax.f32 %v2379, 0.0
        %v2489 = vmax.f32 %v2380, 0.0
        %v2490 = vmax.f32 %v2381, 0.0
        %v2491 = vmax.f32 %v2382, 0.0
        %v2492 = vmax.f32 %v2383, 0.0
        %v2493 = vmax.f32 %v2384, 0.0
        %v2494 = vmax.f32 %v2385, 0.0
        %v2495 = vmax.f32 %v2386, 0.0
        %v2496 = vmax.f32 %v2387, 0.0
        %v2497 = vmax.f32 %v2388, 0.0
        %v2498 = vmax.f32 %v2389, 0.0
        %v2499 = vmax.f32 %v2390, 0.0
        %v2500 = vmax.f32 %v2391, 0.0
        %v2501 = vmax.f32 %v2392, 0.0
        %v2502 = vmax.f32 %v2393, 0.0
        %v2503 = vmax.f32 %v2394, 0.0
        %v2504 = vmax.f32 %v2395, 0.0
        %v2505 = vmax.f32 %v2396, 0.0
        %v2506 = vmax.f32 %v2397, 0.0
        %v2507 = vmax.f32 %v2398, 0.0
        %v2508 = vmax.f32 %v2399, 0.0
        %v2509 = vmax.f32 %v2400, 0.0
        %v2510 = vmax.f32 %v2401, 0.0
        %v2511 = vmax.f32 %v2402, 0.0
        %v2512 = vmax.f32 %v2403, 0.0
        %v2513 = vmax.f32 %v2404, 0.0
        %v2514 = vmax.f32 %v2405, 0.0
        %v2515 = vmax.f32 %v2406, 0.0
        %v2516 = vmax.f32 %v2407, 0.0
        %v2517 = vmax.f32 %v2408, 0.0
        %v2518 = vmax.f32 %v2409, 0.0
        %v2519 = vmax.f32 %v2410, 0.0
        %v2520 = vmax.f32 %v2411, 0.0
        %v2521 = vmax.f32 %v2412, 0.0
        %v2522 = vmax.f32 %v2413, 0.0
        %v2523 = vmax.f32 %v2414, 0.0
        %v2524 = vsel %vm2470, 1, 0
        %v2525 = vsel %vm2471, 1, 0
        %v2526 = vsel %vm2472, 1, 0
        %v2527 = vsel %vm2473, 1, 0
        %v2528 = vsel %vm2474, 1, 0
        %v2529 = vsel %vm2475, 1, 0
        %v2530 = vsel %vm2476, 1, 0
        %v2531 = vsel %vm2477, 1, 0
        %v2532 = vsel %vm2478, 1, 0
        %v2533 = vsel %vm2479, 1, 0
        %v2534 = vsel %vm2480, 1, 0
        %v2535 = vsel %vm2481, 1, 0
        %v2536 = vsel %vm2482, 1, 0
        %v2537 = vsel %vm2483, 1, 0
        %v2538 = vsel %vm2484, 1, 0
        %v2539 = vsel %vm2485, 1, 0
        %v2540 = vsel %vm2486, 1, 0
        %v2541 = vsel %vm2487, 1, 0
        %vm2542 = vcmp.eq.s32.totalorder %v2524, 1
        %vm2543 = vcmp.eq.s32.totalorder %v2525, 1
        %vm2544 = vcmp.eq.s32.totalorder %v2526, 1
        %vm2545 = vcmp.eq.s32.totalorder %v2527, 1
        %vm2546 = vcmp.eq.s32.totalorder %v2528, 1
        %vm2547 = vcmp.eq.s32.totalorder %v2529, 1
        %vm2548 = vcmp.eq.s32.totalorder %v2530, 1
        %vm2549 = vcmp.eq.s32.totalorder %v2531, 1
        %vm2550 = vcmp.eq.s32.totalorder %v2532, 1
        %vm2551 = vcmp.eq.s32.totalorder %v2533, 1
        %vm2552 = vcmp.eq.s32.totalorder %v2534, 1
        %vm2553 = vcmp.eq.s32.totalorder %v2535, 1
        %vm2554 = vcmp.eq.s32.totalorder %v2536, 1
        %vm2555 = vcmp.eq.s32.totalorder %v2537, 1
        %vm2556 = vcmp.eq.s32.totalorder %v2538, 1
        %vm2557 = vcmp.eq.s32.totalorder %v2539, 1
        %vm2558 = vcmp.eq.s32.totalorder %v2540, 1
        %vm2559 = vcmp.eq.s32.totalorder %v2541, 1
        %v2560 = vsel %vm2542, %v2488, 0.0
        %v2561 = vsel %vm2542, %v2489, 0.0
        %v2562 = vsel %vm2543, %v2490, 0.0
        %v2563 = vsel %vm2543, %v2491, 0.0
        %v2564 = vsel %vm2544, %v2492, 0.0
        %v2565 = vsel %vm2544, %v2493, 0.0
        %v2566 = vsel %vm2545, %v2494, 0.0
        %v2567 = vsel %vm2545, %v2495, 0.0
        %v2568 = vsel %vm2546, %v2496, 0.0
        %v2569 = vsel %vm2546, %v2497, 0.0
        %v2570 = vsel %vm2547, %v2498, 0.0
        %v2571 = vsel %vm2547, %v2499, 0.0
        %v2572 = vsel %vm2548, %v2500, 0.0
        %v2573 = vsel %vm2548, %v2501, 0.0
        %v2574 = vsel %vm2549, %v2502, 0.0
        %v2575 = vsel %vm2549, %v2503, 0.0
        %v2576 = vsel %vm2550, %v2504, 0.0
        %v2577 = vsel %vm2550, %v2505, 0.0
        %v2578 = vsel %vm2551, %v2506, 0.0
        %v2579 = vsel %vm2551, %v2507, 0.0
        %v2580 = vsel %vm2552, %v2508, 0.0
        %v2581 = vsel %vm2552, %v2509, 0.0
        %v2582 = vsel %vm2553, %v2510, 0.0
        %v2583 = vsel %vm2553, %v2511, 0.0
        %v2584 = vsel %vm2554, %v2512, 0.0
        %v2585 = vsel %vm2554, %v2513, 0.0
        %v2586 = vsel %vm2555, %v2514, 0.0
        %v2587 = vsel %vm2555, %v2515, 0.0
        %v2588 = vsel %vm2556, %v2516, 0.0
        %v2589 = vsel %vm2556, %v2517, 0.0
        %v2590 = vsel %vm2557, %v2518, 0.0
        %v2591 = vsel %vm2557, %v2519, 0.0
        %v2592 = vsel %vm2558, %v2520, 0.0
        %v2593 = vsel %vm2558, %v2521, 0.0
        %v2594 = vsel %vm2559, %v2522, 0.0
        %v2595 = vsel %vm2559, %v2523, 0.0
        %v2632 = vrot.slane %v2560, 7
        %v2633 = vrot.slane %v2561, 7
        %v2634 = vsel %vm448, %v2632, %v2633
        %v2635 = vrot.slane %v2562, 7
        %v2636 = vrot.slane %v2563, 7
        %v2637 = vsel %vm448, %v2635, %v2636
        %v2638 = vrot.slane %v2564, 7
        %v2639 = vrot.slane %v2565, 7
        %v2640 = vsel %vm448, %v2638, %v2639
        %v2641 = vrot.slane %v2566, 7
        %v2642 = vrot.slane %v2567, 7
        %v2643 = vsel %vm448, %v2641, %v2642
        %v2644 = vrot.slane %v2568, 7
        %v2645 = vrot.slane %v2569, 7
        %v2646 = vsel %vm448, %v2644, %v2645
        %v2647 = vrot.slane %v2570, 7
        %v2648 = vrot.slane %v2571, 7
        %v2649 = vsel %vm448, %v2647, %v2648
        %v2650 = vrot.slane %v2572, 7
        %v2651 = vrot.slane %v2573, 7
        %v2652 = vsel %vm448, %v2650, %v2651
        %v2653 = vrot.slane %v2574, 7
        %v2654 = vrot.slane %v2575, 7
        %v2655 = vsel %vm448, %v2653, %v2654
        %v2656 = vrot.slane %v2576, 7
        %v2657 = vrot.slane %v2577, 7
        %v2658 = vsel %vm448, %v2656, %v2657
        %v2659 = vrot.slane %v2578, 7
        %v2660 = vrot.slane %v2579, 7
        %v2661 = vsel %vm448, %v2659, %v2660
        %v2662 = vrot.slane %v2580, 7
        %v2663 = vrot.slane %v2581, 7
        %v2664 = vsel %vm448, %v2662, %v2663
        %v2665 = vrot.slane %v2582, 7
        %v2666 = vrot.slane %v2583, 7
        %v2667 = vsel %vm448, %v2665, %v2666
        %v2668 = vrot.slane %v2584, 7
        %v2669 = vrot.slane %v2585, 7
        %v2670 = vsel %vm448, %v2668, %v2669
        %v2671 = vrot.slane %v2586, 7
        %v2672 = vrot.slane %v2587, 7
        %v2673 = vsel %vm448, %v2671, %v2672
        %v2674 = vrot.slane %v2588, 7
        %v2675 = vrot.slane %v2589, 7
        %v2676 = vsel %vm448, %v2674, %v2675
        %v2677 = vrot.slane %v2590, 7
        %v2678 = vrot.slane %v2591, 7
        %v2679 = vsel %vm448, %v2677, %v2678
        %v2680 = vrot.slane %v2592, 7
        %v2681 = vrot.slane %v2593, 7
        %v2682 = vsel %vm448, %v2680, %v2681
        %v2683 = vrot.slane %v2594, 7
        %v2684 = vrot.slane %v2595, 7
        %v2685 = vsel %vm448, %v2683, %v2684
        %v2738 = vsel %vm448, 0.0, %v2632
        %v2739 = vsel %vm448, 0.0, %v2635
        %v2740 = vsel %vm448, 0.0, %v2638
        %v2741 = vsel %vm448, 0.0, %v2641
        %v2742 = vsel %vm448, 0.0, %v2644
        %v2743 = vsel %vm448, 0.0, %v2647
        %v2744 = vsel %vm448, 0.0, %v2650
        %v2745 = vsel %vm448, 0.0, %v2653
        %v2746 = vsel %vm448, 0.0, %v2656
        %v2747 = vsel %vm448, 0.0, %v2659
        %v2748 = vsel %vm448, 0.0, %v2662
        %v2749 = vsel %vm448, 0.0, %v2665
        %v2750 = vsel %vm448, 0.0, %v2668
        %v2751 = vsel %vm448, 0.0, %v2671
        %v2752 = vsel %vm448, 0.0, %v2674
        %v2753 = vsel %vm448, 0.0, %v2677
        %v2754 = vsel %vm448, 0.0, %v2680
        %v2755 = vsel %vm448, 0.0, %v2683
        %v2756 = vsel %vm448, %v2633, 0.0
        %v2757 = vsel %vm448, %v2636, 0.0
        %v2758 = vsel %vm448, %v2639, 0.0
        %v2759 = vsel %vm448, %v2642, 0.0
        %v2760 = vsel %vm448, %v2645, 0.0
        %v2761 = vsel %vm448, %v2648, 0.0
        %v2762 = vsel %vm448, %v2651, 0.0
        %v2763 = vsel %vm448, %v2654, 0.0
        %v2764 = vsel %vm448, %v2657, 0.0
        %v2765 = vsel %vm448, %v2660, 0.0
        %v2766 = vsel %vm448, %v2663, 0.0
        %v2767 = vsel %vm448, %v2666, 0.0
        %v2768 = vsel %vm448, %v2669, 0.0
        %v2769 = vsel %vm448, %v2672, 0.0
        %v2770 = vsel %vm448, %v2675, 0.0
        %v2771 = vsel %vm448, %v2678, 0.0
        %v2772 = vsel %vm448, %v2681, 0.0
        %v2773 = vsel %vm448, %v2684, 0.0
        %v2806 = vrot.slane %v2738, 1
        %v2807 = vrot.slane %v2634, 1
        %v2808 = vsel %vm643, %v2806, %v2807
        %v2809 = vrot.slane %v2756, 1
        %v2810 = vsel %vm643, %v2807, %v2809
        %v2811 = vrot.slane %v2739, 1
        %v2812 = vrot.slane %v2637, 1
        %v2813 = vsel %vm643, %v2811, %v2812
        %v2814 = vrot.slane %v2757, 1
        %v2815 = vsel %vm643, %v2812, %v2814
        %v2816 = vrot.slane %v2740, 1
        %v2817 = vrot.slane %v2640, 1
        %v2818 = vsel %vm643, %v2816, %v2817
        %v2819 = vrot.slane %v2758, 1
        %v2820 = vsel %vm643, %v2817, %v2819
        %v2821 = vrot.slane %v2741, 1
        %v2822 = vrot.slane %v2643, 1
        %v2823 = vsel %vm643, %v2821, %v2822
        %v2824 = vrot.slane %v2759, 1
        %v2825 = vsel %vm643, %v2822, %v2824
        %v2826 = vrot.slane %v2742, 1
        %v2827 = vrot.slane %v2646, 1
        %v2828 = vsel %vm643, %v2826, %v2827
        %v2829 = vrot.slane %v2760, 1
        %v2830 = vsel %vm643, %v2827, %v2829
        %v2831 = vrot.slane %v2743, 1
        %v2832 = vrot.slane %v2649, 1
        %v2833 = vsel %vm643, %v2831, %v2832
        %v2834 = vrot.slane %v2761, 1
        %v2835 = vsel %vm643, %v2832, %v2834
        %v2836 = vrot.slane %v2744, 1
        %v2837 = vrot.slane %v2652, 1
        %v2838 = vsel %vm643, %v2836, %v2837
        %v2839 = vrot.slane %v2762, 1
        %v2840 = vsel %vm643, %v2837, %v2839
        %v2841 = vrot.slane %v2745, 1
        %v2842 = vrot.slane %v2655, 1
        %v2843 = vsel %vm643, %v2841, %v2842
        %v2844 = vrot.slane %v2763, 1
        %v2845 = vsel %vm643, %v2842, %v2844
        %v2846 = vrot.slane %v2746, 1
        %v2847 = vrot.slane %v2658, 1
        %v2848 = vsel %vm643, %v2846, %v2847
        %v2849 = vrot.slane %v2764, 1
        %v2850 = vsel %vm643, %v2847, %v2849
        %v2851 = vrot.slane %v2747, 1
        %v2852 = vrot.slane %v2661, 1
        %v2853 = vsel %vm643, %v2851, %v2852
        %v2854 = vrot.slane %v2765, 1
        %v2855 = vsel %vm643, %v2852, %v2854
        %v2856 = vrot.slane %v2748, 1
        %v2857 = vrot.slane %v2664, 1
        %v2858 = vsel %vm643, %v2856, %v2857
        %v2859 = vrot.slane %v2766, 1
        %v2860 = vsel %vm643, %v2857, %v2859
        %v2861 = vrot.slane %v2749, 1
        %v2862 = vrot.slane %v2667, 1
        %v2863 = vsel %vm643, %v2861, %v2862
        %v2864 = vrot.slane %v2767, 1
        %v2865 = vsel %vm643, %v2862, %v2864
        %v2866 = vrot.slane %v2750, 1
        %v2867 = vrot.slane %v2670, 1
        %v2868 = vsel %vm643, %v2866, %v2867
        %v2869 = vrot.slane %v2768, 1
        %v2870 = vsel %vm643, %v2867, %v2869
        %v2871 = vrot.slane %v2751, 1
        %v2872 = vrot.slane %v2673, 1
        %v2873 = vsel %vm643, %v2871, %v2872
        %v2874 = vrot.slane %v2769, 1
        %v2875 = vsel %vm643, %v2872, %v2874
        %v2876 = vrot.slane %v2752, 1
        %v2877 = vrot.slane %v2676, 1
        %v2878 = vsel %vm643, %v2876, %v2877
        %v2879 = vrot.slane %v2770, 1
        %v2880 = vsel %vm643, %v2877, %v2879
        %v2881 = vrot.slane %v2753, 1
        %v2882 = vrot.slane %v2679, 1
        %v2883 = vsel %vm643, %v2881, %v2882
        %v2884 = vrot.slane %v2771, 1
        %v2885 = vsel %vm643, %v2882, %v2884
        %2886 = vrot.lane.b32.xlu0 %v2808, 8
        %v2887 = vpop.permute.xlu0 %2886
        %2888 = vrot.lane.b32.xlu0 %v2810, 8
        %v2889 = vpop.permute.xlu0 %2888
        %2890 = vrot.lane.b32.xlu0 %v2813, 8
        %v2891 = vpop.permute.xlu0 %2890
        %2892 = vrot.lane.b32.xlu0 %v2815, 8
        %v2893 = vpop.permute.xlu0 %2892
        %2894 = vrot.lane.b32.xlu0 %v2818, 8
        %v2895 = vpop.permute.xlu0 %2894
        %2896 = vrot.lane.b32.xlu0 %v2820, 8
        %v2897 = vpop.permute.xlu0 %2896
        %2898 = vrot.lane.b32.xlu0 %v2823, 8
        %v2899 = vpop.permute.xlu0 %2898
        %2900 = vrot.lane.b32.xlu0 %v2825, 8
        %v2901 = vpop.permute.xlu0 %2900
        %2902 = vrot.lane.b32.xlu0 %v2828, 8
        %v2903 = vpop.permute.xlu0 %2902
        %2904 = vrot.lane.b32.xlu0 %v2830, 8
        %v2905 = vpop.permute.xlu0 %2904
        %2906 = vrot.lane.b32.xlu0 %v2833, 8
        %v2907 = vpop.permute.xlu0 %2906
        %2908 = vrot.lane.b32.xlu0 %v2835, 8
        %v2909 = vpop.permute.xlu0 %2908
        %2910 = vrot.lane.b32.xlu0 %v2838, 8
        %v2911 = vpop.permute.xlu0 %2910
        %2912 = vrot.lane.b32.xlu0 %v2840, 8
        %v2913 = vpop.permute.xlu0 %2912
        %2914 = vrot.lane.b32.xlu0 %v2843, 8
        %v2915 = vpop.permute.xlu0 %2914
        %2916 = vrot.lane.b32.xlu0 %v2845, 8
        %v2917 = vpop.permute.xlu0 %2916
        %2918 = vrot.lane.b32.xlu0 %v2848, 8
        %v2919 = vpop.permute.xlu0 %2918
        %2920 = vrot.lane.b32.xlu0 %v2850, 8
        %v2921 = vpop.permute.xlu0 %2920
        %2922 = vrot.lane.b32.xlu0 %v2853, 8
        %v2923 = vpop.permute.xlu0 %2922
        %2924 = vrot.lane.b32.xlu0 %v2855, 8
        %v2925 = vpop.permute.xlu0 %2924
        %2926 = vrot.lane.b32.xlu0 %v2858, 8
        %v2927 = vpop.permute.xlu0 %2926
        %2928 = vrot.lane.b32.xlu0 %v2860, 8
        %v2929 = vpop.permute.xlu0 %2928
        %2930 = vrot.lane.b32.xlu0 %v2863, 8
        %v2931 = vpop.permute.xlu0 %2930
        %2932 = vrot.lane.b32.xlu0 %v2865, 8
        %v2933 = vpop.permute.xlu0 %2932
        %2934 = vrot.lane.b32.xlu0 %v2868, 8
        %v2935 = vpop.permute.xlu0 %2934
        %2936 = vrot.lane.b32.xlu0 %v2870, 8
        %v2937 = vpop.permute.xlu0 %2936
        %2938 = vrot.lane.b32.xlu0 %v2873, 8
        %v2939 = vpop.permute.xlu0 %2938
        %2940 = vrot.lane.b32.xlu0 %v2875, 8
        %v2941 = vpop.permute.xlu0 %2940
        %2942 = vrot.lane.b32.xlu0 %v2878, 8
        %v2943 = vpop.permute.xlu0 %2942
        %2944 = vrot.lane.b32.xlu0 %v2880, 8
        %v2945 = vpop.permute.xlu0 %2944
        %2946 = vrot.lane.b32.xlu0 %v2883, 8
        %v2947 = vpop.permute.xlu0 %2946
        %2948 = vrot.lane.b32.xlu0 %v2885, 8
        %v2949 = vpop.permute.xlu0 %2948
        %v2982 = vrot.slane %v2738, 2
        %v2983 = vrot.slane %v2634, 2
        %v2984 = vsel %vm842, %v2982, %v2983
        %v2985 = vrot.slane %v2756, 2
        %v2986 = vsel %vm842, %v2983, %v2985
        %v2987 = vrot.slane %v2739, 2
        %v2988 = vrot.slane %v2637, 2
        %v2989 = vsel %vm842, %v2987, %v2988
        %v2990 = vrot.slane %v2757, 2
        %v2991 = vsel %vm842, %v2988, %v2990
        %v2992 = vrot.slane %v2740, 2
        %v2993 = vrot.slane %v2640, 2
        %v2994 = vsel %vm842, %v2992, %v2993
        %v2995 = vrot.slane %v2758, 2
        %v2996 = vsel %vm842, %v2993, %v2995
        %v2997 = vrot.slane %v2741, 2
        %v2998 = vrot.slane %v2643, 2
        %v2999 = vsel %vm842, %v2997, %v2998
        %v3000 = vrot.slane %v2759, 2
        %v3001 = vsel %vm842, %v2998, %v3000
        %v3002 = vrot.slane %v2742, 2
        %v3003 = vrot.slane %v2646, 2
        %v3004 = vsel %vm842, %v3002, %v3003
        %v3005 = vrot.slane %v2760, 2
        %v3006 = vsel %vm842, %v3003, %v3005
        %v3007 = vrot.slane %v2743, 2
        %v3008 = vrot.slane %v2649, 2
        %v3009 = vsel %vm842, %v3007, %v3008
        %v3010 = vrot.slane %v2761, 2
        %v3011 = vsel %vm842, %v3008, %v3010
        %v3012 = vrot.slane %v2744, 2
        %v3013 = vrot.slane %v2652, 2
        %v3014 = vsel %vm842, %v3012, %v3013
        %v3015 = vrot.slane %v2762, 2
        %v3016 = vsel %vm842, %v3013, %v3015
        %v3017 = vrot.slane %v2745, 2
        %v3018 = vrot.slane %v2655, 2
        %v3019 = vsel %vm842, %v3017, %v3018
        %v3020 = vrot.slane %v2763, 2
        %v3021 = vsel %vm842, %v3018, %v3020
        %v3022 = vrot.slane %v2746, 2
        %v3023 = vrot.slane %v2658, 2
        %v3024 = vsel %vm842, %v3022, %v3023
        %v3025 = vrot.slane %v2764, 2
        %v3026 = vsel %vm842, %v3023, %v3025
        %v3027 = vrot.slane %v2747, 2
        %v3028 = vrot.slane %v2661, 2
        %v3029 = vsel %vm842, %v3027, %v3028
        %v3030 = vrot.slane %v2765, 2
        %v3031 = vsel %vm842, %v3028, %v3030
        %v3032 = vrot.slane %v2748, 2
        %v3033 = vrot.slane %v2664, 2
        %v3034 = vsel %vm842, %v3032, %v3033
        %v3035 = vrot.slane %v2766, 2
        %v3036 = vsel %vm842, %v3033, %v3035
        %v3037 = vrot.slane %v2749, 2
        %v3038 = vrot.slane %v2667, 2
        %v3039 = vsel %vm842, %v3037, %v3038
        %v3040 = vrot.slane %v2767, 2
        %v3041 = vsel %vm842, %v3038, %v3040
        %v3042 = vrot.slane %v2750, 2
        %v3043 = vrot.slane %v2670, 2
        %v3044 = vsel %vm842, %v3042, %v3043
        %v3045 = vrot.slane %v2768, 2
        %v3046 = vsel %vm842, %v3043, %v3045
        %v3047 = vrot.slane %v2751, 2
        %v3048 = vrot.slane %v2673, 2
        %v3049 = vsel %vm842, %v3047, %v3048
        %v3050 = vrot.slane %v2769, 2
        %v3051 = vsel %vm842, %v3048, %v3050
        %v3052 = vrot.slane %v2752, 2
        %v3053 = vrot.slane %v2676, 2
        %v3054 = vsel %vm842, %v3052, %v3053
        %v3055 = vrot.slane %v2770, 2
        %v3056 = vsel %vm842, %v3053, %v3055
        %v3057 = vrot.slane %v2753, 2
        %v3058 = vrot.slane %v2679, 2
        %v3059 = vsel %vm842, %v3057, %v3058
        %v3060 = vrot.slane %v2771, 2
        %v3061 = vsel %vm842, %v3058, %v3060
        %3062 = vrot.lane.b32.xlu0 %v2984, 16
        %v3063 = vpop.permute.xlu0 %3062
        %3064 = vrot.lane.b32.xlu0 %v2986, 16
        %v3065 = vpop.permute.xlu0 %3064
        %3066 = vrot.lane.b32.xlu0 %v2989, 16
        %v3067 = vpop.permute.xlu0 %3066
        %3068 = vrot.lane.b32.xlu0 %v2991, 16
        %v3069 = vpop.permute.xlu0 %3068
        %3070 = vrot.lane.b32.xlu0 %v2994, 16
        %v3071 = vpop.permute.xlu0 %3070
        %3072 = vrot.lane.b32.xlu0 %v2996, 16
        %v3073 = vpop.permute.xlu0 %3072
        %3074 = vrot.lane.b32.xlu0 %v2999, 16
        %v3075 = vpop.permute.xlu0 %3074
        %3076 = vrot.lane.b32.xlu0 %v3001, 16
        %v3077 = vpop.permute.xlu0 %3076
        %3078 = vrot.lane.b32.xlu0 %v3004, 16
        %v3079 = vpop.permute.xlu0 %3078
        %3080 = vrot.lane.b32.xlu0 %v3006, 16
        %v3081 = vpop.permute.xlu0 %3080
        %3082 = vrot.lane.b32.xlu0 %v3009, 16
        %v3083 = vpop.permute.xlu0 %3082
        %3084 = vrot.lane.b32.xlu0 %v3011, 16
        %v3085 = vpop.permute.xlu0 %3084
        %3086 = vrot.lane.b32.xlu0 %v3014, 16
        %v3087 = vpop.permute.xlu0 %3086
        %3088 = vrot.lane.b32.xlu0 %v3016, 16
        %v3089 = vpop.permute.xlu0 %3088
        %3090 = vrot.lane.b32.xlu0 %v3019, 16
        %v3091 = vpop.permute.xlu0 %3090
        %3092 = vrot.lane.b32.xlu0 %v3021, 16
        %v3093 = vpop.permute.xlu0 %3092
        %3094 = vrot.lane.b32.xlu0 %v3024, 16
        %v3095 = vpop.permute.xlu0 %3094
        %3096 = vrot.lane.b32.xlu0 %v3026, 16
        %v3097 = vpop.permute.xlu0 %3096
        %3098 = vrot.lane.b32.xlu0 %v3029, 16
        %v3099 = vpop.permute.xlu0 %3098
        %3100 = vrot.lane.b32.xlu0 %v3031, 16
        %v3101 = vpop.permute.xlu0 %3100
        %3102 = vrot.lane.b32.xlu0 %v3034, 16
        %v3103 = vpop.permute.xlu0 %3102
        %3104 = vrot.lane.b32.xlu0 %v3036, 16
        %v3105 = vpop.permute.xlu0 %3104
        %3106 = vrot.lane.b32.xlu0 %v3039, 16
        %v3107 = vpop.permute.xlu0 %3106
        %3108 = vrot.lane.b32.xlu0 %v3041, 16
        %v3109 = vpop.permute.xlu0 %3108
        %3110 = vrot.lane.b32.xlu0 %v3044, 16
        %v3111 = vpop.permute.xlu0 %3110
        %3112 = vrot.lane.b32.xlu0 %v3046, 16
        %v3113 = vpop.permute.xlu0 %3112
        %3114 = vrot.lane.b32.xlu0 %v3049, 16
        %v3115 = vpop.permute.xlu0 %3114
        %3116 = vrot.lane.b32.xlu0 %v3051, 16
        %v3117 = vpop.permute.xlu0 %3116
        %3118 = vrot.lane.b32.xlu0 %v3054, 16
        %v3119 = vpop.permute.xlu0 %3118
        %3120 = vrot.lane.b32.xlu0 %v3056, 16
        %v3121 = vpop.permute.xlu0 %3120
        %3122 = vrot.lane.b32.xlu0 %v3059, 16
        %v3123 = vpop.permute.xlu0 %3122
        %3124 = vrot.lane.b32.xlu0 %v3061, 16
        %v3125 = vpop.permute.xlu0 %3124
        %3159 = vrot.lane.b32.xlu0 %v2739, 24
        %v3160 = vpop.permute.xlu0 %3159
        %3161 = vrot.lane.b32.xlu0 %v2637, 24
        %v3162 = vpop.permute.xlu0 %3161
        %3163 = vrot.lane.b32.xlu0 %v2740, 24
        %v3164 = vpop.permute.xlu0 %3163
        %3165 = vrot.lane.b32.xlu0 %v2640, 24
        %v3166 = vpop.permute.xlu0 %3165
        %3167 = vrot.lane.b32.xlu0 %v2741, 24
        %v3168 = vpop.permute.xlu0 %3167
        %3169 = vrot.lane.b32.xlu0 %v2643, 24
        %v3170 = vpop.permute.xlu0 %3169
        %3171 = vrot.lane.b32.xlu0 %v2742, 24
        %v3172 = vpop.permute.xlu0 %3171
        %3173 = vrot.lane.b32.xlu0 %v2646, 24
        %v3174 = vpop.permute.xlu0 %3173
        %3175 = vrot.lane.b32.xlu0 %v2743, 24
        %v3176 = vpop.permute.xlu0 %3175
        %3177 = vrot.lane.b32.xlu0 %v2649, 24
        %v3178 = vpop.permute.xlu0 %3177
        %3179 = vrot.lane.b32.xlu0 %v2744, 24
        %v3180 = vpop.permute.xlu0 %3179
        %3181 = vrot.lane.b32.xlu0 %v2652, 24
        %v3182 = vpop.permute.xlu0 %3181
        %3183 = vrot.lane.b32.xlu0 %v2745, 24
        %v3184 = vpop.permute.xlu0 %3183
        %3185 = vrot.lane.b32.xlu0 %v2655, 24
        %v3186 = vpop.permute.xlu0 %3185
        %3187 = vrot.lane.b32.xlu0 %v2746, 24
        %v3188 = vpop.permute.xlu0 %3187
        %3189 = vrot.lane.b32.xlu0 %v2658, 24
        %v3190 = vpop.permute.xlu0 %3189
        %3191 = vrot.lane.b32.xlu0 %v2747, 24
        %v3192 = vpop.permute.xlu0 %3191
        %3193 = vrot.lane.b32.xlu0 %v2661, 24
        %v3194 = vpop.permute.xlu0 %3193
        %3195 = vrot.lane.b32.xlu0 %v2748, 24
        %v3196 = vpop.permute.xlu0 %3195
        %3197 = vrot.lane.b32.xlu0 %v2664, 24
        %v3198 = vpop.permute.xlu0 %3197
        %3199 = vrot.lane.b32.xlu0 %v2749, 24
        %v3200 = vpop.permute.xlu0 %3199
        %3201 = vrot.lane.b32.xlu0 %v2667, 24
        %v3202 = vpop.permute.xlu0 %3201
        %3203 = vrot.lane.b32.xlu0 %v2750, 24
        %v3204 = vpop.permute.xlu0 %3203
        %3205 = vrot.lane.b32.xlu0 %v2670, 24
        %v3206 = vpop.permute.xlu0 %3205
        %3207 = vrot.lane.b32.xlu0 %v2751, 24
        %v3208 = vpop.permute.xlu0 %3207
        %3209 = vrot.lane.b32.xlu0 %v2673, 24
        %v3210 = vpop.permute.xlu0 %3209
        %3211 = vrot.lane.b32.xlu0 %v2752, 24
        %v3212 = vpop.permute.xlu0 %3211
        %3213 = vrot.lane.b32.xlu0 %v2676, 24
        %v3214 = vpop.permute.xlu0 %3213
        %3215 = vrot.lane.b32.xlu0 %v2753, 24
        %v3216 = vpop.permute.xlu0 %3215
        %3217 = vrot.lane.b32.xlu0 %v2679, 24
        %v3218 = vpop.permute.xlu0 %3217
        %3219 = vrot.lane.b32.xlu0 %v2754, 24
        %v3220 = vpop.permute.xlu0 %3219
        %3221 = vrot.lane.b32.xlu0 %v2682, 24
        %v3222 = vpop.permute.xlu0 %3221
        %v3256 = vrot.slane %v2754, 1
        %v3257 = vrot.slane %v2682, 1
        %v3258 = vsel %vm643, %v3256, %v3257
        %v3259 = vrot.slane %v2772, 1
        %v3260 = vsel %vm643, %v3257, %v3259
        %3261 = vrot.lane.b32.xlu0 %v2813, 32
        %v3262 = vpop.permute.xlu0 %3261
        %3263 = vrot.lane.b32.xlu0 %v2815, 32
        %v3264 = vpop.permute.xlu0 %3263
        %3265 = vrot.lane.b32.xlu0 %v2818, 32
        %v3266 = vpop.permute.xlu0 %3265
        %3267 = vrot.lane.b32.xlu0 %v2820, 32
        %v3268 = vpop.permute.xlu0 %3267
        %3269 = vrot.lane.b32.xlu0 %v2823, 32
        %v3270 = vpop.permute.xlu0 %3269
        %3271 = vrot.lane.b32.xlu0 %v2825, 32
        %v3272 = vpop.permute.xlu0 %3271
        %3273 = vrot.lane.b32.xlu0 %v2828, 32
        %v3274 = vpop.permute.xlu0 %3273
        %3275 = vrot.lane.b32.xlu0 %v2830, 32
        %v3276 = vpop.permute.xlu0 %3275
        %3277 = vrot.lane.b32.xlu0 %v2833, 32
        %v3278 = vpop.permute.xlu0 %3277
        %3279 = vrot.lane.b32.xlu0 %v2835, 32
        %v3280 = vpop.permute.xlu0 %3279
        %3281 = vrot.lane.b32.xlu0 %v2838, 32
        %v3282 = vpop.permute.xlu0 %3281
        %3283 = vrot.lane.b32.xlu0 %v2840, 32
        %v3284 = vpop.permute.xlu0 %3283
        %3285 = vrot.lane.b32.xlu0 %v2843, 32
        %v3286 = vpop.permute.xlu0 %3285
        %3287 = vrot.lane.b32.xlu0 %v2845, 32
        %v3288 = vpop.permute.xlu0 %3287
        %3289 = vrot.lane.b32.xlu0 %v2848, 32
        %v3290 = vpop.permute.xlu0 %3289
        %3291 = vrot.lane.b32.xlu0 %v2850, 32
        %v3292 = vpop.permute.xlu0 %3291
        %3293 = vrot.lane.b32.xlu0 %v2853, 32
        %v3294 = vpop.permute.xlu0 %3293
        %3295 = vrot.lane.b32.xlu0 %v2855, 32
        %v3296 = vpop.permute.xlu0 %3295
        %3297 = vrot.lane.b32.xlu0 %v2858, 32
        %v3298 = vpop.permute.xlu0 %3297
        %3299 = vrot.lane.b32.xlu0 %v2860, 32
        %v3300 = vpop.permute.xlu0 %3299
        %3301 = vrot.lane.b32.xlu0 %v2863, 32
        %v3302 = vpop.permute.xlu0 %3301
        %3303 = vrot.lane.b32.xlu0 %v2865, 32
        %v3304 = vpop.permute.xlu0 %3303
        %3305 = vrot.lane.b32.xlu0 %v2868, 32
        %v3306 = vpop.permute.xlu0 %3305
        %3307 = vrot.lane.b32.xlu0 %v2870, 32
        %v3308 = vpop.permute.xlu0 %3307
        %3309 = vrot.lane.b32.xlu0 %v2873, 32
        %v3310 = vpop.permute.xlu0 %3309
        %3311 = vrot.lane.b32.xlu0 %v2875, 32
        %v3312 = vpop.permute.xlu0 %3311
        %3313 = vrot.lane.b32.xlu0 %v2878, 32
        %v3314 = vpop.permute.xlu0 %3313
        %3315 = vrot.lane.b32.xlu0 %v2880, 32
        %v3316 = vpop.permute.xlu0 %3315
        %3317 = vrot.lane.b32.xlu0 %v2883, 32
        %v3318 = vpop.permute.xlu0 %3317
        %3319 = vrot.lane.b32.xlu0 %v2885, 32
        %v3320 = vpop.permute.xlu0 %3319
        %3321 = vrot.lane.b32.xlu0 %v3258, 32
        %v3322 = vpop.permute.xlu0 %3321
        %3323 = vrot.lane.b32.xlu0 %v3260, 32
        %v3324 = vpop.permute.xlu0 %3323
        %v3357 = vrot.slane %v2754, 2
        %v3358 = vrot.slane %v2682, 2
        %v3359 = vsel %vm842, %v3357, %v3358
        %v3360 = vrot.slane %v2772, 2
        %v3361 = vsel %vm842, %v3358, %v3360
        %3362 = vrot.lane.b32.xlu0 %v2989, 40
        %v3363 = vpop.permute.xlu0 %3362
        %3364 = vrot.lane.b32.xlu0 %v2991, 40
        %v3365 = vpop.permute.xlu0 %3364
        %3366 = vrot.lane.b32.xlu0 %v2994, 40
        %v3367 = vpop.permute.xlu0 %3366
        %3368 = vrot.lane.b32.xlu0 %v2996, 40
        %v3369 = vpop.permute.xlu0 %3368
        %3370 = vrot.lane.b32.xlu0 %v2999, 40
        %v3371 = vpop.permute.xlu0 %3370
        %3372 = vrot.lane.b32.xlu0 %v3001, 40
        %v3373 = vpop.permute.xlu0 %3372
        %3374 = vrot.lane.b32.xlu0 %v3004, 40
        %v3375 = vpop.permute.xlu0 %3374
        %3376 = vrot.lane.b32.xlu0 %v3006, 40
        %v3377 = vpop.permute.xlu0 %3376
        %3378 = vrot.lane.b32.xlu0 %v3009, 40
        %v3379 = vpop.permute.xlu0 %3378
        %3380 = vrot.lane.b32.xlu0 %v3011, 40
        %v3381 = vpop.permute.xlu0 %3380
        %3382 = vrot.lane.b32.xlu0 %v3014, 40
        %v3383 = vpop.permute.xlu0 %3382
        %3384 = vrot.lane.b32.xlu0 %v3016, 40
        %v3385 = vpop.permute.xlu0 %3384
        %3386 = vrot.lane.b32.xlu0 %v3019, 40
        %v3387 = vpop.permute.xlu0 %3386
        %3388 = vrot.lane.b32.xlu0 %v3021, 40
        %v3389 = vpop.permute.xlu0 %3388
        %3390 = vrot.lane.b32.xlu0 %v3024, 40
        %v3391 = vpop.permute.xlu0 %3390
        %3392 = vrot.lane.b32.xlu0 %v3026, 40
        %v3393 = vpop.permute.xlu0 %3392
        %3394 = vrot.lane.b32.xlu0 %v3029, 40
        %v3395 = vpop.permute.xlu0 %3394
        %3396 = vrot.lane.b32.xlu0 %v3031, 40
        %v3397 = vpop.permute.xlu0 %3396
        %3398 = vrot.lane.b32.xlu0 %v3034, 40
        %v3399 = vpop.permute.xlu0 %3398
        %3400 = vrot.lane.b32.xlu0 %v3036, 40
        %v3401 = vpop.permute.xlu0 %3400
        %3402 = vrot.lane.b32.xlu0 %v3039, 40
        %v3403 = vpop.permute.xlu0 %3402
        %3404 = vrot.lane.b32.xlu0 %v3041, 40
        %v3405 = vpop.permute.xlu0 %3404
        %3406 = vrot.lane.b32.xlu0 %v3044, 40
        %v3407 = vpop.permute.xlu0 %3406
        %3408 = vrot.lane.b32.xlu0 %v3046, 40
        %v3409 = vpop.permute.xlu0 %3408
        %3410 = vrot.lane.b32.xlu0 %v3049, 40
        %v3411 = vpop.permute.xlu0 %3410
        %3412 = vrot.lane.b32.xlu0 %v3051, 40
        %v3413 = vpop.permute.xlu0 %3412
        %3414 = vrot.lane.b32.xlu0 %v3054, 40
        %v3415 = vpop.permute.xlu0 %3414
        %3416 = vrot.lane.b32.xlu0 %v3056, 40
        %v3417 = vpop.permute.xlu0 %3416
        %3418 = vrot.lane.b32.xlu0 %v3059, 40
        %v3419 = vpop.permute.xlu0 %3418
        %3420 = vrot.lane.b32.xlu0 %v3061, 40
        %v3421 = vpop.permute.xlu0 %3420
        %3422 = vrot.lane.b32.xlu0 %v3359, 40
        %v3423 = vpop.permute.xlu0 %3422
        %3424 = vrot.lane.b32.xlu0 %v3361, 40
        %v3425 = vpop.permute.xlu0 %3424
        %3459 = vrot.lane.b32.xlu0 %v2740, 48
        %v3460 = vpop.permute.xlu0 %3459
        %3461 = vrot.lane.b32.xlu0 %v2640, 48
        %v3462 = vpop.permute.xlu0 %3461
        %3463 = vrot.lane.b32.xlu0 %v2741, 48
        %v3464 = vpop.permute.xlu0 %3463
        %3465 = vrot.lane.b32.xlu0 %v2643, 48
        %v3466 = vpop.permute.xlu0 %3465
        %3467 = vrot.lane.b32.xlu0 %v2742, 48
        %v3468 = vpop.permute.xlu0 %3467
        %3469 = vrot.lane.b32.xlu0 %v2646, 48
        %v3470 = vpop.permute.xlu0 %3469
        %3471 = vrot.lane.b32.xlu0 %v2743, 48
        %v3472 = vpop.permute.xlu0 %3471
        %3473 = vrot.lane.b32.xlu0 %v2649, 48
        %v3474 = vpop.permute.xlu0 %3473
        %3475 = vrot.lane.b32.xlu0 %v2744, 48
        %v3476 = vpop.permute.xlu0 %3475
        %3477 = vrot.lane.b32.xlu0 %v2652, 48
        %v3478 = vpop.permute.xlu0 %3477
        %3479 = vrot.lane.b32.xlu0 %v2745, 48
        %v3480 = vpop.permute.xlu0 %3479
        %3481 = vrot.lane.b32.xlu0 %v2655, 48
        %v3482 = vpop.permute.xlu0 %3481
        %3483 = vrot.lane.b32.xlu0 %v2746, 48
        %v3484 = vpop.permute.xlu0 %3483
        %3485 = vrot.lane.b32.xlu0 %v2658, 48
        %v3486 = vpop.permute.xlu0 %3485
        %3487 = vrot.lane.b32.xlu0 %v2747, 48
        %v3488 = vpop.permute.xlu0 %3487
        %3489 = vrot.lane.b32.xlu0 %v2661, 48
        %v3490 = vpop.permute.xlu0 %3489
        %3491 = vrot.lane.b32.xlu0 %v2748, 48
        %v3492 = vpop.permute.xlu0 %3491
        %3493 = vrot.lane.b32.xlu0 %v2664, 48
        %v3494 = vpop.permute.xlu0 %3493
        %3495 = vrot.lane.b32.xlu0 %v2749, 48
        %v3496 = vpop.permute.xlu0 %3495
        %3497 = vrot.lane.b32.xlu0 %v2667, 48
        %v3498 = vpop.permute.xlu0 %3497
        %3499 = vrot.lane.b32.xlu0 %v2750, 48
        %v3500 = vpop.permute.xlu0 %3499
        %3501 = vrot.lane.b32.xlu0 %v2670, 48
        %v3502 = vpop.permute.xlu0 %3501
        %3503 = vrot.lane.b32.xlu0 %v2751, 48
        %v3504 = vpop.permute.xlu0 %3503
        %3505 = vrot.lane.b32.xlu0 %v2673, 48
        %v3506 = vpop.permute.xlu0 %3505
        %3507 = vrot.lane.b32.xlu0 %v2752, 48
        %v3508 = vpop.permute.xlu0 %3507
        %3509 = vrot.lane.b32.xlu0 %v2676, 48
        %v3510 = vpop.permute.xlu0 %3509
        %3511 = vrot.lane.b32.xlu0 %v2753, 48
        %v3512 = vpop.permute.xlu0 %3511
        %3513 = vrot.lane.b32.xlu0 %v2679, 48
        %v3514 = vpop.permute.xlu0 %3513
        %3515 = vrot.lane.b32.xlu0 %v2754, 48
        %v3516 = vpop.permute.xlu0 %3515
        %3517 = vrot.lane.b32.xlu0 %v2682, 48
        %v3518 = vpop.permute.xlu0 %3517
        %3519 = vrot.lane.b32.xlu0 %v2755, 48
        %v3520 = vpop.permute.xlu0 %3519
        %3521 = vrot.lane.b32.xlu0 %v2685, 48
        %v3522 = vpop.permute.xlu0 %3521
        %v3556 = vrot.slane %v2755, 1
        %v3557 = vrot.slane %v2685, 1
        %v3558 = vsel %vm643, %v3556, %v3557
        %v3559 = vrot.slane %v2773, 1
        %v3560 = vsel %vm643, %v3557, %v3559
        %3561 = vrot.lane.b32.xlu0 %v2818, 56
        %v3562 = vpop.permute.xlu0 %3561
        %3563 = vrot.lane.b32.xlu0 %v2820, 56
        %v3564 = vpop.permute.xlu0 %3563
        %3565 = vrot.lane.b32.xlu0 %v2823, 56
        %v3566 = vpop.permute.xlu0 %3565
        %3567 = vrot.lane.b32.xlu0 %v2825, 56
        %v3568 = vpop.permute.xlu0 %3567
        %3569 = vrot.lane.b32.xlu0 %v2828, 56
        %v3570 = vpop.permute.xlu0 %3569
        %3571 = vrot.lane.b32.xlu0 %v2830, 56
        %v3572 = vpop.permute.xlu0 %3571
        %3573 = vrot.lane.b32.xlu0 %v2833, 56
        %v3574 = vpop.permute.xlu0 %3573
        %3575 = vrot.lane.b32.xlu0 %v2835, 56
        %v3576 = vpop.permute.xlu0 %3575
        %3577 = vrot.lane.b32.xlu0 %v2838, 56
        %v3578 = vpop.permute.xlu0 %3577
        %3579 = vrot.lane.b32.xlu0 %v2840, 56
        %v3580 = vpop.permute.xlu0 %3579
        %3581 = vrot.lane.b32.xlu0 %v2843, 56
        %v3582 = vpop.permute.xlu0 %3581
        %3583 = vrot.lane.b32.xlu0 %v2845, 56
        %v3584 = vpop.permute.xlu0 %3583
        %3585 = vrot.lane.b32.xlu0 %v2848, 56
        %v3586 = vpop.permute.xlu0 %3585
        %3587 = vrot.lane.b32.xlu0 %v2850, 56
        %v3588 = vpop.permute.xlu0 %3587
        %3589 = vrot.lane.b32.xlu0 %v2853, 56
        %v3590 = vpop.permute.xlu0 %3589
        %3591 = vrot.lane.b32.xlu0 %v2855, 56
        %v3592 = vpop.permute.xlu0 %3591
        %3593 = vrot.lane.b32.xlu0 %v2858, 56
        %v3594 = vpop.permute.xlu0 %3593
        %3595 = vrot.lane.b32.xlu0 %v2860, 56
        %v3596 = vpop.permute.xlu0 %3595
        %3597 = vrot.lane.b32.xlu0 %v2863, 56
        %v3598 = vpop.permute.xlu0 %3597
        %3599 = vrot.lane.b32.xlu0 %v2865, 56
        %v3600 = vpop.permute.xlu0 %3599
        %3601 = vrot.lane.b32.xlu0 %v2868, 56
        %v3602 = vpop.permute.xlu0 %3601
        %3603 = vrot.lane.b32.xlu0 %v2870, 56
        %v3604 = vpop.permute.xlu0 %3603
        %3605 = vrot.lane.b32.xlu0 %v2873, 56
        %v3606 = vpop.permute.xlu0 %3605
        %3607 = vrot.lane.b32.xlu0 %v2875, 56
        %v3608 = vpop.permute.xlu0 %3607
        %3609 = vrot.lane.b32.xlu0 %v2878, 56
        %v3610 = vpop.permute.xlu0 %3609
        %3611 = vrot.lane.b32.xlu0 %v2880, 56
        %v3612 = vpop.permute.xlu0 %3611
        %3613 = vrot.lane.b32.xlu0 %v2883, 56
        %v3614 = vpop.permute.xlu0 %3613
        %3615 = vrot.lane.b32.xlu0 %v2885, 56
        %v3616 = vpop.permute.xlu0 %3615
        %3617 = vrot.lane.b32.xlu0 %v3258, 56
        %v3618 = vpop.permute.xlu0 %3617
        %3619 = vrot.lane.b32.xlu0 %v3260, 56
        %v3620 = vpop.permute.xlu0 %3619
        %3621 = vrot.lane.b32.xlu0 %v3558, 56
        %v3622 = vpop.permute.xlu0 %3621
        %3623 = vrot.lane.b32.xlu0 %v3560, 56
        %v3624 = vpop.permute.xlu0 %3623
        %v3657 = vrot.slane %v2755, 2
        %v3658 = vrot.slane %v2685, 2
        %v3659 = vsel %vm842, %v3657, %v3658
        %v3660 = vrot.slane %v2773, 2
        %v3661 = vsel %vm842, %v3658, %v3660
        %3662 = vrot.lane.b32.xlu0 %v2994, 64
        %v3663 = vpop.permute.xlu0 %3662
        %3664 = vrot.lane.b32.xlu0 %v2996, 64
        %v3665 = vpop.permute.xlu0 %3664
        %3666 = vrot.lane.b32.xlu0 %v2999, 64
        %v3667 = vpop.permute.xlu0 %3666
        %3668 = vrot.lane.b32.xlu0 %v3001, 64
        %v3669 = vpop.permute.xlu0 %3668
        %3670 = vrot.lane.b32.xlu0 %v3004, 64
        %v3671 = vpop.permute.xlu0 %3670
        %3672 = vrot.lane.b32.xlu0 %v3006, 64
        %v3673 = vpop.permute.xlu0 %3672
        %3674 = vrot.lane.b32.xlu0 %v3009, 64
        %v3675 = vpop.permute.xlu0 %3674
        %3676 = vrot.lane.b32.xlu0 %v3011, 64
        %v3677 = vpop.permute.xlu0 %3676
        %3678 = vrot.lane.b32.xlu0 %v3014, 64
        %v3679 = vpop.permute.xlu0 %3678
        %3680 = vrot.lane.b32.xlu0 %v3016, 64
        %v3681 = vpop.permute.xlu0 %3680
        %3682 = vrot.lane.b32.xlu0 %v3019, 64
        %v3683 = vpop.permute.xlu0 %3682
        %3684 = vrot.lane.b32.xlu0 %v3021, 64
        %v3685 = vpop.permute.xlu0 %3684
        %3686 = vrot.lane.b32.xlu0 %v3024, 64
        %v3687 = vpop.permute.xlu0 %3686
        %3688 = vrot.lane.b32.xlu0 %v3026, 64
        %v3689 = vpop.permute.xlu0 %3688
        %3690 = vrot.lane.b32.xlu0 %v3029, 64
        %v3691 = vpop.permute.xlu0 %3690
        %3692 = vrot.lane.b32.xlu0 %v3031, 64
        %v3693 = vpop.permute.xlu0 %3692
        %3694 = vrot.lane.b32.xlu0 %v3034, 64
        %v3695 = vpop.permute.xlu0 %3694
        %3696 = vrot.lane.b32.xlu0 %v3036, 64
        %v3697 = vpop.permute.xlu0 %3696
        %3698 = vrot.lane.b32.xlu0 %v3039, 64
        %v3699 = vpop.permute.xlu0 %3698
        %3700 = vrot.lane.b32.xlu0 %v3041, 64
        %v3701 = vpop.permute.xlu0 %3700
        %3702 = vrot.lane.b32.xlu0 %v3044, 64
        %v3703 = vpop.permute.xlu0 %3702
        %3704 = vrot.lane.b32.xlu0 %v3046, 64
        %v3705 = vpop.permute.xlu0 %3704
        %3706 = vrot.lane.b32.xlu0 %v3049, 64
        %v3707 = vpop.permute.xlu0 %3706
        %3708 = vrot.lane.b32.xlu0 %v3051, 64
        %v3709 = vpop.permute.xlu0 %3708
        %3710 = vrot.lane.b32.xlu0 %v3054, 64
        %v3711 = vpop.permute.xlu0 %3710
        %3712 = vrot.lane.b32.xlu0 %v3056, 64
        %v3713 = vpop.permute.xlu0 %3712
        %3714 = vrot.lane.b32.xlu0 %v3059, 64
        %v3715 = vpop.permute.xlu0 %3714
        %3716 = vrot.lane.b32.xlu0 %v3061, 64
        %v3717 = vpop.permute.xlu0 %3716
        %3718 = vrot.lane.b32.xlu0 %v3359, 64
        %v3719 = vpop.permute.xlu0 %3718
        %3720 = vrot.lane.b32.xlu0 %v3361, 64
        %v3721 = vpop.permute.xlu0 %3720
        %3722 = vrot.lane.b32.xlu0 %v3659, 64
        %v3723 = vpop.permute.xlu0 %3722
        %3724 = vrot.lane.b32.xlu0 %v3661, 64
        %v3725 = vpop.permute.xlu0 %3724
        %v3758 = vsel %vm1750, %v2738, %v2887
        %v3759 = vsel %vm1750, %v2634, %v2889
        %v3760 = vsel %vm1750, %v2739, %v2891
        %v3761 = vsel %vm1750, %v2637, %v2893
        %v3762 = vsel %vm1750, %v2740, %v2895
        %v3763 = vsel %vm1750, %v2640, %v2897
        %v3764 = vsel %vm1750, %v2741, %v2899
        %v3765 = vsel %vm1750, %v2643, %v2901
        %v3766 = vsel %vm1750, %v2742, %v2903
        %v3767 = vsel %vm1750, %v2646, %v2905
        %v3768 = vsel %vm1750, %v2743, %v2907
        %v3769 = vsel %vm1750, %v2649, %v2909
        %v3770 = vsel %vm1750, %v2744, %v2911
        %v3771 = vsel %vm1750, %v2652, %v2913
        %v3772 = vsel %vm1750, %v2745, %v2915
        %v3773 = vsel %vm1750, %v2655, %v2917
        %v3774 = vsel %vm1750, %v2746, %v2919
        %v3775 = vsel %vm1750, %v2658, %v2921
        %v3776 = vsel %vm1750, %v2747, %v2923
        %v3777 = vsel %vm1750, %v2661, %v2925
        %v3778 = vsel %vm1750, %v2748, %v2927
        %v3779 = vsel %vm1750, %v2664, %v2929
        %v3780 = vsel %vm1750, %v2749, %v2931
        %v3781 = vsel %vm1750, %v2667, %v2933
        %v3782 = vsel %vm1750, %v2750, %v2935
        %v3783 = vsel %vm1750, %v2670, %v2937
        %v3784 = vsel %vm1750, %v2751, %v2939
        %v3785 = vsel %vm1750, %v2673, %v2941
        %v3786 = vsel %vm1750, %v2752, %v2943
        %v3787 = vsel %vm1750, %v2676, %v2945
        %v3788 = vsel %vm1750, %v2753, %v2947
        %v3789 = vsel %vm1750, %v2679, %v2949
        %v3790 = vsel %vm1824, %v3758, %v3063
        %v3791 = vsel %vm1824, %v3759, %v3065
        %v3792 = vsel %vm1824, %v3760, %v3067
        %v3793 = vsel %vm1824, %v3761, %v3069
        %v3794 = vsel %vm1824, %v3762, %v3071
        %v3795 = vsel %vm1824, %v3763, %v3073
        %v3796 = vsel %vm1824, %v3764, %v3075
        %v3797 = vsel %vm1824, %v3765, %v3077
        %v3798 = vsel %vm1824, %v3766, %v3079
        %v3799 = vsel %vm1824, %v3767, %v3081
        %v3800 = vsel %vm1824, %v3768, %v3083
        %v3801 = vsel %vm1824, %v3769, %v3085
        %v3802 = vsel %vm1824, %v3770, %v3087
        %v3803 = vsel %vm1824, %v3771, %v3089
        %v3804 = vsel %vm1824, %v3772, %v3091
        %v3805 = vsel %vm1824, %v3773, %v3093
        %v3806 = vsel %vm1824, %v3774, %v3095
        %v3807 = vsel %vm1824, %v3775, %v3097
        %v3808 = vsel %vm1824, %v3776, %v3099
        %v3809 = vsel %vm1824, %v3777, %v3101
        %v3810 = vsel %vm1824, %v3778, %v3103
        %v3811 = vsel %vm1824, %v3779, %v3105
        %v3812 = vsel %vm1824, %v3780, %v3107
        %v3813 = vsel %vm1824, %v3781, %v3109
        %v3814 = vsel %vm1824, %v3782, %v3111
        %v3815 = vsel %vm1824, %v3783, %v3113
        %v3816 = vsel %vm1824, %v3784, %v3115
        %v3817 = vsel %vm1824, %v3785, %v3117
        %v3818 = vsel %vm1824, %v3786, %v3119
        %v3819 = vsel %vm1824, %v3787, %v3121
        %v3820 = vsel %vm1824, %v3788, %v3123
        %v3821 = vsel %vm1824, %v3789, %v3125
        %v3822 = vsel %vm1898, %v3790, %v3160
        %v3823 = vsel %vm1898, %v3791, %v3162
        %v3824 = vsel %vm1898, %v3792, %v3164
        %v3825 = vsel %vm1898, %v3793, %v3166
        %v3826 = vsel %vm1898, %v3794, %v3168
        %v3827 = vsel %vm1898, %v3795, %v3170
        %v3828 = vsel %vm1898, %v3796, %v3172
        %v3829 = vsel %vm1898, %v3797, %v3174
        %v3830 = vsel %vm1898, %v3798, %v3176
        %v3831 = vsel %vm1898, %v3799, %v3178
        %v3832 = vsel %vm1898, %v3800, %v3180
        %v3833 = vsel %vm1898, %v3801, %v3182
        %v3834 = vsel %vm1898, %v3802, %v3184
        %v3835 = vsel %vm1898, %v3803, %v3186
        %v3836 = vsel %vm1898, %v3804, %v3188
        %v3837 = vsel %vm1898, %v3805, %v3190
        %v3838 = vsel %vm1898, %v3806, %v3192
        %v3839 = vsel %vm1898, %v3807, %v3194
        %v3840 = vsel %vm1898, %v3808, %v3196
        %v3841 = vsel %vm1898, %v3809, %v3198
        %v3842 = vsel %vm1898, %v3810, %v3200
        %v3843 = vsel %vm1898, %v3811, %v3202
        %v3844 = vsel %vm1898, %v3812, %v3204
        %v3845 = vsel %vm1898, %v3813, %v3206
        %v3846 = vsel %vm1898, %v3814, %v3208
        %v3847 = vsel %vm1898, %v3815, %v3210
        %v3848 = vsel %vm1898, %v3816, %v3212
        %v3849 = vsel %vm1898, %v3817, %v3214
        %v3850 = vsel %vm1898, %v3818, %v3216
        %v3851 = vsel %vm1898, %v3819, %v3218
        %v3852 = vsel %vm1898, %v3820, %v3220
        %v3853 = vsel %vm1898, %v3821, %v3222
        %v3854 = vsel %vm1972, %v3822, %v3262
        %v3855 = vsel %vm1972, %v3823, %v3264
        %v3856 = vsel %vm1972, %v3824, %v3266
        %v3857 = vsel %vm1972, %v3825, %v3268
        %v3858 = vsel %vm1972, %v3826, %v3270
        %v3859 = vsel %vm1972, %v3827, %v3272
        %v3860 = vsel %vm1972, %v3828, %v3274
        %v3861 = vsel %vm1972, %v3829, %v3276
        %v3862 = vsel %vm1972, %v3830, %v3278
        %v3863 = vsel %vm1972, %v3831, %v3280
        %v3864 = vsel %vm1972, %v3832, %v3282
        %v3865 = vsel %vm1972, %v3833, %v3284
        %v3866 = vsel %vm1972, %v3834, %v3286
        %v3867 = vsel %vm1972, %v3835, %v3288
        %v3868 = vsel %vm1972, %v3836, %v3290
        %v3869 = vsel %vm1972, %v3837, %v3292
        %v3870 = vsel %vm1972, %v3838, %v3294
        %v3871 = vsel %vm1972, %v3839, %v3296
        %v3872 = vsel %vm1972, %v3840, %v3298
        %v3873 = vsel %vm1972, %v3841, %v3300
        %v3874 = vsel %vm1972, %v3842, %v3302
        %v3875 = vsel %vm1972, %v3843, %v3304
        %v3876 = vsel %vm1972, %v3844, %v3306
        %v3877 = vsel %vm1972, %v3845, %v3308
        %v3878 = vsel %vm1972, %v3846, %v3310
        %v3879 = vsel %vm1972, %v3847, %v3312
        %v3880 = vsel %vm1972, %v3848, %v3314
        %v3881 = vsel %vm1972, %v3849, %v3316
        %v3882 = vsel %vm1972, %v3850, %v3318
        %v3883 = vsel %vm1972, %v3851, %v3320
        %v3884 = vsel %vm1972, %v3852, %v3322
        %v3885 = vsel %vm1972, %v3853, %v3324
        %vm3886 = vcmask 326656
        %v3887 = vsel %vm3886, %v3854, %v3363
        %v3888 = vsel %vm3886, %v3855, %v3365
        %v3889 = vsel %vm3886, %v3856, %v3367
        %v3890 = vsel %vm3886, %v3857, %v3369
        %v3891 = vsel %vm3886, %v3858, %v3371
        %v3892 = vsel %vm3886, %v3859, %v3373
        %v3893 = vsel %vm3886, %v3860, %v3375
        %v3894 = vsel %vm3886, %v3861, %v3377
        %v3895 = vsel %vm3886, %v3862, %v3379
        %v3896 = vsel %vm3886, %v3863, %v3381
        %v3897 = vsel %vm3886, %v3864, %v3383
        %v3898 = vsel %vm3886, %v3865, %v3385
        %v3899 = vsel %vm3886, %v3866, %v3387
        %v3900 = vsel %vm3886, %v3867, %v3389
        %v3901 = vsel %vm3886, %v3868, %v3391
        %v3902 = vsel %vm3886, %v3869, %v3393
        %v3903 = vsel %vm3886, %v3870, %v3395
        %v3904 = vsel %vm3886, %v3871, %v3397
        %v3905 = vsel %vm3886, %v3872, %v3399
        %v3906 = vsel %vm3886, %v3873, %v3401
        %v3907 = vsel %vm3886, %v3874, %v3403
        %v3908 = vsel %vm3886, %v3875, %v3405
        %v3909 = vsel %vm3886, %v3876, %v3407
        %v3910 = vsel %vm3886, %v3877, %v3409
        %v3911 = vsel %vm3886, %v3878, %v3411
        %v3912 = vsel %vm3886, %v3879, %v3413
        %v3913 = vsel %vm3886, %v3880, %v3415
        %v3914 = vsel %vm3886, %v3881, %v3417
        %v3915 = vsel %vm3886, %v3882, %v3419
        %v3916 = vsel %vm3886, %v3883, %v3421
        %v3917 = vsel %vm3886, %v3884, %v3423
        %v3918 = vsel %vm3886, %v3885, %v3425
        %vm3919 = vcmask 392192
        %v3920 = vsel %vm3919, %v3887, %v3460
        %v3921 = vsel %vm3919, %v3888, %v3462
        %v3922 = vsel %vm3919, %v3889, %v3464
        %v3923 = vsel %vm3919, %v3890, %v3466
        %v3924 = vsel %vm3919, %v3891, %v3468
        %v3925 = vsel %vm3919, %v3892, %v3470
        %v3926 = vsel %vm3919, %v3893, %v3472
        %v3927 = vsel %vm3919, %v3894, %v3474
        %v3928 = vsel %vm3919, %v3895, %v3476
        %v3929 = vsel %vm3919, %v3896, %v3478
        %v3930 = vsel %vm3919, %v3897, %v3480
        %v3931 = vsel %vm3919, %v3898, %v3482
        %v3932 = vsel %vm3919, %v3899, %v3484
        %v3933 = vsel %vm3919, %v3900, %v3486
        %v3934 = vsel %vm3919, %v3901, %v3488
        %v3935 = vsel %vm3919, %v3902, %v3490
        %v3936 = vsel %vm3919, %v3903, %v3492
        %v3937 = vsel %vm3919, %v3904, %v3494
        %v3938 = vsel %vm3919, %v3905, %v3496
        %v3939 = vsel %vm3919, %v3906, %v3498
        %v3940 = vsel %vm3919, %v3907, %v3500
        %v3941 = vsel %vm3919, %v3908, %v3502
        %v3942 = vsel %vm3919, %v3909, %v3504
        %v3943 = vsel %vm3919, %v3910, %v3506
        %v3944 = vsel %vm3919, %v3911, %v3508
        %v3945 = vsel %vm3919, %v3912, %v3510
        %v3946 = vsel %vm3919, %v3913, %v3512
        %v3947 = vsel %vm3919, %v3914, %v3514
        %v3948 = vsel %vm3919, %v3915, %v3516
        %v3949 = vsel %vm3919, %v3916, %v3518
        %v3950 = vsel %vm3919, %v3917, %v3520
        %v3951 = vsel %vm3919, %v3918, %v3522
        %vm3952 = vcmask 457728
        %v3953 = vsel %vm3952, %v3920, %v3562
        %v3954 = vsel %vm3952, %v3921, %v3564
        %v3955 = vsel %vm3952, %v3922, %v3566
        %v3956 = vsel %vm3952, %v3923, %v3568
        %v3957 = vsel %vm3952, %v3924, %v3570
        %v3958 = vsel %vm3952, %v3925, %v3572
        %v3959 = vsel %vm3952, %v3926, %v3574
        %v3960 = vsel %vm3952, %v3927, %v3576
        %v3961 = vsel %vm3952, %v3928, %v3578
        %v3962 = vsel %vm3952, %v3929, %v3580
        %v3963 = vsel %vm3952, %v3930, %v3582
        %v3964 = vsel %vm3952, %v3931, %v3584
        %v3965 = vsel %vm3952, %v3932, %v3586
        %v3966 = vsel %vm3952, %v3933, %v3588
        %v3967 = vsel %vm3952, %v3934, %v3590
        %v3968 = vsel %vm3952, %v3935, %v3592
        %v3969 = vsel %vm3952, %v3936, %v3594
        %v3970 = vsel %vm3952, %v3937, %v3596
        %v3971 = vsel %vm3952, %v3938, %v3598
        %v3972 = vsel %vm3952, %v3939, %v3600
        %v3973 = vsel %vm3952, %v3940, %v3602
        %v3974 = vsel %vm3952, %v3941, %v3604
        %v3975 = vsel %vm3952, %v3942, %v3606
        %v3976 = vsel %vm3952, %v3943, %v3608
        %v3977 = vsel %vm3952, %v3944, %v3610
        %v3978 = vsel %vm3952, %v3945, %v3612
        %v3979 = vsel %vm3952, %v3946, %v3614
        %v3980 = vsel %vm3952, %v3947, %v3616
        %v3981 = vsel %vm3952, %v3948, %v3618
        %v3982 = vsel %vm3952, %v3949, %v3620
        %v3983 = vsel %vm3952, %v3950, %v3622
        %v3984 = vsel %vm3952, %v3951, %v3624
        %vm3985 = vcmask 523264
        %v3986 = vsel %vm3985, %v3953, %v3663
        %v3987 = vsel %vm3985, %v3954, %v3665
        %v3988 = vsel %vm3985, %v3955, %v3667
        %v3989 = vsel %vm3985, %v3956, %v3669
        %v3990 = vsel %vm3985, %v3957, %v3671
        %v3991 = vsel %vm3985, %v3958, %v3673
        %v3992 = vsel %vm3985, %v3959, %v3675
        %v3993 = vsel %vm3985, %v3960, %v3677
        %v3994 = vsel %vm3985, %v3961, %v3679
        %v3995 = vsel %vm3985, %v3962, %v3681
        %v3996 = vsel %vm3985, %v3963, %v3683
        %v3997 = vsel %vm3985, %v3964, %v3685
        %v3998 = vsel %vm3985, %v3965, %v3687
        %v3999 = vsel %vm3985, %v3966, %v3689
        %v4000 = vsel %vm3985, %v3967, %v3691
        %v4001 = vsel %vm3985, %v3968, %v3693
        %v4002 = vsel %vm3985, %v3969, %v3695
        %v4003 = vsel %vm3985, %v3970, %v3697
        %v4004 = vsel %vm3985, %v3971, %v3699
        %v4005 = vsel %vm3985, %v3972, %v3701
        %v4006 = vsel %vm3985, %v3973, %v3703
        %v4007 = vsel %vm3985, %v3974, %v3705
        %v4008 = vsel %vm3985, %v3975, %v3707
        %v4009 = vsel %vm3985, %v3976, %v3709
        %v4010 = vsel %vm3985, %v3977, %v3711
        %v4011 = vsel %vm3985, %v3978, %v3713
        %v4012 = vsel %vm3985, %v3979, %v3715
        %v4013 = vsel %vm3985, %v3980, %v3717
        %v4014 = vsel %vm3985, %v3981, %v3719
        %v4015 = vsel %vm3985, %v3982, %v3721
        %v4016 = vsel %vm3985, %v3983, %v3723
        %v4017 = vsel %vm3985, %v3984, %v3725
        %v4018 = vld [vmem:[%s3] sm:$0xff]
        %v4019 = vld [vmem:[%s3 + $0x8] sm:$0xff]
        %v4020 = vld [vmem:[%s3 + $0x10] sm:$0xff]
        %v4021 = vld [vmem:[%s3 + $0x18] sm:$0xff]
        %v4022 = vld [vmem:[%s3 + $0x20] sm:$0xff]
        %v4023 = vld [vmem:[%s3 + $0x28] sm:$0xff]
        %v4024 = vld [vmem:[%s3 + $0x30] sm:$0xff]
        %v4025 = vld [vmem:[%s3 + $0x38] sm:$0xff]
        %v4026 = vld [vmem:[%s3 + $0x40] sm:$0xff]
        %vm4027 = vcmask 588800
        %v4029 = vsel %vm4027, %v3986, 0
        %v4032 = vsel %vm4027, %v3987, 0
        %v4035 = vsel %vm4027, %v3988, 0
        %v4038 = vsel %vm4027, %v3989, 0
        %v4041 = vsel %vm4027, %v3990, 0
        %v4044 = vsel %vm4027, %v3991, 0
        %v4047 = vsel %vm4027, %v3992, 0
        %v4050 = vsel %vm4027, %v3993, 0
        %v4053 = vsel %vm4027, %v3994, 0
        %v4056 = vsel %vm4027, %v3995, 0
        %v4059 = vsel %vm4027, %v3996, 0
        %v4062 = vsel %vm4027, %v3997, 0
        %v4065 = vsel %vm4027, %v3998, 0
        %v4068 = vsel %vm4027, %v3999, 0
        %v4071 = vsel %vm4027, %v4000, 0
        %v4074 = vsel %vm4027, %v4001, 0
        %v4077 = vsel %vm4027, %v4002, 0
        %v4080 = vsel %vm4027, %v4003, 0
        %v4083 = vsel %vm4027, %v4004, 0
        %v4086 = vsel %vm4027, %v4005, 0
        %v4089 = vsel %vm4027, %v4006, 0
        %v4092 = vsel %vm4027, %v4007, 0
        %v4095 = vsel %vm4027, %v4008, 0
        %v4098 = vsel %vm4027, %v4009, 0
        %v4101 = vsel %vm4027, %v4010, 0
        %v4104 = vsel %vm4027, %v4011, 0
        %v4107 = vsel %vm4027, %v4012, 0
        %v4110 = vsel %vm4027, %v4013, 0
        %v4113 = vsel %vm4027, %v4014, 0
        %v4116 = vsel %vm4027, %v4015, 0
        %v4119 = vsel %vm4027, %v4016, 0
        %v4122 = vsel %vm4027, %v4017, 0
        %4124 = vmatprep.subr.mxu0 0.0
        %4125 = vmatpush1.msra.mxu0 0.0
        %4126 = vmatprep.subr.mxu0 0.0
        %4127 = vmatpush1.msra.mxu0 0.0
        %4128 = vmatprep.subr.mxu0 0.0
        %4129 = vmatpush1.msra.mxu0 0.0
        %4130 = vmatprep.subr.mxu0 0.0
        %4131 = vmatpush1.msra.mxu0 0.0
        %4132 = vmatprep.subr.mxu0 0.0
        %4133 = vmatpush1.msra.mxu0 0.0
        %4134 = vmatprep.subr.mxu0 0.0
        %4135 = vmatpush1.msra.mxu0 0.0
        %4136 = vmatprep.subr.mxu0 0.0
        %4137 = vmatpush1.msra.mxu0 0.0
        %4138 = vmatprep.subr.mxu0 0.0
        %4139 = vmatpush1.msra.mxu0 %v4026
        %4140 = vmatprep.subr.mxu0 0.0
        %4141 = vmatpush1.msra.mxu0 %v4025
        %4142 = vmatprep.subr.mxu0 0.0
        %4143 = vmatpush1.msra.mxu0 %v4024
        %4144 = vmatprep.subr.mxu0 0.0
        %4145 = vmatpush1.msra.mxu0 %v4023
        %4146 = vmatprep.subr.mxu0 0.0
        %4147 = vmatpush1.msra.mxu0 %v4022
        %4148 = vmatprep.subr.mxu0 0.0
        %4149 = vmatpush1.msra.mxu0 %v4021
        %4150 = vmatprep.subr.mxu0 0.0
        %4151 = vmatpush1.msra.mxu0 %v4020
        %4152 = vmatprep.subr.mxu0 0.0
        %4153 = vmatpush1.msra.mxu0 %v4019
        %4154 = vmatprep.subr.mxu0 0.0
        %4155 = vmatpush1.msra.mxu0 %v4018
        %4156 = vmatprep.subr.mxu0 0.0
        %4157 = vmatpush2.msra.mxu0 0.0
        %4158 = vmatprep.subr.mxu0 0.0
        %4159 = vmatpush2.msra.mxu0 0.0
        %4160 = vmatprep.subr.mxu0 0.0
        %4161 = vmatpush2.msra.mxu0 0.0
        %4162 = vmatprep.subr.mxu0 0.0
        %4163 = vmatpush2.msra.mxu0 0.0
        %4164 = vmatprep.subr.mxu0 0.0
        %4165 = vmatpush2.msra.mxu0 0.0
        %4166 = vmatprep.subr.mxu0 0.0
        %4167 = vmatpush2.msra.mxu0 0.0
        %4168 = vmatprep.subr.mxu0 0.0
        %4169 = vmatpush2.msra.mxu0 0.0
        %4170 = vmatprep.subr.mxu0 0.0
        %4171 = vmatpush2.msra.mxu0 0.0
        %4172 = vmatprep.subr.mxu0 0.0
        %4173 = vmatpush2.msra.mxu0 0.0
        %4174 = vmatprep.subr.mxu0 0.0
        %4175 = vmatpush2.msra.mxu0 0.0
        %4176 = vmatprep.subr.mxu0 0.0
        %4177 = vmatpush2.msra.mxu0 0.0
        %4178 = vmatprep.subr.mxu0 0.0
        %4179 = vmatpush2.msra.mxu0 0.0
        %4180 = vmatprep.subr.mxu0 0.0
        %4181 = vmatpush2.msra.mxu0 0.0
        %4182 = vmatprep.subr.mxu0 0.0
        %4183 = vmatpush2.msra.mxu0 0.0
        %4184 = vmatprep.subr.mxu0 0.0
        %4185 = vmatpush2.msra.mxu0 0.0
        %4186 = vmatprep.subr.mxu0 0.0
        %4187 = vmatpush2.msra.mxu0 0.0
        %4188 = vmatprep.mubr.f32.mxu0 0.0
        %4189 = vmatmul.mubr.f32.gmra.mxu0 %v4029
        %v4190 = vpop.f32.mrf.mxu0
        %v4191 = vadd.f32 0.0, %v4190
        %v4192 = vpop.f32.mrf.mxu0
        %4193 = vmatprep.mubr.f32.mxu0 0.0
        %4194 = vmatmul.mubr.f32.gmra.mxu0 %v4032
        %v4195 = vpop.f32.mrf.mxu0
        %v4196 = vadd.f32 0.0, %v4195
        %v4197 = vpop.f32.mrf.mxu0
        %4198 = vmatprep.mubr.f32.mxu0 0.0
        %4199 = vmatmul.mubr.f32.gmra.mxu0 %v4035
        %v4200 = vpop.f32.mrf.mxu0
        %v4201 = vadd.f32 0.0, %v4200
        %v4202 = vpop.f32.mrf.mxu0
        %4203 = vmatprep.mubr.f32.mxu0 0.0
        %4204 = vmatmul.mubr.f32.gmra.mxu0 %v4038
        %v4205 = vpop.f32.mrf.mxu0
        %v4206 = vadd.f32 0.0, %v4205
        %v4207 = vpop.f32.mrf.mxu0
        %4208 = vmatprep.mubr.f32.mxu0 0.0
        %4209 = vmatmul.mubr.f32.gmra.mxu0 %v4041
        %v4210 = vpop.f32.mrf.mxu0
        %v4211 = vadd.f32 0.0, %v4210
        %v4212 = vpop.f32.mrf.mxu0
        %4213 = vmatprep.mubr.f32.mxu0 0.0
        %4214 = vmatmul.mubr.f32.gmra.mxu0 %v4044
        %v4215 = vpop.f32.mrf.mxu0
        %v4216 = vadd.f32 0.0, %v4215
        %v4217 = vpop.f32.mrf.mxu0
        %4218 = vmatprep.mubr.f32.mxu0 0.0
        %4219 = vmatmul.mubr.f32.gmra.mxu0 %v4047
        %v4220 = vpop.f32.mrf.mxu0
        %v4221 = vadd.f32 0.0, %v4220
        %v4222 = vpop.f32.mrf.mxu0
        %4223 = vmatprep.mubr.f32.mxu0 0.0
        %4224 = vmatmul.mubr.f32.gmra.mxu0 %v4050
        %v4225 = vpop.f32.mrf.mxu0
        %v4226 = vadd.f32 0.0, %v4225
        %v4227 = vpop.f32.mrf.mxu0
        %4228 = vmatprep.mubr.f32.mxu0 0.0
        %4229 = vmatmul.mubr.f32.gmra.mxu0 %v4053
        %v4230 = vpop.f32.mrf.mxu0
        %v4231 = vadd.f32 0.0, %v4230
        %v4232 = vpop.f32.mrf.mxu0
        %4233 = vmatprep.mubr.f32.mxu0 0.0
        %4234 = vmatmul.mubr.f32.gmra.mxu0 %v4056
        %v4235 = vpop.f32.mrf.mxu0
        %v4236 = vadd.f32 0.0, %v4235
        %v4237 = vpop.f32.mrf.mxu0
        %4238 = vmatprep.mubr.f32.mxu0 0.0
        %4239 = vmatmul.mubr.f32.gmra.mxu0 %v4059
        %v4240 = vpop.f32.mrf.mxu0
        %v4241 = vadd.f32 0.0, %v4240
        %v4242 = vpop.f32.mrf.mxu0
        %4243 = vmatprep.mubr.f32.mxu0 0.0
        %4244 = vmatmul.mubr.f32.gmra.mxu0 %v4062
        %v4245 = vpop.f32.mrf.mxu0
        %v4246 = vadd.f32 0.0, %v4245
        %v4247 = vpop.f32.mrf.mxu0
        %4248 = vmatprep.mubr.f32.mxu0 0.0
        %4249 = vmatmul.mubr.f32.gmra.mxu0 %v4065
        %v4250 = vpop.f32.mrf.mxu0
        %v4251 = vadd.f32 0.0, %v4250
        %v4252 = vpop.f32.mrf.mxu0
        %4253 = vmatprep.mubr.f32.mxu0 0.0
        %4254 = vmatmul.mubr.f32.gmra.mxu0 %v4068
        %v4255 = vpop.f32.mrf.mxu0
        %v4256 = vadd.f32 0.0, %v4255
        %v4257 = vpop.f32.mrf.mxu0
        %4258 = vmatprep.mubr.f32.mxu0 0.0
        %4259 = vmatmul.mubr.f32.gmra.mxu0 %v4071
        %v4260 = vpop.f32.mrf.mxu0
        %v4261 = vadd.f32 0.0, %v4260
        %v4262 = vpop.f32.mrf.mxu0
        %4263 = vmatprep.mubr.f32.mxu0 0.0
        %4264 = vmatmul.mubr.f32.gmra.mxu0 %v4074
        %v4265 = vpop.f32.mrf.mxu0
        %v4266 = vadd.f32 0.0, %v4265
        %v4267 = vpop.f32.mrf.mxu0
        %4268 = vmatprep.mubr.f32.mxu0 0.0
        %4269 = vmatmul.mubr.f32.gmra.mxu0 %v4077
        %v4270 = vpop.f32.mrf.mxu0
        %v4271 = vadd.f32 0.0, %v4270
        %v4272 = vpop.f32.mrf.mxu0
        %4273 = vmatprep.mubr.f32.mxu0 0.0
        %4274 = vmatmul.mubr.f32.gmra.mxu0 %v4080
        %v4275 = vpop.f32.mrf.mxu0
        %v4276 = vadd.f32 0.0, %v4275
        %v4277 = vpop.f32.mrf.mxu0
        %4278 = vmatprep.mubr.f32.mxu0 0.0
        %4279 = vmatmul.mubr.f32.gmra.mxu0 %v4083
        %v4280 = vpop.f32.mrf.mxu0
        %v4281 = vadd.f32 0.0, %v4280
        %v4282 = vpop.f32.mrf.mxu0
        %4283 = vmatprep.mubr.f32.mxu0 0.0
        %4284 = vmatmul.mubr.f32.gmra.mxu0 %v4086
        %v4285 = vpop.f32.mrf.mxu0
        %v4286 = vadd.f32 0.0, %v4285
        %v4287 = vpop.f32.mrf.mxu0
        %4288 = vmatprep.mubr.f32.mxu0 0.0
        %4289 = vmatmul.mubr.f32.gmra.mxu0 %v4089
        %v4290 = vpop.f32.mrf.mxu0
        %v4291 = vadd.f32 0.0, %v4290
        %v4292 = vpop.f32.mrf.mxu0
        %4293 = vmatprep.mubr.f32.mxu0 0.0
        %4294 = vmatmul.mubr.f32.gmra.mxu0 %v4092
        %v4295 = vpop.f32.mrf.mxu0
        %v4296 = vadd.f32 0.0, %v4295
        %v4297 = vpop.f32.mrf.mxu0
        %4298 = vmatprep.mubr.f32.mxu0 0.0
        %4299 = vmatmul.mubr.f32.gmra.mxu0 %v4095
        %v4300 = vpop.f32.mrf.mxu0
        %v4301 = vadd.f32 0.0, %v4300
        %v4302 = vpop.f32.mrf.mxu0
        %4303 = vmatprep.mubr.f32.mxu0 0.0
        %4304 = vmatmul.mubr.f32.gmra.mxu0 %v4098
        %v4305 = vpop.f32.mrf.mxu0
        %v4306 = vadd.f32 0.0, %v4305
        %v4307 = vpop.f32.mrf.mxu0
        %4308 = vmatprep.mubr.f32.mxu0 0.0
        %4309 = vmatmul.mubr.f32.gmra.mxu0 %v4101
        %v4310 = vpop.f32.mrf.mxu0
        %v4311 = vadd.f32 0.0, %v4310
        %v4312 = vpop.f32.mrf.mxu0
        %4313 = vmatprep.mubr.f32.mxu0 0.0
        %4314 = vmatmul.mubr.f32.gmra.mxu0 %v4104
        %v4315 = vpop.f32.mrf.mxu0
        %v4316 = vadd.f32 0.0, %v4315
        %v4317 = vpop.f32.mrf.mxu0
        %4318 = vmatprep.mubr.f32.mxu0 0.0
        %4319 = vmatmul.mubr.f32.gmra.mxu0 %v4107
        %v4320 = vpop.f32.mrf.mxu0
        %v4321 = vadd.f32 0.0, %v4320
        %v4322 = vpop.f32.mrf.mxu0
        %4323 = vmatprep.mubr.f32.mxu0 0.0
        %4324 = vmatmul.mubr.f32.gmra.mxu0 %v4110
        %v4325 = vpop.f32.mrf.mxu0
        %v4326 = vadd.f32 0.0, %v4325
        %v4327 = vpop.f32.mrf.mxu0
        %4328 = vmatprep.mubr.f32.mxu0 0.0
        %4329 = vmatmul.mubr.f32.gmra.mxu0 %v4113
        %v4330 = vpop.f32.mrf.mxu0
        %v4331 = vadd.f32 0.0, %v4330
        %v4332 = vpop.f32.mrf.mxu0
        %4333 = vmatprep.mubr.f32.mxu0 0.0
        %4334 = vmatmul.mubr.f32.gmra.mxu0 %v4116
        %v4335 = vpop.f32.mrf.mxu0
        %v4336 = vadd.f32 0.0, %v4335
        %v4337 = vpop.f32.mrf.mxu0
        %4338 = vmatprep.mubr.f32.mxu0 0.0
        %4339 = vmatmul.mubr.f32.gmra.mxu0 %v4119
        %v4340 = vpop.f32.mrf.mxu0
        %v4341 = vadd.f32 0.0, %v4340
        %v4342 = vpop.f32.mrf.mxu0
        %4343 = vmatprep.mubr.f32.mxu0 0.0
        %4344 = vmatmul.mubr.f32.gmra.mxu0 %v4122
        %v4345 = vpop.f32.mrf.mxu0
        %v4346 = vadd.f32 0.0, %v4345
        %v4347 = vpop.f32.mrf.mxu0
        %4348 = vdwg.mxu0
        %v4349 = vld [vmem:[%s4] sm:$0x1]
        %v4351 = vlaneseq
        %v4352 = vshrl.u32 %v4351, 7
        %v4353 = vsub.s32 0, %v4352
        %v4354 = vrot.slane %v4349, %v4353
        %v4356 = vadd.f32 %v4191, %v4354
        %v4357 = vadd.f32 %v4196, %v4354
        %v4358 = vadd.f32 %v4201, %v4354
        %v4359 = vadd.f32 %v4206, %v4354
        %v4360 = vadd.f32 %v4211, %v4354
        %v4361 = vadd.f32 %v4216, %v4354
        %v4362 = vadd.f32 %v4221, %v4354
        %v4363 = vadd.f32 %v4226, %v4354
        %v4364 = vadd.f32 %v4231, %v4354
        %v4365 = vadd.f32 %v4236, %v4354
        %v4366 = vadd.f32 %v4241, %v4354
        %v4367 = vadd.f32 %v4246, %v4354
        %v4368 = vadd.f32 %v4251, %v4354
        %v4369 = vadd.f32 %v4256, %v4354
        %v4370 = vadd.f32 %v4261, %v4354
        %v4371 = vadd.f32 %v4266, %v4354
        %v4372 = vadd.f32 %v4271, %v4354
        %v4373 = vadd.f32 %v4276, %v4354
        %v4374 = vadd.f32 %v4281, %v4354
        %v4375 = vadd.f32 %v4286, %v4354
        %v4376 = vadd.f32 %v4291, %v4354
        %v4377 = vadd.f32 %v4296, %v4354
        %v4378 = vadd.f32 %v4301, %v4354
        %v4379 = vadd.f32 %v4306, %v4354
        %v4380 = vadd.f32 %v4311, %v4354
        %v4381 = vadd.f32 %v4316, %v4354
        %v4382 = vadd.f32 %v4321, %v4354
        %v4383 = vadd.f32 %v4326, %v4354
        %v4384 = vadd.f32 %v4331, %v4354
        %v4385 = vadd.f32 %v4336, %v4354
        %v4386 = vadd.f32 %v4341, %v4354
        %v4387 = vadd.f32 %v4346, %v4354
        %v4388 = vld [vmem:[%s5] sm:$0xf]
        %v4390 = vsel %vm1713, %v294, 0
        %v4393 = vsel %vm1713, %v295, 0
        %v4396 = vsel %vm1713, %v296, 0
        %v4399 = vsel %vm1713, %v297, 0
        %v4402 = vsel %vm1713, %v298, 0
        %v4405 = vsel %vm1713, %v299, 0
        %v4408 = vsel %vm1713, %v300, 0
        %v4411 = vsel %vm1713, %v301, 0
        %v4414 = vsel %vm1713, %v302, 0
        %v4417 = vsel %vm1713, %v303, 0
        %v4420 = vsel %vm1713, %v304, 0
        %v4423 = vsel %vm1713, %v305, 0
        %v4426 = vsel %vm1713, %v306, 0
        %v4429 = vsel %vm1713, %v307, 0
        %v4432 = vsel %vm1713, %v308, 0
        %v4435 = vsel %vm1713, %v309, 0
        %v4438 = vsel %vm1713, %v310, 0
        %v4441 = vsel %vm1713, %v311, 0
        %v4444 = vsel %vm1713, %v312, 0
        %v4447 = vsel %vm1713, %v313, 0
        %v4450 = vsel %vm1713, %v314, 0
        %v4453 = vsel %vm1713, %v315, 0
        %v4456 = vsel %vm1713, %v316, 0
        %v4459 = vsel %vm1713, %v317, 0
        %v4462 = vsel %vm1713, %v318, 0
        %v4465 = vsel %vm1713, %v319, 0
        %v4468 = vsel %vm1713, %v320, 0
        %v4471 = vsel %vm1713, %v321, 0
        %v4474 = vsel %vm1713, %v322, 0
        %v4477 = vsel %vm1713, %v323, 0
        %v4480 = vsel %vm1713, %v324, 0
        %v4483 = vsel %vm1713, %v325, 0
        %v4486 = vsel %vm2123, %v4388, 0
        %4488 = vmatprep.subr.mxu0 0.0
        %4489 = vmatpush1.msra.mxu0 0.0
        %4490 = vmatprep.subr.mxu0 0.0
        %4491 = vmatpush1.msra.mxu0 0.0
        %4492 = vmatprep.subr.mxu0 0.0
        %4493 = vmatpush1.msra.mxu0 0.0
        %4494 = vmatprep.subr.mxu0 0.0
        %4495 = vmatpush1.msra.mxu0 0.0
        %4496 = vmatprep.subr.mxu0 0.0
        %4497 = vmatpush1.msra.mxu0 0.0
        %4498 = vmatprep.subr.mxu0 0.0
        %4499 = vmatpush1.msra.mxu0 0.0
        %4500 = vmatprep.subr.mxu0 0.0
        %4501 = vmatpush1.msra.mxu0 0.0
        %4502 = vmatprep.subr.mxu0 0.0
        %4503 = vmatpush1.msra.mxu0 0.0
        %4504 = vmatprep.subr.mxu0 0.0
        %4505 = vmatpush1.msra.mxu0 0.0
        %4506 = vmatprep.subr.mxu0 0.0
        %4507 = vmatpush1.msra.mxu0 0.0
        %4508 = vmatprep.subr.mxu0 0.0
        %4509 = vmatpush1.msra.mxu0 0.0
        %4510 = vmatprep.subr.mxu0 0.0
        %4511 = vmatpush1.msra.mxu0 0.0
        %4512 = vmatprep.subr.mxu0 0.0
        %4513 = vmatpush1.msra.mxu0 0.0
        %4514 = vmatprep.subr.mxu0 0.0
        %4515 = vmatpush1.msra.mxu0 0.0
        %4516 = vmatprep.subr.mxu0 0.0
        %4517 = vmatpush1.msra.mxu0 0.0
        %4518 = vmatprep.subr.mxu0 0.0
        %4519 = vmatpush1.msra.mxu0 %v4486
        %4520 = vmatprep.subr.mxu0 0.0
        %4521 = vmatpush2.msra.mxu0 0.0
        %4522 = vmatprep.subr.mxu0 0.0
        %4523 = vmatpush2.msra.mxu0 0.0
        %4524 = vmatprep.subr.mxu0 0.0
        %4525 = vmatpush2.msra.mxu0 0.0
        %4526 = vmatprep.subr.mxu0 0.0
        %4527 = vmatpush2.msra.mxu0 0.0
        %4528 = vmatprep.subr.mxu0 0.0
        %4529 = vmatpush2.msra.mxu0 0.0
        %4530 = vmatprep.subr.mxu0 0.0
        %4531 = vmatpush2.msra.mxu0 0.0
        %4532 = vmatprep.subr.mxu0 0.0
        %4533 = vmatpush2.msra.mxu0 0.0
        %4534 = vmatprep.subr.mxu0 0.0
        %4535 = vmatpush2.msra.mxu0 0.0
        %4536 = vmatprep.subr.mxu0 0.0
        %4537 = vmatpush2.msra.mxu0 0.0
        %4538 = vmatprep.subr.mxu0 0.0
        %4539 = vmatpush2.msra.mxu0 0.0
        %4540 = vmatprep.subr.mxu0 0.0
        %4541 = vmatpush2.msra.mxu0 0.0
        %4542 = vmatprep.subr.mxu0 0.0
        %4543 = vmatpush2.msra.mxu0 0.0
        %4544 = vmatprep.subr.mxu0 0.0
        %4545 = vmatpush2.msra.mxu0 0.0
        %4546 = vmatprep.subr.mxu0 0.0
        %4547 = vmatpush2.msra.mxu0 0.0
        %4548 = vmatprep.subr.mxu0 0.0
        %4549 = vmatpush2.msra.mxu0 0.0
        %4550 = vmatprep.subr.mxu0 0.0
        %4551 = vmatpush2.msra.mxu0 0.0
        %4552 = vmatprep.mubr.f32.mxu0 0.0
        %4553 = vmatmul.mubr.f32.gmra.mxu0 %v4390
        %v4554 = vpop.f32.mrf.mxu0
        %v4555 = vadd.f32 0.0, %v4554
        %v4556 = vpop.f32.mrf.mxu0
        %4557 = vmatprep.mubr.f32.mxu0 0.0
        %4558 = vmatmul.mubr.f32.gmra.mxu0 %v4393
        %v4559 = vpop.f32.mrf.mxu0
        %v4560 = vadd.f32 0.0, %v4559
        %v4561 = vpop.f32.mrf.mxu0
        %4562 = vmatprep.mubr.f32.mxu0 0.0
        %4563 = vmatmul.mubr.f32.gmra.mxu0 %v4396
        %v4564 = vpop.f32.mrf.mxu0
        %v4565 = vadd.f32 0.0, %v4564
        %v4566 = vpop.f32.mrf.mxu0
        %4567 = vmatprep.mubr.f32.mxu0 0.0
        %4568 = vmatmul.mubr.f32.gmra.mxu0 %v4399
        %v4569 = vpop.f32.mrf.mxu0
        %v4570 = vadd.f32 0.0, %v4569
        %v4571 = vpop.f32.mrf.mxu0
        %4572 = vmatprep.mubr.f32.mxu0 0.0
        %4573 = vmatmul.mubr.f32.gmra.mxu0 %v4402
        %v4574 = vpop.f32.mrf.mxu0
        %v4575 = vadd.f32 0.0, %v4574
        %v4576 = vpop.f32.mrf.mxu0
        %4577 = vmatprep.mubr.f32.mxu0 0.0
        %4578 = vmatmul.mubr.f32.gmra.mxu0 %v4405
        %v4579 = vpop.f32.mrf.mxu0
        %v4580 = vadd.f32 0.0, %v4579
        %v4581 = vpop.f32.mrf.mxu0
        %4582 = vmatprep.mubr.f32.mxu0 0.0
        %4583 = vmatmul.mubr.f32.gmra.mxu0 %v4408
        %v4584 = vpop.f32.mrf.mxu0
        %v4585 = vadd.f32 0.0, %v4584
        %v4586 = vpop.f32.mrf.mxu0
        %4587 = vmatprep.mubr.f32.mxu0 0.0
        %4588 = vmatmul.mubr.f32.gmra.mxu0 %v4411
        %v4589 = vpop.f32.mrf.mxu0
        %v4590 = vadd.f32 0.0, %v4589
        %v4591 = vpop.f32.mrf.mxu0
        %4592 = vmatprep.mubr.f32.mxu0 0.0
        %4593 = vmatmul.mubr.f32.gmra.mxu0 %v4414
        %v4594 = vpop.f32.mrf.mxu0
        %v4595 = vadd.f32 0.0, %v4594
        %v4596 = vpop.f32.mrf.mxu0
        %4597 = vmatprep.mubr.f32.mxu0 0.0
        %4598 = vmatmul.mubr.f32.gmra.mxu0 %v4417
        %v4599 = vpop.f32.mrf.mxu0
        %v4600 = vadd.f32 0.0, %v4599
        %v4601 = vpop.f32.mrf.mxu0
        %4602 = vmatprep.mubr.f32.mxu0 0.0
        %4603 = vmatmul.mubr.f32.gmra.mxu0 %v4420
        %v4604 = vpop.f32.mrf.mxu0
        %v4605 = vadd.f32 0.0, %v4604
        %v4606 = vpop.f32.mrf.mxu0
        %4607 = vmatprep.mubr.f32.mxu0 0.0
        %4608 = vmatmul.mubr.f32.gmra.mxu0 %v4423
        %v4609 = vpop.f32.mrf.mxu0
        %v4610 = vadd.f32 0.0, %v4609
        %v4611 = vpop.f32.mrf.mxu0
        %4612 = vmatprep.mubr.f32.mxu0 0.0
        %4613 = vmatmul.mubr.f32.gmra.mxu0 %v4426
        %v4614 = vpop.f32.mrf.mxu0
        %v4615 = vadd.f32 0.0, %v4614
        %v4616 = vpop.f32.mrf.mxu0
        %4617 = vmatprep.mubr.f32.mxu0 0.0
        %4618 = vmatmul.mubr.f32.gmra.mxu0 %v4429
        %v4619 = vpop.f32.mrf.mxu0
        %v4620 = vadd.f32 0.0, %v4619
        %v4621 = vpop.f32.mrf.mxu0
        %4622 = vmatprep.mubr.f32.mxu0 0.0
        %4623 = vmatmul.mubr.f32.gmra.mxu0 %v4432
        %v4624 = vpop.f32.mrf.mxu0
        %v4625 = vadd.f32 0.0, %v4624
        %v4626 = vpop.f32.mrf.mxu0
        %4627 = vmatprep.mubr.f32.mxu0 0.0
        %4628 = vmatmul.mubr.f32.gmra.mxu0 %v4435
        %v4629 = vpop.f32.mrf.mxu0
        %v4630 = vadd.f32 0.0, %v4629
        %v4631 = vpop.f32.mrf.mxu0
        %4632 = vmatprep.mubr.f32.mxu0 0.0
        %4633 = vmatmul.mubr.f32.gmra.mxu0 %v4438
        %v4634 = vpop.f32.mrf.mxu0
        %v4635 = vadd.f32 0.0, %v4634
        %v4636 = vpop.f32.mrf.mxu0
        %4637 = vmatprep.mubr.f32.mxu0 0.0
        %4638 = vmatmul.mubr.f32.gmra.mxu0 %v4441
        %v4639 = vpop.f32.mrf.mxu0
        %v4640 = vadd.f32 0.0, %v4639
        %v4641 = vpop.f32.mrf.mxu0
        %4642 = vmatprep.mubr.f32.mxu0 0.0
        %4643 = vmatmul.mubr.f32.gmra.mxu0 %v4444
        %v4644 = vpop.f32.mrf.mxu0
        %v4645 = vadd.f32 0.0, %v4644
        %v4646 = vpop.f32.mrf.mxu0
        %4647 = vmatprep.mubr.f32.mxu0 0.0
        %4648 = vmatmul.mubr.f32.gmra.mxu0 %v4447
        %v4649 = vpop.f32.mrf.mxu0
        %v4650 = vadd.f32 0.0, %v4649
        %v4651 = vpop.f32.mrf.mxu0
        %4652 = vmatprep.mubr.f32.mxu0 0.0
        %4653 = vmatmul.mubr.f32.gmra.mxu0 %v4450
        %v4654 = vpop.f32.mrf.mxu0
        %v4655 = vadd.f32 0.0, %v4654
        %v4656 = vpop.f32.mrf.mxu0
        %4657 = vmatprep.mubr.f32.mxu0 0.0
        %4658 = vmatmul.mubr.f32.gmra.mxu0 %v4453
        %v4659 = vpop.f32.mrf.mxu0
        %v4660 = vadd.f32 0.0, %v4659
        %v4661 = vpop.f32.mrf.mxu0
        %4662 = vmatprep.mubr.f32.mxu0 0.0
        %4663 = vmatmul.mubr.f32.gmra.mxu0 %v4456
        %v4664 = vpop.f32.mrf.mxu0
        %v4665 = vadd.f32 0.0, %v4664
        %v4666 = vpop.f32.mrf.mxu0
        %4667 = vmatprep.mubr.f32.mxu0 0.0
        %4668 = vmatmul.mubr.f32.gmra.mxu0 %v4459
        %v4669 = vpop.f32.mrf.mxu0
        %v4670 = vadd.f32 0.0, %v4669
        %v4671 = vpop.f32.mrf.mxu0
        %4672 = vmatprep.mubr.f32.mxu0 0.0
        %4673 = vmatmul.mubr.f32.gmra.mxu0 %v4462
        %v4674 = vpop.f32.mrf.mxu0
        %v4675 = vadd.f32 0.0, %v4674
        %v4676 = vpop.f32.mrf.mxu0
        %4677 = vmatprep.mubr.f32.mxu0 0.0
        %4678 = vmatmul.mubr.f32.gmra.mxu0 %v4465
        %v4679 = vpop.f32.mrf.mxu0
        %v4680 = vadd.f32 0.0, %v4679
        %v4681 = vpop.f32.mrf.mxu0
        %4682 = vmatprep.mubr.f32.mxu0 0.0
        %4683 = vmatmul.mubr.f32.gmra.mxu0 %v4468
        %v4684 = vpop.f32.mrf.mxu0
        %v4685 = vadd.f32 0.0, %v4684
        %v4686 = vpop.f32.mrf.mxu0
        %4687 = vmatprep.mubr.f32.mxu0 0.0
        %4688 = vmatmul.mubr.f32.gmra.mxu0 %v4471
        %v4689 = vpop.f32.mrf.mxu0
        %v4690 = vadd.f32 0.0, %v4689
        %v4691 = vpop.f32.mrf.mxu0
        %4692 = vmatprep.mubr.f32.mxu0 0.0
        %4693 = vmatmul.mubr.f32.gmra.mxu0 %v4474
        %v4694 = vpop.f32.mrf.mxu0
        %v4695 = vadd.f32 0.0, %v4694
        %v4696 = vpop.f32.mrf.mxu0
        %4697 = vmatprep.mubr.f32.mxu0 0.0
        %4698 = vmatmul.mubr.f32.gmra.mxu0 %v4477
        %v4699 = vpop.f32.mrf.mxu0
        %v4700 = vadd.f32 0.0, %v4699
        %v4701 = vpop.f32.mrf.mxu0
        %4702 = vmatprep.mubr.f32.mxu0 0.0
        %4703 = vmatmul.mubr.f32.gmra.mxu0 %v4480
        %v4704 = vpop.f32.mrf.mxu0
        %v4705 = vadd.f32 0.0, %v4704
        %v4706 = vpop.f32.mrf.mxu0
        %4707 = vmatprep.mubr.f32.mxu0 0.0
        %4708 = vmatmul.mubr.f32.gmra.mxu0 %v4483
        %v4709 = vpop.f32.mrf.mxu0
        %v4710 = vadd.f32 0.0, %v4709
        %v4711 = vpop.f32.mrf.mxu0
        %4712 = vdwg.mxu0
        %v4713 = vld [vmem:[%s6] sm:$0x1]
        %v4715 = vlaneseq
        %v4716 = vshrl.u32 %v4715, 7
        %v4717 = vsub.s32 0, %v4716
        %v4718 = vrot.slane %v4713, %v4717
        %v4720 = vadd.f32 %v4555, %v4718
        %v4721 = vadd.f32 %v4560, %v4718
        %v4722 = vadd.f32 %v4565, %v4718
        %v4723 = vadd.f32 %v4570, %v4718
        %v4724 = vadd.f32 %v4575, %v4718
        %v4725 = vadd.f32 %v4580, %v4718
        %v4726 = vadd.f32 %v4585, %v4718
        %v4727 = vadd.f32 %v4590, %v4718
        %v4728 = vadd.f32 %v4595, %v4718
        %v4729 = vadd.f32 %v4600, %v4718
        %v4730 = vadd.f32 %v4605, %v4718
        %v4731 = vadd.f32 %v4610, %v4718
        %v4732 = vadd.f32 %v4615, %v4718
        %v4733 = vadd.f32 %v4620, %v4718
        %v4734 = vadd.f32 %v4625, %v4718
        %v4735 = vadd.f32 %v4630, %v4718
        %v4736 = vadd.f32 %v4635, %v4718
        %v4737 = vadd.f32 %v4640, %v4718
        %v4738 = vadd.f32 %v4645, %v4718
        %v4739 = vadd.f32 %v4650, %v4718
        %v4740 = vadd.f32 %v4655, %v4718
        %v4741 = vadd.f32 %v4660, %v4718
        %v4742 = vadd.f32 %v4665, %v4718
        %v4743 = vadd.f32 %v4670, %v4718
        %v4744 = vadd.f32 %v4675, %v4718
        %v4745 = vadd.f32 %v4680, %v4718
        %v4746 = vadd.f32 %v4685, %v4718
        %v4747 = vadd.f32 %v4690, %v4718
        %v4748 = vadd.f32 %v4695, %v4718
        %v4749 = vadd.f32 %v4700, %v4718
        %v4750 = vadd.f32 %v4705, %v4718
        %v4751 = vadd.f32 %v4710, %v4718
        %v4752 = vadd.f32 %v4356, %v4720
        %v4753 = vadd.f32 %v4357, %v4721
        %v4754 = vadd.f32 %v4358, %v4722
        %v4755 = vadd.f32 %v4359, %v4723
        %v4756 = vadd.f32 %v4360, %v4724
        %v4757 = vadd.f32 %v4361, %v4725
        %v4758 = vadd.f32 %v4362, %v4726
        %v4759 = vadd.f32 %v4363, %v4727
        %v4760 = vadd.f32 %v4364, %v4728
        %v4761 = vadd.f32 %v4365, %v4729
        %v4762 = vadd.f32 %v4366, %v4730
        %v4763 = vadd.f32 %v4367, %v4731
        %v4764 = vadd.f32 %v4368, %v4732
        %v4765 = vadd.f32 %v4369, %v4733
        %v4766 = vadd.f32 %v4370, %v4734
        %v4767 = vadd.f32 %v4371, %v4735
        %v4768 = vadd.f32 %v4372, %v4736
        %v4769 = vadd.f32 %v4373, %v4737
        %v4770 = vadd.f32 %v4374, %v4738
        %v4771 = vadd.f32 %v4375, %v4739
        %v4772 = vadd.f32 %v4376, %v4740
        %v4773 = vadd.f32 %v4377, %v4741
        %v4774 = vadd.f32 %v4378, %v4742
        %v4775 = vadd.f32 %v4379, %v4743
        %v4776 = vadd.f32 %v4380, %v4744
        %v4777 = vadd.f32 %v4381, %v4745
        %v4778 = vadd.f32 %v4382, %v4746
        %v4779 = vadd.f32 %v4383, %v4747
        %v4780 = vadd.f32 %v4384, %v4748
        %v4781 = vadd.f32 %v4385, %v4749
        %v4782 = vadd.f32 %v4386, %v4750
        %v4783 = vadd.f32 %v4387, %v4751
        %v4784 = vsel %vm1750, %v4752, 0.0
        %v4785 = vsel %vm1750, %v4754, 0.0
        %v4786 = vadd.f32 %v4784, %v4785
        %v4787 = vsel %vm1750, %v4753, 0.0
        %v4788 = vsel %vm1750, %v4755, 0.0
        %v4789 = vadd.f32 %v4787, %v4788
        %v4790 = vsel %vm1750, %v4756, 0.0
        %v4791 = vsel %vm1750, %v4758, 0.0
        %v4792 = vadd.f32 %v4790, %v4791
        %v4793 = vsel %vm1750, %v4757, 0.0
        %v4794 = vsel %vm1750, %v4759, 0.0
        %v4795 = vadd.f32 %v4793, %v4794
        %v4796 = vsel %vm1750, %v4760, 0.0
        %v4797 = vsel %vm1750, %v4762, 0.0
        %v4798 = vadd.f32 %v4796, %v4797
        %v4799 = vsel %vm1750, %v4761, 0.0
        %v4800 = vsel %vm1750, %v4763, 0.0
        %v4801 = vadd.f32 %v4799, %v4800
        %v4802 = vsel %vm1750, %v4764, 0.0
        %v4803 = vsel %vm1750, %v4766, 0.0
        %v4804 = vadd.f32 %v4802, %v4803
        %v4805 = vsel %vm1750, %v4765, 0.0
        %v4806 = vsel %vm1750, %v4767, 0.0
        %v4807 = vadd.f32 %v4805, %v4806
        %v4808 = vsel %vm1750, %v4768, 0.0
        %v4809 = vsel %vm1750, %v4770, 0.0
        %v4810 = vadd.f32 %v4808, %v4809
        %v4811 = vsel %vm1750, %v4769, 0.0
        %v4812 = vsel %vm1750, %v4771, 0.0
        %v4813 = vadd.f32 %v4811, %v4812
        %v4814 = vsel %vm1750, %v4772, 0.0
        %v4815 = vsel %vm1750, %v4774, 0.0
        %v4816 = vadd.f32 %v4814, %v4815
        %v4817 = vsel %vm1750, %v4773, 0.0
        %v4818 = vsel %vm1750, %v4775, 0.0
        %v4819 = vadd.f32 %v4817, %v4818
        %v4820 = vsel %vm1750, %v4776, 0.0
        %v4821 = vsel %vm1750, %v4778, 0.0
        %v4822 = vadd.f32 %v4820, %v4821
        %v4823 = vsel %vm1750, %v4777, 0.0
        %v4824 = vsel %vm1750, %v4779, 0.0
        %v4825 = vadd.f32 %v4823, %v4824
        %v4826 = vsel %vm1750, %v4780, 0.0
        %v4827 = vsel %vm1750, %v4782, 0.0
        %v4828 = vadd.f32 %v4826, %v4827
        %v4829 = vsel %vm1750, %v4781, 0.0
        %v4830 = vsel %vm1750, %v4783, 0.0
        %v4831 = vadd.f32 %v4829, %v4830
        %v4848 = vcombine.high %v4786, %v4786
        %v4850 = vunpack.c.l.s4 1983009808
        %v4851 = vunpack.c.0.s8 %v4850
        %v4852 = vlaneseq
        %v4853 = vshrl.u32 %v4852, 7
        %v4854 = vsub.s32 %v4851, %v4853
        %v4855 = vrot.slane %v4786, %v4854
        %v4857 = vunpack.c.l.s4 1983009808
        %v4858 = vunpack.c.0.s8 %v4857
        %v4859 = vlaneseq
        %v4860 = vshrl.u32 %v4859, 7
        %v4861 = vsub.s32 %v4858, %v4860
        %v4862 = vrot.slane %v4848, %v4861
        %v4863 = vcombine.high %v4855, %v4855
        %v4864 = vcombine.high %v4862, %v4862
        %v4865 = vcombine.high %v4789, %v4789
        %v4867 = vunpack.c.l.s4 1983009808
        %v4868 = vunpack.c.0.s8 %v4867
        %v4869 = vlaneseq
        %v4870 = vshrl.u32 %v4869, 7
        %v4871 = vsub.s32 %v4868, %v4870
        %v4872 = vrot.slane %v4789, %v4871
        %v4874 = vunpack.c.l.s4 1983009808
        %v4875 = vunpack.c.0.s8 %v4874
        %v4876 = vlaneseq
        %v4877 = vshrl.u32 %v4876, 7
        %v4878 = vsub.s32 %v4875, %v4877
        %v4879 = vrot.slane %v4865, %v4878
        %v4880 = vcombine.high %v4872, %v4872
        %v4881 = vcombine.high %v4879, %v4879
        %v4882 = vcombine.high %v4792, %v4792
        %v4884 = vunpack.c.l.s4 1983009808
        %v4885 = vunpack.c.0.s8 %v4884
        %v4886 = vlaneseq
        %v4887 = vshrl.u32 %v4886, 7
        %v4888 = vsub.s32 %v4885, %v4887
        %v4889 = vrot.slane %v4792, %v4888
        %v4891 = vunpack.c.l.s4 1983009808
        %v4892 = vunpack.c.0.s8 %v4891
        %v4893 = vlaneseq
        %v4894 = vshrl.u32 %v4893, 7
        %v4895 = vsub.s32 %v4892, %v4894
        %v4896 = vrot.slane %v4882, %v4895
        %v4897 = vcombine.high %v4889, %v4889
        %v4898 = vcombine.high %v4896, %v4896
        %v4899 = vcombine.high %v4795, %v4795
        %v4901 = vunpack.c.l.s4 1983009808
        %v4902 = vunpack.c.0.s8 %v4901
        %v4903 = vlaneseq
        %v4904 = vshrl.u32 %v4903, 7
        %v4905 = vsub.s32 %v4902, %v4904
        %v4906 = vrot.slane %v4795, %v4905
        %v4908 = vunpack.c.l.s4 1983009808
        %v4909 = vunpack.c.0.s8 %v4908
        %v4910 = vlaneseq
        %v4911 = vshrl.u32 %v4910, 7
        %v4912 = vsub.s32 %v4909, %v4911
        %v4913 = vrot.slane %v4899, %v4912
        %v4914 = vcombine.high %v4906, %v4906
        %v4915 = vcombine.high %v4913, %v4913
        %v4916 = vcombine.high %v4798, %v4798
        %v4918 = vunpack.c.l.s4 1983009808
        %v4919 = vunpack.c.0.s8 %v4918
        %v4920 = vlaneseq
        %v4921 = vshrl.u32 %v4920, 7
        %v4922 = vsub.s32 %v4919, %v4921
        %v4923 = vrot.slane %v4798, %v4922
        %v4925 = vunpack.c.l.s4 1983009808
        %v4926 = vunpack.c.0.s8 %v4925
        %v4927 = vlaneseq
        %v4928 = vshrl.u32 %v4927, 7
        %v4929 = vsub.s32 %v4926, %v4928
        %v4930 = vrot.slane %v4916, %v4929
        %v4931 = vcombine.high %v4923, %v4923
        %v4932 = vcombine.high %v4930, %v4930
        %v4933 = vcombine.high %v4801, %v4801
        %v4935 = vunpack.c.l.s4 1983009808
        %v4936 = vunpack.c.0.s8 %v4935
        %v4937 = vlaneseq
        %v4938 = vshrl.u32 %v4937, 7
        %v4939 = vsub.s32 %v4936, %v4938
        %v4940 = vrot.slane %v4801, %v4939
        %v4942 = vunpack.c.l.s4 1983009808
        %v4943 = vunpack.c.0.s8 %v4942
        %v4944 = vlaneseq
        %v4945 = vshrl.u32 %v4944, 7
        %v4946 = vsub.s32 %v4943, %v4945
        %v4947 = vrot.slane %v4933, %v4946
        %v4948 = vcombine.high %v4940, %v4940
        %v4949 = vcombine.high %v4947, %v4947
        %v4950 = vcombine.high %v4804, %v4804
        %v4952 = vunpack.c.l.s4 1983009808
        %v4953 = vunpack.c.0.s8 %v4952
        %v4954 = vlaneseq
        %v4955 = vshrl.u32 %v4954, 7
        %v4956 = vsub.s32 %v4953, %v4955
        %v4957 = vrot.slane %v4804, %v4956
        %v4959 = vunpack.c.l.s4 1983009808
        %v4960 = vunpack.c.0.s8 %v4959
        %v4961 = vlaneseq
        %v4962 = vshrl.u32 %v4961, 7
        %v4963 = vsub.s32 %v4960, %v4962
        %v4964 = vrot.slane %v4950, %v4963
        %v4965 = vcombine.high %v4957, %v4957
        %v4966 = vcombine.high %v4964, %v4964
        %v4967 = vcombine.high %v4807, %v4807
        %v4969 = vunpack.c.l.s4 1983009808
        %v4970 = vunpack.c.0.s8 %v4969
        %v4971 = vlaneseq
        %v4972 = vshrl.u32 %v4971, 7
        %v4973 = vsub.s32 %v4970, %v4972
        %v4974 = vrot.slane %v4807, %v4973
        %v4976 = vunpack.c.l.s4 1983009808
        %v4977 = vunpack.c.0.s8 %v4976
        %v4978 = vlaneseq
        %v4979 = vshrl.u32 %v4978, 7
        %v4980 = vsub.s32 %v4977, %v4979
        %v4981 = vrot.slane %v4967, %v4980
        %v4982 = vcombine.high %v4974, %v4974
        %v4983 = vcombine.high %v4981, %v4981
        %v4984 = vcombine.high %v4810, %v4810
        %v4986 = vunpack.c.l.s4 1983009808
        %v4987 = vunpack.c.0.s8 %v4986
        %v4988 = vlaneseq
        %v4989 = vshrl.u32 %v4988, 7
        %v4990 = vsub.s32 %v4987, %v4989
        %v4991 = vrot.slane %v4810, %v4990
        %v4993 = vunpack.c.l.s4 1983009808
        %v4994 = vunpack.c.0.s8 %v4993
        %v4995 = vlaneseq
        %v4996 = vshrl.u32 %v4995, 7
        %v4997 = vsub.s32 %v4994, %v4996
        %v4998 = vrot.slane %v4984, %v4997
        %v4999 = vcombine.high %v4991, %v4991
        %v5000 = vcombine.high %v4998, %v4998
        %v5001 = vcombine.high %v4813, %v4813
        %v5003 = vunpack.c.l.s4 1983009808
        %v5004 = vunpack.c.0.s8 %v5003
        %v5005 = vlaneseq
        %v5006 = vshrl.u32 %v5005, 7
        %v5007 = vsub.s32 %v5004, %v5006
        %v5008 = vrot.slane %v4813, %v5007
        %v5010 = vunpack.c.l.s4 1983009808
        %v5011 = vunpack.c.0.s8 %v5010
        %v5012 = vlaneseq
        %v5013 = vshrl.u32 %v5012, 7
        %v5014 = vsub.s32 %v5011, %v5013
        %v5015 = vrot.slane %v5001, %v5014
        %v5016 = vcombine.high %v5008, %v5008
        %v5017 = vcombine.high %v5015, %v5015
        %v5018 = vcombine.high %v4816, %v4816
        %v5020 = vunpack.c.l.s4 1983009808
        %v5021 = vunpack.c.0.s8 %v5020
        %v5022 = vlaneseq
        %v5023 = vshrl.u32 %v5022, 7
        %v5024 = vsub.s32 %v5021, %v5023
        %v5025 = vrot.slane %v4816, %v5024
        %v5027 = vunpack.c.l.s4 1983009808
        %v5028 = vunpack.c.0.s8 %v5027
        %v5029 = vlaneseq
        %v5030 = vshrl.u32 %v5029, 7
        %v5031 = vsub.s32 %v5028, %v5030
        %v5032 = vrot.slane %v5018, %v5031
        %v5033 = vcombine.high %v5025, %v5025
        %v5034 = vcombine.high %v5032, %v5032
        %v5035 = vcombine.high %v4819, %v4819
        %v5037 = vunpack.c.l.s4 1983009808
        %v5038 = vunpack.c.0.s8 %v5037
        %v5039 = vlaneseq
        %v5040 = vshrl.u32 %v5039, 7
        %v5041 = vsub.s32 %v5038, %v5040
        %v5042 = vrot.slane %v4819, %v5041
        %v5044 = vunpack.c.l.s4 1983009808
        %v5045 = vunpack.c.0.s8 %v5044
        %v5046 = vlaneseq
        %v5047 = vshrl.u32 %v5046, 7
        %v5048 = vsub.s32 %v5045, %v5047
        %v5049 = vrot.slane %v5035, %v5048
        %v5050 = vcombine.high %v5042, %v5042
        %v5051 = vcombine.high %v5049, %v5049
        %v5052 = vcombine.high %v4822, %v4822
        %v5054 = vunpack.c.l.s4 1983009808
        %v5055 = vunpack.c.0.s8 %v5054
        %v5056 = vlaneseq
        %v5057 = vshrl.u32 %v5056, 7
        %v5058 = vsub.s32 %v5055, %v5057
        %v5059 = vrot.slane %v4822, %v5058
        %v5061 = vunpack.c.l.s4 1983009808
        %v5062 = vunpack.c.0.s8 %v5061
        %v5063 = vlaneseq
        %v5064 = vshrl.u32 %v5063, 7
        %v5065 = vsub.s32 %v5062, %v5064
        %v5066 = vrot.slane %v5052, %v5065
        %v5067 = vcombine.high %v5059, %v5059
        %v5068 = vcombine.high %v5066, %v5066
        %v5069 = vcombine.high %v4825, %v4825
        %v5071 = vunpack.c.l.s4 1983009808
        %v5072 = vunpack.c.0.s8 %v5071
        %v5073 = vlaneseq
        %v5074 = vshrl.u32 %v5073, 7
        %v5075 = vsub.s32 %v5072, %v5074
        %v5076 = vrot.slane %v4825, %v5075
        %v5078 = vunpack.c.l.s4 1983009808
        %v5079 = vunpack.c.0.s8 %v5078
        %v5080 = vlaneseq
        %v5081 = vshrl.u32 %v5080, 7
        %v5082 = vsub.s32 %v5079, %v5081
        %v5083 = vrot.slane %v5069, %v5082
        %v5084 = vcombine.high %v5076, %v5076
        %v5085 = vcombine.high %v5083, %v5083
        %v5086 = vcombine.high %v4828, %v4828
        %v5088 = vunpack.c.l.s4 1983009808
        %v5089 = vunpack.c.0.s8 %v5088
        %v5090 = vlaneseq
        %v5091 = vshrl.u32 %v5090, 7
        %v5092 = vsub.s32 %v5089, %v5091
        %v5093 = vrot.slane %v4828, %v5092
        %v5095 = vunpack.c.l.s4 1983009808
        %v5096 = vunpack.c.0.s8 %v5095
        %v5097 = vlaneseq
        %v5098 = vshrl.u32 %v5097, 7
        %v5099 = vsub.s32 %v5096, %v5098
        %v5100 = vrot.slane %v5086, %v5099
        %v5101 = vcombine.high %v5093, %v5093
        %v5102 = vcombine.high %v5100, %v5100
        %v5103 = vcombine.high %v4831, %v4831
        %v5105 = vunpack.c.l.s4 1983009808
        %v5106 = vunpack.c.0.s8 %v5105
        %v5107 = vlaneseq
        %v5108 = vshrl.u32 %v5107, 7
        %v5109 = vsub.s32 %v5106, %v5108
        %v5110 = vrot.slane %v4831, %v5109
        %v5112 = vunpack.c.l.s4 1983009808
        %v5113 = vunpack.c.0.s8 %v5112
        %v5114 = vlaneseq
        %v5115 = vshrl.u32 %v5114, 7
        %v5116 = vsub.s32 %v5113, %v5115
        %v5117 = vrot.slane %v5103, %v5116
        %v5118 = vcombine.high %v5110, %v5110
        %v5119 = vcombine.high %v5117, %v5117
        %vm5184 = vcmask 58368
        %v5185 = vsel %vm5184, %v4855, 0.0
        %v5186 = vrot.slane %v5185, 4
        %v5187 = vadd.f32 %v5185, %v5186
        %v5188 = vrot.slane %v5187, 2
        %v5189 = vadd.f32 %v5187, %v5188
        %v5190 = vrot.slane %v5189, 1
        %v5191 = vadd.f32 %v5189, %v5190
        %v5192 = vsel %vm5184, %v4863, 0.0
        %v5193 = vrot.slane %v5192, 4
        %v5194 = vadd.f32 %v5192, %v5193
        %v5195 = vrot.slane %v5194, 2
        %v5196 = vadd.f32 %v5194, %v5195
        %v5197 = vrot.slane %v5196, 1
        %v5198 = vadd.f32 %v5196, %v5197
        %v5199 = vsel %vm5184, %v4862, 0.0
        %v5200 = vrot.slane %v5199, 4
        %v5201 = vadd.f32 %v5199, %v5200
        %v5202 = vrot.slane %v5201, 2
        %v5203 = vadd.f32 %v5201, %v5202
        %v5204 = vrot.slane %v5203, 1
        %v5205 = vadd.f32 %v5203, %v5204
        %v5206 = vsel %vm5184, %v4864, 0.0
        %v5207 = vrot.slane %v5206, 4
        %v5208 = vadd.f32 %v5206, %v5207
        %v5209 = vrot.slane %v5208, 2
        %v5210 = vadd.f32 %v5208, %v5209
        %v5211 = vrot.slane %v5210, 1
        %v5212 = vadd.f32 %v5210, %v5211
        %v5213 = vsel %vm5184, %v4872, 0.0
        %v5214 = vrot.slane %v5213, 4
        %v5215 = vadd.f32 %v5213, %v5214
        %v5216 = vrot.slane %v5215, 2
        %v5217 = vadd.f32 %v5215, %v5216
        %v5218 = vrot.slane %v5217, 1
        %v5219 = vadd.f32 %v5217, %v5218
        %v5220 = vsel %vm5184, %v4880, 0.0
        %v5221 = vrot.slane %v5220, 4
        %v5222 = vadd.f32 %v5220, %v5221
        %v5223 = vrot.slane %v5222, 2
        %v5224 = vadd.f32 %v5222, %v5223
        %v5225 = vrot.slane %v5224, 1
        %v5226 = vadd.f32 %v5224, %v5225
        %v5227 = vsel %vm5184, %v4879, 0.0
        %v5228 = vrot.slane %v5227, 4
        %v5229 = vadd.f32 %v5227, %v5228
        %v5230 = vrot.slane %v5229, 2
        %v5231 = vadd.f32 %v5229, %v5230
        %v5232 = vrot.slane %v5231, 1
        %v5233 = vadd.f32 %v5231, %v5232
        %v5234 = vsel %vm5184, %v4881, 0.0
        %v5235 = vrot.slane %v5234, 4
        %v5236 = vadd.f32 %v5234, %v5235
        %v5237 = vrot.slane %v5236, 2
        %v5238 = vadd.f32 %v5236, %v5237
        %v5239 = vrot.slane %v5238, 1
        %v5240 = vadd.f32 %v5238, %v5239
        %v5241 = vsel %vm5184, %v4889, 0.0
        %v5242 = vrot.slane %v5241, 4
        %v5243 = vadd.f32 %v5241, %v5242
        %v5244 = vrot.slane %v5243, 2
        %v5245 = vadd.f32 %v5243, %v5244
        %v5246 = vrot.slane %v5245, 1
        %v5247 = vadd.f32 %v5245, %v5246
        %v5248 = vsel %vm5184, %v4897, 0.0
        %v5249 = vrot.slane %v5248, 4
        %v5250 = vadd.f32 %v5248, %v5249
        %v5251 = vrot.slane %v5250, 2
        %v5252 = vadd.f32 %v5250, %v5251
        %v5253 = vrot.slane %v5252, 1
        %v5254 = vadd.f32 %v5252, %v5253
        %v5255 = vsel %vm5184, %v4896, 0.0
        %v5256 = vrot.slane %v5255, 4
        %v5257 = vadd.f32 %v5255, %v5256
        %v5258 = vrot.slane %v5257, 2
        %v5259 = vadd.f32 %v5257, %v5258
        %v5260 = vrot.slane %v5259, 1
        %v5261 = vadd.f32 %v5259, %v5260
        %v5262 = vsel %vm5184, %v4898, 0.0
        %v5263 = vrot.slane %v5262, 4
        %v5264 = vadd.f32 %v5262, %v5263
        %v5265 = vrot.slane %v5264, 2
        %v5266 = vadd.f32 %v5264, %v5265
        %v5267 = vrot.slane %v5266, 1
        %v5268 = vadd.f32 %v5266, %v5267
        %v5269 = vsel %vm5184, %v4906, 0.0
        %v5270 = vrot.slane %v5269, 4
        %v5271 = vadd.f32 %v5269, %v5270
        %v5272 = vrot.slane %v5271, 2
        %v5273 = vadd.f32 %v5271, %v5272
        %v5274 = vrot.slane %v5273, 1
        %v5275 = vadd.f32 %v5273, %v5274
        %v5276 = vsel %vm5184, %v4914, 0.0
        %v5277 = vrot.slane %v5276, 4
        %v5278 = vadd.f32 %v5276, %v5277
        %v5279 = vrot.slane %v5278, 2
        %v5280 = vadd.f32 %v5278, %v5279
        %v5281 = vrot.slane %v5280, 1
        %v5282 = vadd.f32 %v5280, %v5281
        %v5283 = vsel %vm5184, %v4913, 0.0
        %v5284 = vrot.slane %v5283, 4
        %v5285 = vadd.f32 %v5283, %v5284
        %v5286 = vrot.slane %v5285, 2
        %v5287 = vadd.f32 %v5285, %v5286
        %v5288 = vrot.slane %v5287, 1
        %v5289 = vadd.f32 %v5287, %v5288
        %v5290 = vsel %vm5184, %v4915, 0.0
        %v5291 = vrot.slane %v5290, 4
        %v5292 = vadd.f32 %v5290, %v5291
        %v5293 = vrot.slane %v5292, 2
        %v5294 = vadd.f32 %v5292, %v5293
        %v5295 = vrot.slane %v5294, 1
        %v5296 = vadd.f32 %v5294, %v5295
        %v5297 = vsel %vm5184, %v4923, 0.0
        %v5298 = vrot.slane %v5297, 4
        %v5299 = vadd.f32 %v5297, %v5298
        %v5300 = vrot.slane %v5299, 2
        %v5301 = vadd.f32 %v5299, %v5300
        %v5302 = vrot.slane %v5301, 1
        %v5303 = vadd.f32 %v5301, %v5302
        %v5304 = vsel %vm5184, %v4931, 0.0
        %v5305 = vrot.slane %v5304, 4
        %v5306 = vadd.f32 %v5304, %v5305
        %v5307 = vrot.slane %v5306, 2
        %v5308 = vadd.f32 %v5306, %v5307
        %v5309 = vrot.slane %v5308, 1
        %v5310 = vadd.f32 %v5308, %v5309
        %v5311 = vsel %vm5184, %v4930, 0.0
        %v5312 = vrot.slane %v5311, 4
        %v5313 = vadd.f32 %v5311, %v5312
        %v5314 = vrot.slane %v5313, 2
        %v5315 = vadd.f32 %v5313, %v5314
        %v5316 = vrot.slane %v5315, 1
        %v5317 = vadd.f32 %v5315, %v5316
        %v5318 = vsel %vm5184, %v4932, 0.0
        %v5319 = vrot.slane %v5318, 4
        %v5320 = vadd.f32 %v5318, %v5319
        %v5321 = vrot.slane %v5320, 2
        %v5322 = vadd.f32 %v5320, %v5321
        %v5323 = vrot.slane %v5322, 1
        %v5324 = vadd.f32 %v5322, %v5323
        %v5325 = vsel %vm5184, %v4940, 0.0
        %v5326 = vrot.slane %v5325, 4
        %v5327 = vadd.f32 %v5325, %v5326
        %v5328 = vrot.slane %v5327, 2
        %v5329 = vadd.f32 %v5327, %v5328
        %v5330 = vrot.slane %v5329, 1
        %v5331 = vadd.f32 %v5329, %v5330
        %v5332 = vsel %vm5184, %v4948, 0.0
        %v5333 = vrot.slane %v5332, 4
        %v5334 = vadd.f32 %v5332, %v5333
        %v5335 = vrot.slane %v5334, 2
        %v5336 = vadd.f32 %v5334, %v5335
        %v5337 = vrot.slane %v5336, 1
        %v5338 = vadd.f32 %v5336, %v5337
        %v5339 = vsel %vm5184, %v4947, 0.0
        %v5340 = vrot.slane %v5339, 4
        %v5341 = vadd.f32 %v5339, %v5340
        %v5342 = vrot.slane %v5341, 2
        %v5343 = vadd.f32 %v5341, %v5342
        %v5344 = vrot.slane %v5343, 1
        %v5345 = vadd.f32 %v5343, %v5344
        %v5346 = vsel %vm5184, %v4949, 0.0
        %v5347 = vrot.slane %v5346, 4
        %v5348 = vadd.f32 %v5346, %v5347
        %v5349 = vrot.slane %v5348, 2
        %v5350 = vadd.f32 %v5348, %v5349
        %v5351 = vrot.slane %v5350, 1
        %v5352 = vadd.f32 %v5350, %v5351
        %v5353 = vsel %vm5184, %v4957, 0.0
        %v5354 = vrot.slane %v5353, 4
        %v5355 = vadd.f32 %v5353, %v5354
        %v5356 = vrot.slane %v5355, 2
        %v5357 = vadd.f32 %v5355, %v5356
        %v5358 = vrot.slane %v5357, 1
        %v5359 = vadd.f32 %v5357, %v5358
        %v5360 = vsel %vm5184, %v4965, 0.0
        %v5361 = vrot.slane %v5360, 4
        %v5362 = vadd.f32 %v5360, %v5361
        %v5363 = vrot.slane %v5362, 2
        %v5364 = vadd.f32 %v5362, %v5363
        %v5365 = vrot.slane %v5364, 1
        %v5366 = vadd.f32 %v5364, %v5365
        %v5367 = vsel %vm5184, %v4964, 0.0
        %v5368 = vrot.slane %v5367, 4
        %v5369 = vadd.f32 %v5367, %v5368
        %v5370 = vrot.slane %v5369, 2
        %v5371 = vadd.f32 %v5369, %v5370
        %v5372 = vrot.slane %v5371, 1
        %v5373 = vadd.f32 %v5371, %v5372
        %v5374 = vsel %vm5184, %v4966, 0.0
        %v5375 = vrot.slane %v5374, 4
        %v5376 = vadd.f32 %v5374, %v5375
        %v5377 = vrot.slane %v5376, 2
        %v5378 = vadd.f32 %v5376, %v5377
        %v5379 = vrot.slane %v5378, 1
        %v5380 = vadd.f32 %v5378, %v5379
        %v5381 = vsel %vm5184, %v4974, 0.0
        %v5382 = vrot.slane %v5381, 4
        %v5383 = vadd.f32 %v5381, %v5382
        %v5384 = vrot.slane %v5383, 2
        %v5385 = vadd.f32 %v5383, %v5384
        %v5386 = vrot.slane %v5385, 1
        %v5387 = vadd.f32 %v5385, %v5386
        %v5388 = vsel %vm5184, %v4982, 0.0
        %v5389 = vrot.slane %v5388, 4
        %v5390 = vadd.f32 %v5388, %v5389
        %v5391 = vrot.slane %v5390, 2
        %v5392 = vadd.f32 %v5390, %v5391
        %v5393 = vrot.slane %v5392, 1
        %v5394 = vadd.f32 %v5392, %v5393
        %v5395 = vsel %vm5184, %v4981, 0.0
        %v5396 = vrot.slane %v5395, 4
        %v5397 = vadd.f32 %v5395, %v5396
        %v5398 = vrot.slane %v5397, 2
        %v5399 = vadd.f32 %v5397, %v5398
        %v5400 = vrot.slane %v5399, 1
        %v5401 = vadd.f32 %v5399, %v5400
        %v5402 = vsel %vm5184, %v4983, 0.0
        %v5403 = vrot.slane %v5402, 4
        %v5404 = vadd.f32 %v5402, %v5403
        %v5405 = vrot.slane %v5404, 2
        %v5406 = vadd.f32 %v5404, %v5405
        %v5407 = vrot.slane %v5406, 1
        %v5408 = vadd.f32 %v5406, %v5407
        %v5409 = vsel %vm5184, %v4991, 0.0
        %v5410 = vrot.slane %v5409, 4
        %v5411 = vadd.f32 %v5409, %v5410
        %v5412 = vrot.slane %v5411, 2
        %v5413 = vadd.f32 %v5411, %v5412
        %v5414 = vrot.slane %v5413, 1
        %v5415 = vadd.f32 %v5413, %v5414
        %v5416 = vsel %vm5184, %v4999, 0.0
        %v5417 = vrot.slane %v5416, 4
        %v5418 = vadd.f32 %v5416, %v5417
        %v5419 = vrot.slane %v5418, 2
        %v5420 = vadd.f32 %v5418, %v5419
        %v5421 = vrot.slane %v5420, 1
        %v5422 = vadd.f32 %v5420, %v5421
        %v5423 = vsel %vm5184, %v4998, 0.0
        %v5424 = vrot.slane %v5423, 4
        %v5425 = vadd.f32 %v5423, %v5424
        %v5426 = vrot.slane %v5425, 2
        %v5427 = vadd.f32 %v5425, %v5426
        %v5428 = vrot.slane %v5427, 1
        %v5429 = vadd.f32 %v5427, %v5428
        %v5430 = vsel %vm5184, %v5000, 0.0
        %v5431 = vrot.slane %v5430, 4
        %v5432 = vadd.f32 %v5430, %v5431
        %v5433 = vrot.slane %v5432, 2
        %v5434 = vadd.f32 %v5432, %v5433
        %v5435 = vrot.slane %v5434, 1
        %v5436 = vadd.f32 %v5434, %v5435
        %v5437 = vsel %vm5184, %v5008, 0.0
        %v5438 = vrot.slane %v5437, 4
        %v5439 = vadd.f32 %v5437, %v5438
        %v5440 = vrot.slane %v5439, 2
        %v5441 = vadd.f32 %v5439, %v5440
        %v5442 = vrot.slane %v5441, 1
        %v5443 = vadd.f32 %v5441, %v5442
        %v5444 = vsel %vm5184, %v5016, 0.0
        %v5445 = vrot.slane %v5444, 4
        %v5446 = vadd.f32 %v5444, %v5445
        %v5447 = vrot.slane %v5446, 2
        %v5448 = vadd.f32 %v5446, %v5447
        %v5449 = vrot.slane %v5448, 1
        %v5450 = vadd.f32 %v5448, %v5449
        %v5451 = vsel %vm5184, %v5015, 0.0
        %v5452 = vrot.slane %v5451, 4
        %v5453 = vadd.f32 %v5451, %v5452
        %v5454 = vrot.slane %v5453, 2
        %v5455 = vadd.f32 %v5453, %v5454
        %v5456 = vrot.slane %v5455, 1
        %v5457 = vadd.f32 %v5455, %v5456
        %v5458 = vsel %vm5184, %v5017, 0.0
        %v5459 = vrot.slane %v5458, 4
        %v5460 = vadd.f32 %v5458, %v5459
        %v5461 = vrot.slane %v5460, 2
        %v5462 = vadd.f32 %v5460, %v5461
        %v5463 = vrot.slane %v5462, 1
        %v5464 = vadd.f32 %v5462, %v5463
        %v5465 = vsel %vm5184, %v5025, 0.0
        %v5466 = vrot.slane %v5465, 4
        %v5467 = vadd.f32 %v5465, %v5466
        %v5468 = vrot.slane %v5467, 2
        %v5469 = vadd.f32 %v5467, %v5468
        %v5470 = vrot.slane %v5469, 1
        %v5471 = vadd.f32 %v5469, %v5470
        %v5472 = vsel %vm5184, %v5033, 0.0
        %v5473 = vrot.slane %v5472, 4
        %v5474 = vadd.f32 %v5472, %v5473
        %v5475 = vrot.slane %v5474, 2
        %v5476 = vadd.f32 %v5474, %v5475
        %v5477 = vrot.slane %v5476, 1
        %v5478 = vadd.f32 %v5476, %v5477
        %v5479 = vsel %vm5184, %v5032, 0.0
        %v5480 = vrot.slane %v5479, 4
        %v5481 = vadd.f32 %v5479, %v5480
        %v5482 = vrot.slane %v5481, 2
        %v5483 = vadd.f32 %v5481, %v5482
        %v5484 = vrot.slane %v5483, 1
        %v5485 = vadd.f32 %v5483, %v5484
        %v5486 = vsel %vm5184, %v5034, 0.0
        %v5487 = vrot.slane %v5486, 4
        %v5488 = vadd.f32 %v5486, %v5487
        %v5489 = vrot.slane %v5488, 2
        %v5490 = vadd.f32 %v5488, %v5489
        %v5491 = vrot.slane %v5490, 1
        %v5492 = vadd.f32 %v5490, %v5491
        %v5493 = vsel %vm5184, %v5042, 0.0
        %v5494 = vrot.slane %v5493, 4
        %v5495 = vadd.f32 %v5493, %v5494
        %v5496 = vrot.slane %v5495, 2
        %v5497 = vadd.f32 %v5495, %v5496
        %v5498 = vrot.slane %v5497, 1
        %v5499 = vadd.f32 %v5497, %v5498
        %v5500 = vsel %vm5184, %v5050, 0.0
        %v5501 = vrot.slane %v5500, 4
        %v5502 = vadd.f32 %v5500, %v5501
        %v5503 = vrot.slane %v5502, 2
        %v5504 = vadd.f32 %v5502, %v5503
        %v5505 = vrot.slane %v5504, 1
        %v5506 = vadd.f32 %v5504, %v5505
        %v5507 = vsel %vm5184, %v5049, 0.0
        %v5508 = vrot.slane %v5507, 4
        %v5509 = vadd.f32 %v5507, %v5508
        %v5510 = vrot.slane %v5509, 2
        %v5511 = vadd.f32 %v5509, %v5510
        %v5512 = vrot.slane %v5511, 1
        %v5513 = vadd.f32 %v5511, %v5512
        %v5514 = vsel %vm5184, %v5051, 0.0
        %v5515 = vrot.slane %v5514, 4
        %v5516 = vadd.f32 %v5514, %v5515
        %v5517 = vrot.slane %v5516, 2
        %v5518 = vadd.f32 %v5516, %v5517
        %v5519 = vrot.slane %v5518, 1
        %v5520 = vadd.f32 %v5518, %v5519
        %v5521 = vsel %vm5184, %v5059, 0.0
        %v5522 = vrot.slane %v5521, 4
        %v5523 = vadd.f32 %v5521, %v5522
        %v5524 = vrot.slane %v5523, 2
        %v5525 = vadd.f32 %v5523, %v5524
        %v5526 = vrot.slane %v5525, 1
        %v5527 = vadd.f32 %v5525, %v5526
        %v5528 = vsel %vm5184, %v5067, 0.0
        %v5529 = vrot.slane %v5528, 4
        %v5530 = vadd.f32 %v5528, %v5529
        %v5531 = vrot.slane %v5530, 2
        %v5532 = vadd.f32 %v5530, %v5531
        %v5533 = vrot.slane %v5532, 1
        %v5534 = vadd.f32 %v5532, %v5533
        %v5535 = vsel %vm5184, %v5066, 0.0
        %v5536 = vrot.slane %v5535, 4
        %v5537 = vadd.f32 %v5535, %v5536
        %v5538 = vrot.slane %v5537, 2
        %v5539 = vadd.f32 %v5537, %v5538
        %v5540 = vrot.slane %v5539, 1
        %v5541 = vadd.f32 %v5539, %v5540
        %v5542 = vsel %vm5184, %v5068, 0.0
        %v5543 = vrot.slane %v5542, 4
        %v5544 = vadd.f32 %v5542, %v5543
        %v5545 = vrot.slane %v5544, 2
        %v5546 = vadd.f32 %v5544, %v5545
        %v5547 = vrot.slane %v5546, 1
        %v5548 = vadd.f32 %v5546, %v5547
        %v5549 = vsel %vm5184, %v5076, 0.0
        %v5550 = vrot.slane %v5549, 4
        %v5551 = vadd.f32 %v5549, %v5550
        %v5552 = vrot.slane %v5551, 2
        %v5553 = vadd.f32 %v5551, %v5552
        %v5554 = vrot.slane %v5553, 1
        %v5555 = vadd.f32 %v5553, %v5554
        %v5556 = vsel %vm5184, %v5084, 0.0
        %v5557 = vrot.slane %v5556, 4
        %v5558 = vadd.f32 %v5556, %v5557
        %v5559 = vrot.slane %v5558, 2
        %v5560 = vadd.f32 %v5558, %v5559
        %v5561 = vrot.slane %v5560, 1
        %v5562 = vadd.f32 %v5560, %v5561
        %v5563 = vsel %vm5184, %v5083, 0.0
        %v5564 = vrot.slane %v5563, 4
        %v5565 = vadd.f32 %v5563, %v5564
        %v5566 = vrot.slane %v5565, 2
        %v5567 = vadd.f32 %v5565, %v5566
        %v5568 = vrot.slane %v5567, 1
        %v5569 = vadd.f32 %v5567, %v5568
        %v5570 = vsel %vm5184, %v5085, 0.0
        %v5571 = vrot.slane %v5570, 4
        %v5572 = vadd.f32 %v5570, %v5571
        %v5573 = vrot.slane %v5572, 2
        %v5574 = vadd.f32 %v5572, %v5573
        %v5575 = vrot.slane %v5574, 1
        %v5576 = vadd.f32 %v5574, %v5575
        %v5577 = vsel %vm5184, %v5093, 0.0
        %v5578 = vrot.slane %v5577, 4
        %v5579 = vadd.f32 %v5577, %v5578
        %v5580 = vrot.slane %v5579, 2
        %v5581 = vadd.f32 %v5579, %v5580
        %v5582 = vrot.slane %v5581, 1
        %v5583 = vadd.f32 %v5581, %v5582
        %v5584 = vsel %vm5184, %v5101, 0.0
        %v5585 = vrot.slane %v5584, 4
        %v5586 = vadd.f32 %v5584, %v5585
        %v5587 = vrot.slane %v5586, 2
        %v5588 = vadd.f32 %v5586, %v5587
        %v5589 = vrot.slane %v5588, 1
        %v5590 = vadd.f32 %v5588, %v5589
        %v5591 = vsel %vm5184, %v5100, 0.0
        %v5592 = vrot.slane %v5591, 4
        %v5593 = vadd.f32 %v5591, %v5592
        %v5594 = vrot.slane %v5593, 2
        %v5595 = vadd.f32 %v5593, %v5594
        %v5596 = vrot.slane %v5595, 1
        %v5597 = vadd.f32 %v5595, %v5596
        %v5598 = vsel %vm5184, %v5102, 0.0
        %v5599 = vrot.slane %v5598, 4
        %v5600 = vadd.f32 %v5598, %v5599
        %v5601 = vrot.slane %v5600, 2
        %v5602 = vadd.f32 %v5600, %v5601
        %v5603 = vrot.slane %v5602, 1
        %v5604 = vadd.f32 %v5602, %v5603
        %v5605 = vsel %vm5184, %v5110, 0.0
        %v5606 = vrot.slane %v5605, 4
        %v5607 = vadd.f32 %v5605, %v5606
        %v5608 = vrot.slane %v5607, 2
        %v5609 = vadd.f32 %v5607, %v5608
        %v5610 = vrot.slane %v5609, 1
        %v5611 = vadd.f32 %v5609, %v5610
        %v5612 = vsel %vm5184, %v5118, 0.0
        %v5613 = vrot.slane %v5612, 4
        %v5614 = vadd.f32 %v5612, %v5613
        %v5615 = vrot.slane %v5614, 2
        %v5616 = vadd.f32 %v5614, %v5615
        %v5617 = vrot.slane %v5616, 1
        %v5618 = vadd.f32 %v5616, %v5617
        %v5619 = vsel %vm5184, %v5117, 0.0
        %v5620 = vrot.slane %v5619, 4
        %v5621 = vadd.f32 %v5619, %v5620
        %v5622 = vrot.slane %v5621, 2
        %v5623 = vadd.f32 %v5621, %v5622
        %v5624 = vrot.slane %v5623, 1
        %v5625 = vadd.f32 %v5623, %v5624
        %v5626 = vsel %vm5184, %v5119, 0.0
        %v5627 = vrot.slane %v5626, 4
        %v5628 = vadd.f32 %v5626, %v5627
        %v5629 = vrot.slane %v5628, 2
        %v5630 = vadd.f32 %v5628, %v5629
        %v5631 = vrot.slane %v5630, 1
        %v5632 = vadd.f32 %v5630, %v5631
        %v5633 = vmul.f32 %v5191, 0.25
        %v5634 = vmul.f32 %v5198, 0.25
        %v5635 = vmul.f32 %v5205, 0.25
        %v5636 = vmul.f32 %v5212, 0.25
        %v5637 = vmul.f32 %v5219, 0.25
        %v5638 = vmul.f32 %v5226, 0.25
        %v5639 = vmul.f32 %v5233, 0.25
        %v5640 = vmul.f32 %v5240, 0.25
        %v5641 = vmul.f32 %v5247, 0.25
        %v5642 = vmul.f32 %v5254, 0.25
        %v5643 = vmul.f32 %v5261, 0.25
        %v5644 = vmul.f32 %v5268, 0.25
        %v5645 = vmul.f32 %v5275, 0.25
        %v5646 = vmul.f32 %v5282, 0.25
        %v5647 = vmul.f32 %v5289, 0.25
        %v5648 = vmul.f32 %v5296, 0.25
        %v5649 = vmul.f32 %v5303, 0.25
        %v5650 = vmul.f32 %v5310, 0.25
        %v5651 = vmul.f32 %v5317, 0.25
        %v5652 = vmul.f32 %v5324, 0.25
        %v5653 = vmul.f32 %v5331, 0.25
        %v5654 = vmul.f32 %v5338, 0.25
        %v5655 = vmul.f32 %v5345, 0.25
        %v5656 = vmul.f32 %v5352, 0.25
        %v5657 = vmul.f32 %v5359, 0.25
        %v5658 = vmul.f32 %v5366, 0.25
        %v5659 = vmul.f32 %v5373, 0.25
        %v5660 = vmul.f32 %v5380, 0.25
        %v5661 = vmul.f32 %v5387, 0.25
        %v5662 = vmul.f32 %v5394, 0.25
        %v5663 = vmul.f32 %v5401, 0.25
        %v5664 = vmul.f32 %v5408, 0.25
        %v5665 = vmul.f32 %v5415, 0.25
        %v5666 = vmul.f32 %v5422, 0.25
        %v5667 = vmul.f32 %v5429, 0.25
        %v5668 = vmul.f32 %v5436, 0.25
        %v5669 = vmul.f32 %v5443, 0.25
        %v5670 = vmul.f32 %v5450, 0.25
        %v5671 = vmul.f32 %v5457, 0.25
        %v5672 = vmul.f32 %v5464, 0.25
        %v5673 = vmul.f32 %v5471, 0.25
        %v5674 = vmul.f32 %v5478, 0.25
        %v5675 = vmul.f32 %v5485, 0.25
        %v5676 = vmul.f32 %v5492, 0.25
        %v5677 = vmul.f32 %v5499, 0.25
        %v5678 = vmul.f32 %v5506, 0.25
        %v5679 = vmul.f32 %v5513, 0.25
        %v5680 = vmul.f32 %v5520, 0.25
        %v5681 = vmul.f32 %v5527, 0.25
        %v5682 = vmul.f32 %v5534, 0.25
        %v5683 = vmul.f32 %v5541, 0.25
        %v5684 = vmul.f32 %v5548, 0.25
        %v5685 = vmul.f32 %v5555, 0.25
        %v5686 = vmul.f32 %v5562, 0.25
        %v5687 = vmul.f32 %v5569, 0.25
        %v5688 = vmul.f32 %v5576, 0.25
        %v5689 = vmul.f32 %v5583, 0.25
        %v5690 = vmul.f32 %v5590, 0.25
        %v5691 = vmul.f32 %v5597, 0.25
        %v5692 = vmul.f32 %v5604, 0.25
        %v5693 = vmul.f32 %v5611, 0.25
        %v5694 = vmul.f32 %v5618, 0.25
        %v5695 = vmul.f32 %v5625, 0.25
        %v5696 = vmul.f32 %v5632, 0.25
        %vm5761 = vcmask 1041409
        %v5762 = vsel %vm5761, %v5634, %v5633
        %vm5763 = vcmask 1042434
        %v5764 = vsel %vm5763, %v5635, %v5762
        %vm5765 = vcmask 1043459
        %v5766 = vsel %vm5765, %v5636, %v5764
        %vm5767 = vcmask 1044484
        %v5768 = vsel %vm5767, %v5637, %v5766
        %vm5769 = vcmask 1045509
        %v5770 = vsel %vm5769, %v5638, %v5768
        %vm5771 = vcmask 1046534
        %v5772 = vsel %vm5771, %v5639, %v5770
        %vm5773 = vcmask 1047559
        %v5774 = vsel %vm5773, %v5640, %v5772
        %v5775 = vsel %vm5761, %v5642, %v5641
        %v5776 = vsel %vm5763, %v5643, %v5775
        %v5777 = vsel %vm5765, %v5644, %v5776
        %v5778 = vsel %vm5767, %v5645, %v5777
        %v5779 = vsel %vm5769, %v5646, %v5778
        %v5780 = vsel %vm5771, %v5647, %v5779
        %v5781 = vsel %vm5773, %v5648, %v5780
        %v5782 = vsel %vm5761, %v5650, %v5649
        %v5783 = vsel %vm5763, %v5651, %v5782
        %v5784 = vsel %vm5765, %v5652, %v5783
        %v5785 = vsel %vm5767, %v5653, %v5784
        %v5786 = vsel %vm5769, %v5654, %v5785
        %v5787 = vsel %vm5771, %v5655, %v5786
        %v5788 = vsel %vm5773, %v5656, %v5787
        %v5789 = vsel %vm5761, %v5658, %v5657
        %v5790 = vsel %vm5763, %v5659, %v5789
        %v5791 = vsel %vm5765, %v5660, %v5790
        %v5792 = vsel %vm5767, %v5661, %v5791
        %v5793 = vsel %vm5769, %v5662, %v5792
        %v5794 = vsel %vm5771, %v5663, %v5793
        %v5795 = vsel %vm5773, %v5664, %v5794
        %v5796 = vsel %vm5761, %v5666, %v5665
        %v5797 = vsel %vm5763, %v5667, %v5796
        %v5798 = vsel %vm5765, %v5668, %v5797
        %v5799 = vsel %vm5767, %v5669, %v5798
        %v5800 = vsel %vm5769, %v5670, %v5799
        %v5801 = vsel %vm5771, %v5671, %v5800
        %v5802 = vsel %vm5773, %v5672, %v5801
        %v5803 = vsel %vm5761, %v5674, %v5673
        %v5804 = vsel %vm5763, %v5675, %v5803
        %v5805 = vsel %vm5765, %v5676, %v5804
        %v5806 = vsel %vm5767, %v5677, %v5805
        %v5807 = vsel %vm5769, %v5678, %v5806
        %v5808 = vsel %vm5771, %v5679, %v5807
        %v5809 = vsel %vm5773, %v5680, %v5808
        %v5810 = vsel %vm5761, %v5682, %v5681
        %v5811 = vsel %vm5763, %v5683, %v5810
        %v5812 = vsel %vm5765, %v5684, %v5811
        %v5813 = vsel %vm5767, %v5685, %v5812
        %v5814 = vsel %vm5769, %v5686, %v5813
        %v5815 = vsel %vm5771, %v5687, %v5814
        %v5816 = vsel %vm5773, %v5688, %v5815
        %v5817 = vsel %vm5761, %v5690, %v5689
        %v5818 = vsel %vm5763, %v5691, %v5817
        %v5819 = vsel %vm5765, %v5692, %v5818
        %v5820 = vsel %vm5767, %v5693, %v5819
        %v5821 = vsel %vm5769, %v5694, %v5820
        %v5822 = vsel %vm5771, %v5695, %v5821
        %v5823 = vsel %vm5773, %v5696, %v5822
        %v5832 = vcombine.low %v5774, %v5788
        %v5833 = vcombine.high %v5774, %v5788
        %v5835 = vunpack.c.l.s4 1983009808
        %v5836 = vunpack.c.0.s8 %v5835
        %v5837 = vlaneseq
        %v5838 = vshrl.u32 %v5837, 7
        %v5839 = vsub.s32 %v5836, %v5838
        %v5840 = vrot.slane %v5832, %v5839
        %v5842 = vunpack.c.l.s4 1983009808
        %v5843 = vunpack.c.0.s8 %v5842
        %v5844 = vlaneseq
        %v5845 = vshrl.u32 %v5844, 7
        %v5846 = vsub.s32 %v5843, %v5845
        %v5847 = vrot.slane %v5833, %v5846
        %v5848 = vcombine.low %v5781, %v5795
        %v5849 = vcombine.high %v5781, %v5795
        %v5851 = vunpack.c.l.s4 1983009808
        %v5852 = vunpack.c.0.s8 %v5851
        %v5853 = vlaneseq
        %v5854 = vshrl.u32 %v5853, 7
        %v5855 = vsub.s32 %v5852, %v5854
        %v5856 = vrot.slane %v5848, %v5855
        %v5858 = vunpack.c.l.s4 1983009808
        %v5859 = vunpack.c.0.s8 %v5858
        %v5860 = vlaneseq
        %v5861 = vshrl.u32 %v5860, 7
        %v5862 = vsub.s32 %v5859, %v5861
        %v5863 = vrot.slane %v5849, %v5862
        %v5864 = vcombine.low %v5802, %v5816
        %v5865 = vcombine.high %v5802, %v5816
        %v5867 = vunpack.c.l.s4 1983009808
        %v5868 = vunpack.c.0.s8 %v5867
        %v5869 = vlaneseq
        %v5870 = vshrl.u32 %v5869, 7
        %v5871 = vsub.s32 %v5868, %v5870
        %v5872 = vrot.slane %v5864, %v5871
        %v5874 = vunpack.c.l.s4 1983009808
        %v5875 = vunpack.c.0.s8 %v5874
        %v5876 = vlaneseq
        %v5877 = vshrl.u32 %v5876, 7
        %v5878 = vsub.s32 %v5875, %v5877
        %v5879 = vrot.slane %v5865, %v5878
        %v5880 = vcombine.low %v5809, %v5823
        %v5881 = vcombine.high %v5809, %v5823
        %v5883 = vunpack.c.l.s4 1983009808
        %v5884 = vunpack.c.0.s8 %v5883
        %v5885 = vlaneseq
        %v5886 = vshrl.u32 %v5885, 7
        %v5887 = vsub.s32 %v5884, %v5886
        %v5888 = vrot.slane %v5880, %v5887
        %v5890 = vunpack.c.l.s4 1983009808
        %v5891 = vunpack.c.0.s8 %v5890
        %v5892 = vlaneseq
        %v5893 = vshrl.u32 %v5892, 7
        %v5894 = vsub.s32 %v5891, %v5893
        %v5895 = vrot.slane %v5881, %v5894
        %v5896 = vcombine.low %v5840, %v5856
        %v5897 = vcombine.high %v5840, %v5856
        %v5899 = vunpack.c.l.s4 1934713408
        %v5900 = vunpack.c.0.s8 %v5899
        %v5901 = vlaneseq
        %v5902 = vshrl.u32 %v5901, 7
        %v5903 = vsub.s32 %v5900, %v5902
        %v5904 = vrot.slane %v5896, %v5903
        %v5906 = vunpack.c.l.s4 1934713408
        %v5907 = vunpack.c.0.s8 %v5906
        %v5908 = vlaneseq
        %v5909 = vshrl.u32 %v5908, 7
        %v5910 = vsub.s32 %v5907, %v5909
        %v5911 = vrot.slane %v5897, %v5910
        %v5912 = vcombine.low %v5847, %v5863
        %v5913 = vcombine.high %v5847, %v5863
        %v5915 = vunpack.c.l.s4 1934713408
        %v5916 = vunpack.c.0.s8 %v5915
        %v5917 = vlaneseq
        %v5918 = vshrl.u32 %v5917, 7
        %v5919 = vsub.s32 %v5916, %v5918
        %v5920 = vrot.slane %v5912, %v5919
        %v5922 = vunpack.c.l.s4 1934713408
        %v5923 = vunpack.c.0.s8 %v5922
        %v5924 = vlaneseq
        %v5925 = vshrl.u32 %v5924, 7
        %v5926 = vsub.s32 %v5923, %v5925
        %v5927 = vrot.slane %v5913, %v5926
        %v5928 = vcombine.low %v5872, %v5888
        %v5929 = vcombine.high %v5872, %v5888
        %v5931 = vunpack.c.l.s4 1934713408
        %v5932 = vunpack.c.0.s8 %v5931
        %v5933 = vlaneseq
        %v5934 = vshrl.u32 %v5933, 7
        %v5935 = vsub.s32 %v5932, %v5934
        %v5936 = vrot.slane %v5928, %v5935
        %v5938 = vunpack.c.l.s4 1934713408
        %v5939 = vunpack.c.0.s8 %v5938
        %v5940 = vlaneseq
        %v5941 = vshrl.u32 %v5940, 7
        %v5942 = vsub.s32 %v5939, %v5941
        %v5943 = vrot.slane %v5929, %v5942
        %v5944 = vcombine.low %v5879, %v5895
        %v5945 = vcombine.high %v5879, %v5895
        %v5947 = vunpack.c.l.s4 1934713408
        %v5948 = vunpack.c.0.s8 %v5947
        %v5949 = vlaneseq
        %v5950 = vshrl.u32 %v5949, 7
        %v5951 = vsub.s32 %v5948, %v5950
        %v5952 = vrot.slane %v5944, %v5951
        %v5954 = vunpack.c.l.s4 1934713408
        %v5955 = vunpack.c.0.s8 %v5954
        %v5956 = vlaneseq
        %v5957 = vshrl.u32 %v5956, 7
        %v5958 = vsub.s32 %v5955, %v5957
        %v5959 = vrot.slane %v5945, %v5958
        %v5960 = vcombine.low %v5904, %v5936
        %v5961 = vcombine.high %v5904, %v5936
        %v5962 = vcombine.low %v5911, %v5943
        %v5963 = vcombine.high %v5911, %v5943
        %v5964 = vcombine.low %v5920, %v5952
        %v5965 = vcombine.high %v5920, %v5952
        %v5966 = vcombine.low %v5927, %v5959
        %v5967 = vcombine.high %v5927, %v5959
        %5969 = vrot.lane.b32.xlu0 %v5961, 8
        %v5970 = vpop.permute.xlu0 %5969
        %5973 = vrot.lane.b32.xlu0 %v5962, 16
        %v5974 = vpop.permute.xlu0 %5973
        %5977 = vrot.lane.b32.xlu0 %v5963, 24
        %v5978 = vpop.permute.xlu0 %5977
        %5981 = vrot.lane.b32.xlu0 %v5964, 32
        %v5982 = vpop.permute.xlu0 %5981
        %5985 = vrot.lane.b32.xlu0 %v5965, 40
        %v5986 = vpop.permute.xlu0 %5985
        %5989 = vrot.lane.b32.xlu0 %v5966, 48
        %v5990 = vpop.permute.xlu0 %5989
        %5993 = vrot.lane.b32.xlu0 %v5967, 56
        %v5994 = vpop.permute.xlu0 %5993
        %v5996 = vsel %vm1750, %v5960, %v5970
        %v5997 = vsel %vm1824, %v5996, %v5974
        %v5998 = vsel %vm1898, %v5997, %v5978
        %v5999 = vsel %vm1972, %v5998, %v5982
        %v6000 = vsel %vm3886, %v5999, %v5986
        %v6001 = vsel %vm3919, %v6000, %v5990
        %v6002 = vsel %vm3952, %v6001, %v5994
        %6003 = vst.msk [vmem:[%s285] sm:$0xff] %vm3985, %v6002
        %s6004 = sand.u32 %s195, 1
        %s6005 = scalar_lea.sflag [#allocation3], %s6004
        %s6006 = sand.u32 %s195, 1
        %s6007 = smul.addr %s6006, 8
        %s6008 = scalar_lea.vmem [#allocation2], %s6007
        // Predicated region
        $region49: #{tpu_custom_call.1} parent=47 // pred_check
          %p6009 = pneg %p205
        $region50: #{tpu_custom_call.1} parent=47 // pred_check_branch
          %6011 = sbr.rel (%p6009) target = $region52
        $region51: #{tpu_custom_call.1} parent=47 // pred_region
          %s6013 = ssub.s32 128, 128
          %6014 = vsyncadd %s6005, %s6013
          %s6015 = sadd.s32 %s26, %s25
          %s6016 = smul.addr %s6015, 128
          %s6017 = scalar_lea.hbm %s7, %s6016
          %s6019 = sshll.u32 %s6008, 4
          %s6020 = int_to_ptr.vmem [resolvable:$true] %s6019
          %6022 = dma.vmem_to_hbm [thread:$0]  %s6020, 128, %s6017, %s6005
        $region52: #{tpu_custom_call.1} parent=47 // pred_fallthru
          _
      $region48: #{tpu_custom_call.1} parent=5 // pred_fallthru
        _
      %p6023 = scmp.le.s32.totalorder 2, %s16
      // Predicated region
      $region53: #{tpu_custom_call.1} parent=5 // pred_check
        %p6024 = pneg %p6023
      $region54: #{tpu_custom_call.1} parent=5 // pred_check_branch
        %6026 = sbr.rel (%p6024) target = $region56
      $region55: #{tpu_custom_call.1} parent=5 // pred_region
        %s6027 = ssub.s32 %s16, 2
        // Predicated region
        $region57: #{tpu_custom_call.1} parent=55 // pred_check
          %p6028 = pneg %p211
        $region58: #{tpu_custom_call.1} parent=55 // pred_check_branch
          %6030 = sbr.rel (%p6028) target = $region60
        $region59: #{tpu_custom_call.1} parent=55 // pred_region
          %s6031 = sand.u32 %s196, 1
          %s6032 = scalar_lea.sflag [#allocation3], %s6031
          %s6033 = sand.u32 %s196, 1
          %s6034 = smul.addr %s6033, 8
          %s6035 = scalar_lea.vmem [#allocation2], %s6034
          %6036 = dma.done %s6032, 128
        $region60: #{tpu_custom_call.1} parent=55 // pred_fallthru
          _
      $region56: #{tpu_custom_call.1} parent=5 // pred_fallthru
        _
    $region6: #{tpu_custom_call.1} parent=1 // loop_footer
      %s20 = sadd.s32 1, %s16
    $region7: #{tpu_custom_call.1} parent=1 // loop_footer_branch
      %15 = sbr.rel target = $region3
    $region8: #{tpu_custom_call.1} parent=1 // loop_exit
      _
    %6037 = vsyncpa [#allocation3], 1
    %s6038 = scalar_lea.sflag [#allocation3], 1
    %6039 = vsyncpa %s6038, 1

</llo_original>
